<compile_context>
chip_gen: v7x
topology: tpu7x:2x2x1
jax: 0.10.0
libtpu: 0.0.40
codegen_flags: <defaults>
</compile_context>

<pallas_src>
import jax
import jax.numpy as jnp
from jax.experimental import pallas as pl
from jax.experimental.pallas import tpu as pltpu

IN_FEATURES = 512
HIDDEN = 2048
INV_SQRT2 = 0.7071067811865476


def _round_up(v, m):
    return ((v + m - 1) // m) * m


def _device_kind():
    try:
        return jax.devices()[0].device_kind.lower()
    except Exception:
        return ""


def mlp_kernel(x_ref, w1_ref, b1_ref, w2_ref, b2_ref, o_ref):
    # x_ref:  [m_blk, 512]            (resident across the hidden axis)
    # w1_ref: [512, tk]   b1_ref: [1, tk]    (hidden chunk j)
    # w2_ref: [tk, 512]   b2_ref: [1, 512]   (resident)
    # o_ref:  [m_blk, 512] f32 — constant index over the hidden axis, so it is
    #         VMEM-resident and doubles as the accumulator (one HBM write-back).
    j = pl.program_id(1)

    x = x_ref[...]

    # linear44 chunk: x @ W1[:, j*tk:(j+1)*tk] + b1 chunk   (MXU, f32 acc)
    h = jnp.dot(x, w1_ref[...], preferred_element_type=jnp.float32) + b1_ref[...]

    # gelu22 (approximate='none' -> exact erf-based GELU)
    h = 0.5 * h * (1.0 + jax.lax.erf(h * INV_SQRT2))

    # linear45 chunk: h_j @ W2[j*tk:(j+1)*tk, :]
    contrib = jnp.dot(h, w2_ref[...], preferred_element_type=jnp.float32)

    @pl.when(j == 0)
    def _():
        o_ref[...] = contrib + b2_ref[...]      # seed with b2: no zero-fill pass

    @pl.when(j > 0)
    def _():
        o_ref[...] += contrib


def prepare_w1_chunks(w1, *, tk):
    """One-time (outside the per-call hot path) re-layout of W1 [512, 2048]
    into chunk-major [HIDDEN//tk, 512, tk]: each grid step's W1 block becomes
    a single contiguous DMA instead of 512 strided runs."""
    assert w1.shape == (IN_FEATURES, HIDDEN) and HIDDEN % tk == 0
    n_chunks = HIDDEN // tk
    return w1.reshape(IN_FEATURES, n_chunks, tk).transpose(1, 0, 2)


def mlp_forward(x_nhwc, w1_chunks, b1, w2, b2):
    """x_nhwc: [N, H, W, 512] f32.  w1_chunks: [HIDDEN//tk, 512, tk] from
    prepare_w1_chunks.  b1: [2048].  w2: [2048, 512].  b2: [512]."""
    n, h, w, c = x_nhwc.shape
    assert c == IN_FEATURES
    n_chunks, in_f, tk = w1_chunks.shape
    assert in_f == IN_FEATURES and n_chunks * tk == HIDDEN

    # v7x has two TensorCores per chip -> split the token dim across them via
    # a leading "parallel" grid axis. Single-TC chips (v5e/v6e) keep m_split=1
    # so weights are streamed exactly once.
    kind = _device_kind()
    m_split = 2 if ("v7" in kind or "7x" in kind) else 1

    m = n * h * w
    # Pad the token dim only to sublane granularity (x m_split): 196 -> 200
    # (or 208 for the two-core split). The lane dim is already 512, so output
    # stores stay lane-dense and unmasked.
    m_pad = _round_up(m, 8 * m_split)
    x2d = x_nhwc.reshape(m, c)
    if m_pad != m:
        x2d = jnp.pad(x2d, ((0, m_pad - m), (0, 0)))
    m_blk = m_pad // m_split

    grid = (m_split, n_chunks)

    cost = pl.CostEstimate(
        flops=2 * 2 * m_pad * IN_FEATURES * HIDDEN,          # two matmuls
        transcendentals=m_pad * HIDDEN,                      # erf
        bytes_accessed=4 * (m_split * (w1_chunks.size + w2.size + b1.size)
                            + b2.size + 2 * m_pad * IN_FEATURES),
    )

    out2d = pl.pallas_call(
        mlp_kernel,
        out_shape=jax.ShapeDtypeStruct((m_pad, IN_FEATURES), jnp.float32),
        grid=grid,
        in_specs=[
            pl.BlockSpec((m_blk, IN_FEATURES), lambda i, j: (i, 0)),       # x block
            pl.BlockSpec((None, IN_FEATURES, tk), lambda i, j: (j, 0, 0)), # W1 chunk (contiguous)
            pl.BlockSpec((1, tk), lambda i, j: (0, j)),                    # b1 chunk
            pl.BlockSpec((tk, IN_FEATURES), lambda i, j: (j, 0)),          # W2 chunk
            pl.BlockSpec((1, IN_FEATURES), lambda i, j: (0, 0)),           # b2 (resident)
        ],
        out_specs=pl.BlockSpec((m_blk, IN_FEATURES), lambda i, j: (i, 0)),
        compiler_params=pltpu.CompilerParams(
            dimension_semantics=("parallel", "arbitrary"),
            vmem_limit_bytes=32 * 1024 * 1024,
        ),
        cost_estimate=cost,
    )(x2d, w1_chunks, b1.reshape(1, HIDDEN), w2, b2.reshape(1, IN_FEATURES))

    return out2d[:m].reshape(n, h, w, c)


def reference(x_nhwc, w1, b1, w2, b2):
    h = jnp.einsum("nhwc,cd->nhwd", x_nhwc, w1) + b1
    h = 0.5 * h * (1.0 + jax.lax.erf(h * INV_SQRT2))
    return jnp.einsum("nhwd,dc->nhwc", h, w2) + b2


if __name__ == "__main__":
    key = jax.random.PRNGKey(0)
    kx, kw1, kb1, kw2, kb2 = jax.random.split(key, 5)

    # Input shape implied by the module: [1, 14, 14, 512] (channels-last).
    x = jax.random.normal(kx, (1, 14, 14, IN_FEATURES), dtype=jnp.float32)

    # torch Linear stores (out, in); we keep (in, out) so the kernel computes
    # x @ W directly, i.e. W = torch_weight.T.
    w1 = jax.random.normal(kw1, (IN_FEATURES, HIDDEN), dtype=jnp.float32) * 0.02
    b1 = jax.random.normal(kb1, (HIDDEN,), dtype=jnp.float32) * 0.02
    w2 = jax.random.normal(kw2, (HIDDEN, IN_FEATURES), dtype=jnp.float32) * 0.02
    b2 = jax.random.normal(kb2, (IN_FEATURES,), dtype=jnp.float32) * 0.02

    # Generation-specific chunk width: larger chunks (fewer grid steps) on the
    # strongly compute-bound v5 generation; 512 elsewhere.
    tk = 1024 if "v5" in _device_kind() else 512

    # One-time weight re-layout, outside the per-call hot path.
    w1_chunks = jax.block_until_ready(prepare_w1_chunks(w1, tk=tk))

    out = jax.block_until_ready(mlp_forward(x, w1_chunks, b1, w2, b2))
    ref = jax.block_until_ready(reference(x, w1, b1, w2, b2))

    assert out.shape == (1, 14, 14, IN_FEATURES)
    assert jnp.allclose(out, ref, atol=1e-4, rtol=1e-4)

    print("KERNEL_OK")
</pallas_src>

<mosaic_0001>
module attributes {stable_mosaic.version = 11 : i64} {
  func.func @mlp_kernel(%arg0: i32, %arg1: i32, %arg2: memref<200x512xf32, #tpu.memory_space<vmem>>, %arg3: memref<1x512x512xf32, #tpu.memory_space<vmem>>, %arg4: memref<1x512xf32, #tpu.memory_space<vmem>>, %arg5: memref<512x512xf32, #tpu.memory_space<vmem>>, %arg6: memref<1x512xf32, #tpu.memory_space<vmem>>, %arg7: memref<200x512xf32, #tpu.memory_space<vmem>>) attributes {dimension_semantics = [#tpu.dimension_semantics<parallel>, #tpu.dimension_semantics<arbitrary>], iteration_bounds = array<i64: 1, 4>, scalar_prefetch = 0 : i64, scratch_operands = 0 : i64, tpu.core_type = #tpu.core_type<tc>, window_params = [{transform_indices = @transform_0, window_bounds = array<i64: 200, 512>}, {transform_indices = @transform_1, window_bounds = array<i64: 1, 512, 512>}, {transform_indices = @transform_2, window_bounds = array<i64: 1, 512>}, {transform_indices = @transform_3, window_bounds = array<i64: 512, 512>}, {pipeline_mode = #tpu.pipeline_mode<synchronous>, transform_indices = @transform_4, window_bounds = array<i64: 1, 512>}, {transform_indices = @transform_5, window_bounds = array<i64: 200, 512>}]} {
    %c0 = arith.constant 0 : index
    %c0_0 = arith.constant 0 : index
    %0 = vector.load %arg2[%c0, %c0_0] : memref<200x512xf32, #tpu.memory_space<vmem>>, vector<200x512xf32>
    %c0_1 = arith.constant 0 : index
    %c0_2 = arith.constant 0 : index
    %c0_3 = arith.constant 0 : index
    %1 = vector.load %arg3[%c0_1, %c0_2, %c0_3] : memref<1x512x512xf32, #tpu.memory_space<vmem>>, vector<1x512x512xf32>
    %2 = vector.shape_cast %1 : vector<1x512x512xf32> to vector<512x512xf32>
    %cst = arith.constant dense<0.000000e+00> : vector<200x512xf32>
    %3 = tpu.matmul %0, %2, %cst {dimension_numbers = #tpu.dot_dimension_numbers<[1], [0], [0], [1], [0, 0, 1, 1], [], []>} : vector<200x512xf32>, vector<512x512xf32>, vector<200x512xf32> -> vector<200x512xf32>
    %c0_4 = arith.constant 0 : index
    %c0_5 = arith.constant 0 : index
    %4 = vector.load %arg4[%c0_4, %c0_5] : memref<1x512xf32, #tpu.memory_space<vmem>>, vector<1x512xf32>
    %5 = vector.broadcast %4 : vector<1x512xf32> to vector<200x512xf32>
    %6 = arith.addf %3, %5 : vector<200x512xf32>
    %cst_6 = arith.constant 5.000000e-01 : f32
    %7 = vector.broadcast %cst_6 : f32 to vector<200x512xf32>
    %8 = arith.mulf %7, %6 : vector<200x512xf32>
    %cst_7 = arith.constant 0.707106769 : f32
    %9 = vector.broadcast %cst_7 : f32 to vector<200x512xf32>
    %10 = arith.mulf %6, %9 : vector<200x512xf32>
    %11 = math.erf %10 : vector<200x512xf32>
    %cst_8 = arith.constant 1.000000e+00 : f32
    %12 = vector.broadcast %cst_8 : f32 to vector<200x512xf32>
    %13 = arith.addf %12, %11 : vector<200x512xf32>
    %14 = arith.mulf %8, %13 : vector<200x512xf32>
    %c0_9 = arith.constant 0 : index
    %c0_10 = arith.constant 0 : index
    %15 = vector.load %arg5[%c0_9, %c0_10] : memref<512x512xf32, #tpu.memory_space<vmem>>, vector<512x512xf32>
    %cst_11 = arith.constant dense<0.000000e+00> : vector<200x512xf32>
    %16 = tpu.matmul %14, %15, %cst_11 {dimension_numbers = #tpu.dot_dimension_numbers<[1], [0], [0], [1], [0, 0, 1, 1], [], []>} : vector<200x512xf32>, vector<512x512xf32>, vector<200x512xf32> -> vector<200x512xf32>
    %c0_i32 = arith.constant 0 : i32
    %17 = arith.cmpi eq, %arg1, %c0_i32 : i32
    %18 = arith.extui %17 : i1 to i32
    %c0_i32_12 = arith.constant 0 : i32
    %19 = arith.cmpi ne, %18, %c0_i32_12 : i32
    scf.if %19 {
      %c0_15 = arith.constant 0 : index
      %c0_16 = arith.constant 0 : index
      %23 = vector.load %arg6[%c0_15, %c0_16] : memref<1x512xf32, #tpu.memory_space<vmem>>, vector<1x512xf32>
      %24 = vector.broadcast %23 : vector<1x512xf32> to vector<200x512xf32>
      %25 = arith.addf %16, %24 : vector<200x512xf32>
      %c0_17 = arith.constant 0 : index
      %c0_18 = arith.constant 0 : index
      %26 = vector.load %arg7[%c0_17, %c0_18] : memref<200x512xf32, #tpu.memory_space<vmem>>, vector<200x512xf32>
      tpu.vector_store %arg7[%c0_17, %c0_18], %25 {strides = array<i32>} : memref<200x512xf32, #tpu.memory_space<vmem>>, vector<200x512xf32>,
    } else {
    }
    %c0_i32_13 = arith.constant 0 : i32
    %20 = arith.cmpi sgt, %arg1, %c0_i32_13 : i32
    %21 = arith.extui %20 : i1 to i32
    %c0_i32_14 = arith.constant 0 : i32
    %22 = arith.cmpi ne, %21, %c0_i32_14 : i32
    scf.if %22 {
      %c0_15 = arith.constant 0 : index
      %c0_16 = arith.constant 0 : index
      %23 = vector.load %arg7[%c0_15, %c0_16] : memref<200x512xf32, #tpu.memory_space<vmem>>, vector<200x512xf32>
      %24 = arith.addf %23, %16 : vector<200x512xf32>
      %c0_17 = arith.constant 0 : index
      %c0_18 = arith.constant 0 : index
      %25 = vector.load %arg7[%c0_17, %c0_18] : memref<200x512xf32, #tpu.memory_space<vmem>>, vector<200x512xf32>
      tpu.vector_store %arg7[%c0_17, %c0_18], %24 {strides = array<i32>} : memref<200x512xf32, #tpu.memory_space<vmem>>, vector<200x512xf32>,
    } else {
    }
    return
  }
  func.func @transform_0(%arg0: i32, %arg1: i32) -> (i32, i32) {
    %c0_i32 = arith.constant 0 : i32
    %c0_i32_0 = arith.constant 0 : i32
    return %arg0, %c0_i32 : i32, i32
  }
  func.func @transform_1(%arg0: i32, %arg1: i32) -> (i32, i32, i32) {
    %c0_i32 = arith.constant 0 : i32
    %c0_i32_0 = arith.constant 0 : i32
    %c0_i32_1 = arith.constant 0 : i32
    return %arg1, %c0_i32, %c0_i32_0 : i32, i32, i32
  }
  func.func @transform_2(%arg0: i32, %arg1: i32) -> (i32, i32) {
    %c0_i32 = arith.constant 0 : i32
    %c0_i32_0 = arith.constant 0 : i32
    return %c0_i32, %arg1 : i32, i32
  }
  func.func @transform_3(%arg0: i32, %arg1: i32) -> (i32, i32) {
    %c0_i32 = arith.constant 0 : i32
    %c0_i32_0 = arith.constant 0 : i32
    return %arg1, %c0_i32 : i32, i32
  }
  func.func @transform_4(%arg0: i32, %arg1: i32) -> (i32, i32) {
    %c0_i32 = arith.constant 0 : i32
    %c0_i32_0 = arith.constant 0 : i32
    %c0_i32_1 = arith.constant 0 : i32
    return %c0_i32, %c0_i32_0 : i32, i32
  }
  func.func @transform_5(%arg0: i32, %arg1: i32) -> (i32, i32) {
    %c0_i32 = arith.constant 0 : i32
    %c0_i32_0 = arith.constant 0 : i32
    return %arg0, %c0_i32 : i32, i32
  }
}

</mosaic_0001>

<llo_original>
// kernel: tpu_custom_call.1
$region0: #{tpu_custom_call.1}
  #allocation0 [shape = 'u32[]', space=smem, size = 0x4, offset = 0x4, fixed_abs, tag = 'smem constant byte address 0x4 - core index']
  #allocation1 [shape = 'u32[144,128]{1,0:T(1,128)}', space=vmem, size = 0x12000, scoped, tag = 'internal scratch']
  %s0 = inlined_call_operand.hbm [shape: f32[200,512], index: 0, kind: input, shape index: {}]
  %s1 = inlined_call_operand.hbm [shape: f32[4,512,512], index: 1, kind: input, shape index: {}]
  %s2 = inlined_call_operand.hbm [shape: f32[1,2048], index: 2, kind: input, shape index: {}]
  %s3 = inlined_call_operand.hbm [shape: f32[2048,512], index: 3, kind: input, shape index: {}]
  %s4 = inlined_call_operand.hbm [shape: f32[1,512], index: 4, kind: input, shape index: {}]
  %s5 = inlined_call_operand.hbm [shape: f32[200,512], index: 5, kind: output, shape index: {}]
  %s6 = sld [smem:[#allocation0]]
  $region81: #{tpu_custom_call.1} parent=0
    _
  %s8 = ssub.s32 1, %s6
  %s9 = scalar_select 0, %s8, %s6
  $region1: #{tpu_custom_call.1} parent=0
    #allocation2 [shape = 'u8[409600]{0}', space=vmem, size = 0x64000, scoped, tag = 'input window, operand 0, single buffered']
    #allocation3 [shape = 's32[2]{0}', space=sflag, size = 0x8, scoped, tag = 'scoped memory for tpu_custom_call.1']
    #allocation4 [shape = 's32[2]{0}', space=sflag, size = 0x8, scoped, tag = 'scoped memory for tpu_custom_call.1']
    #allocation5 [shape = 'u8[2097152]{0}', space=vmem, size = 0x200000, scoped, tag = 'input window, operand 1']
    #allocation6 [shape = 's32[2]{0}', space=sflag, size = 0x8, scoped, tag = 'scoped memory for tpu_custom_call.1']
    #allocation7 [shape = 'u8[4096]{0}', space=vmem, size = 0x1000, scoped, tag = 'input window, operand 2']
    #allocation8 [shape = 'u8[2097152]{0}', space=vmem, size = 0x200000, scoped, tag = 'input window, operand 3']
    #allocation9 [shape = 's32[2]{0}', space=sflag, size = 0x8, scoped, tag = 'scoped memory for tpu_custom_call.1']
    #allocation10 [shape = 'u8[2048]{0}', space=vmem, size = 0x800, scoped, tag = 'input window, operand 4, single buffered']
    #allocation11 [shape = 'u8[409600]{0}', space=vmem, size = 0x64000, scoped, tag = 'output window, operand 0, single buffered']
    %10 = vsyncpa [#allocation3], 0
    %11 = vsyncpa [#allocation6], 0
    %s12 = scalar_lea.sflag [#allocation6], 1
    %13 = vsyncpa %s12, 0
    %14 = vsyncpa [#allocation9], 0
    %s15 = scalar_lea.sflag [#allocation9], 1
    %16 = vsyncpa %s15, 0
    %17 = vsyncpa [#allocation4], 0
    loop: start=0, step=1, limit=6
    $region2: #{tpu_custom_call.1} parent=1 // loop_pre_header
      _
    $region3: #{tpu_custom_call.1} parent=1 // loop_header
      %s19 = sphi 0, %s23
      %p20 = scmp.ge.s32.totalorder %s19, 6
      %s26 = sphi 0, %s38
      %s27 = sphi 0, %s34
      %s28 = sphi 0, %s26
      %s29 = sphi 0, %s27
      %s30 = sphi 0, %s28
      %s31 = sphi 0, %s29
      %s41 = sphi 0, %s43
      %s44 = sphi 0, %s41
      %s45 = sphi 0, %s44
      %s61 = sphi 0, %s45
      %s67 = sphi 0, %s69
      %s70 = sphi 0, %s67
      %s71 = sphi 0, %s70
      %s87 = sphi 0, %s71
      %s93 = sphi 0, %s95
      %s96 = sphi 0, %s93
      %s97 = sphi 0, %s96
      %s113 = sphi 0, %s97
      %s119 = sphi 0, %s121
      %s122 = sphi 0, %s119
      %s123 = sphi 0, %s122
      %s139 = sphi 0, %s123
      %s143 = sphi 0, %s143
      %s145 = sphi 0, %s143
      %s146 = sphi 0, %s145
      %s160 = sphi 0, %s146
      %s166 = sphi 0, %s168
      %s169 = sphi 0, %s166
      %s170 = sphi 0, %s169
      %s186 = sphi 0, %s170
    $region4: #{tpu_custom_call.1} parent=1 // loop_header_branch
      %22 = sbr.rel (%p20) target = $region8
    $region5: #{tpu_custom_call.1} parent=1 // loop_body
      %s24 = ssub.s32 %s19, 1
      %s25 = ssub.s32 %s19, 2
      %s32 = sadd.s32 1, %s27
      %p33 = scmp.ge.s32.totalorder %s32, 4
      %s34 = scalar_select %p33, 0, %s32
      %s35 = sadd.s32 1, %s26
      %s36 = scalar_select %p33, %s35, %s26
      %p37 = scmp.ge.s32.totalorder %s36, 1
      %s38 = scalar_select %p37, 0, %s36
      %s39 = ssub.s32 %s26, %s38
      %p40 = scmp.eq.s32.totalorder %s39, 0
      %s42 = sadd.s32 %s41, 1
      %s43 = scalar_select %p40, %s41, %s42
      %p46 = pneg %p40
      %p47 = scmp.eq.s32.totalorder %s19, 3
      %p48 = por %p46, %p47
      %p49 = scmp.ne.s32.totalorder %s41, %s44
      %p50 = scmp.eq.s32.totalorder %s19, 0
      %p51 = por %p49, %p50
      %p52 = scmp.ne.s32.totalorder %s41, %s44
      %p53 = scmp.eq.s32.totalorder %s24, 3
      %p54 = por %p52, %p53
      %p55 = scmp.ne.s32.totalorder %s44, %s45
      %p56 = scmp.eq.s32.totalorder %s24, 0
      %p57 = por %p55, %p56
      %p58 = scmp.ne.s32.totalorder %s44, %s45
      %p59 = scmp.eq.s32.totalorder %s25, 3
      %p60 = por %p58, %p59
      %p62 = scmp.ne.s32.totalorder %s45, %s61
      %p63 = scmp.eq.s32.totalorder %s25, 0
      %p64 = por %p62, %p63
      %s65 = ssub.s32 %s27, %s34
      %p66 = scmp.eq.s32.totalorder %s65, 0
      %s68 = sadd.s32 %s67, 1
      %s69 = scalar_select %p66, %s67, %s68
      %p72 = pneg %p66
      %p73 = scmp.eq.s32.totalorder %s19, 3
      %p74 = por %p72, %p73
      %p75 = scmp.ne.s32.totalorder %s67, %s70
      %p76 = scmp.eq.s32.totalorder %s19, 0
      %p77 = por %p75, %p76
      %p78 = scmp.ne.s32.totalorder %s67, %s70
      %p79 = scmp.eq.s32.totalorder %s24, 3
      %p80 = por %p78, %p79
      %p81 = scmp.ne.s32.totalorder %s70, %s71
      %p82 = scmp.eq.s32.totalorder %s24, 0
      %p83 = por %p81, %p82
      %p84 = scmp.ne.s32.totalorder %s70, %s71
      %p85 = scmp.eq.s32.totalorder %s25, 3
      %p86 = por %p84, %p85
      %p88 = scmp.ne.s32.totalorder %s71, %s87
      %p89 = scmp.eq.s32.totalorder %s25, 0
      %p90 = por %p88, %p89
      %s91 = ssub.s32 %s27, %s34
      %p92 = scmp.eq.s32.totalorder %s91, 0
      %s94 = sadd.s32 %s93, 1
      %s95 = scalar_select %p92, %s93, %s94
      %p98 = pneg %p92
      %p99 = scmp.eq.s32.totalorder %s19, 3
      %p100 = por %p98, %p99
      %p101 = scmp.ne.s32.totalorder %s93, %s96
      %p102 = scmp.eq.s32.totalorder %s19, 0
      %p103 = por %p101, %p102
      %p104 = scmp.ne.s32.totalorder %s93, %s96
      %p105 = scmp.eq.s32.totalorder %s24, 3
      %p106 = por %p104, %p105
      %p107 = scmp.ne.s32.totalorder %s96, %s97
      %p108 = scmp.eq.s32.totalorder %s24, 0
      %p109 = por %p107, %p108
      %p110 = scmp.ne.s32.totalorder %s96, %s97
      %p111 = scmp.eq.s32.totalorder %s25, 3
      %p112 = por %p110, %p111
      %p114 = scmp.ne.s32.totalorder %s97, %s113
      %p115 = scmp.eq.s32.totalorder %s25, 0
      %p116 = por %p114, %p115
      %s117 = ssub.s32 %s27, %s34
      %p118 = scmp.eq.s32.totalorder %s117, 0
      %s120 = sadd.s32 %s119, 1
      %s121 = scalar_select %p118, %s119, %s120
      %p124 = pneg %p118
      %p125 = scmp.eq.s32.totalorder %s19, 3
      %p126 = por %p124, %p125
      %p127 = scmp.ne.s32.totalorder %s119, %s122
      %p128 = scmp.eq.s32.totalorder %s19, 0
      %p129 = por %p127, %p128
      %p130 = scmp.ne.s32.totalorder %s119, %s122
      %p131 = scmp.eq.s32.totalorder %s24, 3
      %p132 = por %p130, %p131
      %p133 = scmp.ne.s32.totalorder %s122, %s123
      %p134 = scmp.eq.s32.totalorder %s24, 0
      %p135 = por %p133, %p134
      %p136 = scmp.ne.s32.totalorder %s122, %s123
      %p137 = scmp.eq.s32.totalorder %s25, 3
      %p138 = por %p136, %p137
      %p140 = scmp.ne.s32.totalorder %s123, %s139
      %p141 = scmp.eq.s32.totalorder %s25, 0
      %p142 = por %p140, %p141
      %s144 = sadd.s32 %s143, 1
      %p147 = scmp.eq.s32.totalorder %s19, 3
      %p148 = scmp.ne.s32.totalorder %s143, %s145
      %p149 = scmp.eq.s32.totalorder %s19, 0
      %p150 = por %p148, %p149
      %p151 = scmp.ne.s32.totalorder %s143, %s145
      %p152 = scmp.eq.s32.totalorder %s24, 3
      %p153 = por %p151, %p152
      %p154 = scmp.ne.s32.totalorder %s145, %s146
      %p155 = scmp.eq.s32.totalorder %s24, 0
      %p156 = por %p154, %p155
      %p157 = scmp.ne.s32.totalorder %s145, %s146
      %p158 = scmp.eq.s32.totalorder %s25, 3
      %p159 = por %p157, %p158
      %p161 = scmp.ne.s32.totalorder %s146, %s160
      %p162 = scmp.eq.s32.totalorder %s25, 0
      %p163 = por %p161, %p162
      %s164 = ssub.s32 %s26, %s38
      %p165 = scmp.eq.s32.totalorder %s164, 0
      %s167 = sadd.s32 %s166, 1
      %s168 = scalar_select %p165, %s166, %s167
      %p171 = pneg %p165
      %p172 = scmp.eq.s32.totalorder %s19, 3
      %p173 = por %p171, %p172
      %p174 = scmp.ne.s32.totalorder %s166, %s169
      %p175 = scmp.eq.s32.totalorder %s19, 0
      %p176 = por %p174, %p175
      %p177 = scmp.ne.s32.totalorder %s166, %s169
      %p178 = scmp.eq.s32.totalorder %s24, 3
      %p179 = por %p177, %p178
      %p180 = scmp.ne.s32.totalorder %s169, %s170
      %p181 = scmp.eq.s32.totalorder %s24, 0
      %p182 = por %p180, %p181
      %p183 = scmp.ne.s32.totalorder %s169, %s170
      %p184 = scmp.eq.s32.totalorder %s25, 3
      %p185 = por %p183, %p184
      %p187 = scmp.ne.s32.totalorder %s170, %s186
      %p188 = scmp.eq.s32.totalorder %s25, 0
      %p189 = por %p187, %p188
      %p190 = scmp.le.s32.totalorder 1, %s19
      %p191 = scmp.lt.s32.totalorder %s19, 5
      %p192 = pnand %p190, %p191
      %p193 = pneg %p192
      // Predicated region
      $region9: #{tpu_custom_call.1} parent=5 // pred_check
        _
      $region10: #{tpu_custom_call.1} parent=5 // pred_check_branch
        %195 = sbr.rel (%p192) target = $region12
      $region11: #{tpu_custom_call.1} parent=5 // pred_region
        %s196 = ssub.s32 %s19, 1
        // Predicated region
        $region13: #{tpu_custom_call.1} parent=11 // pred_check
          %p197 = pneg %p57
        $region14: #{tpu_custom_call.1} parent=11 // pred_check_branch
          %199 = sbr.rel (%p197) target = $region16
        $region15: #{tpu_custom_call.1} parent=11 // pred_region
          %s200 = smul.u32 25, %s28
          %s202 = ssub.s32 12800, 12800
          %203 = vsyncadd [#allocation3], %s202
          %s204 = smul.addr %s200, 4
          %s205 = smul.addr %s204, 128
          %s206 = scalar_lea.hbm %s0, %s205
          %s207 = sshll.u32 [#allocation2], 4
          %s208 = int_to_ptr.vmem [resolvable:$true] %s207
          %213 = dma.hbm_to_vmem [thread:$0]  %s206, 12800, %s208, [#allocation3], 512, 512, 32
        $region16: #{tpu_custom_call.1} parent=11 // pred_fallthru
          _
        // Predicated region
        $region17: #{tpu_custom_call.1} parent=11 // pred_check
          %p214 = pneg %p156
        $region18: #{tpu_custom_call.1} parent=11 // pred_check_branch
          %216 = sbr.rel (%p214) target = $region20
        $region19: #{tpu_custom_call.1} parent=11 // pred_region
          %s218 = ssub.s32 64, 64
          %219 = vsyncadd [#allocation9], %s218
          %s221 = sshll.u32 [#allocation10], 4
          %s222 = int_to_ptr.vmem [resolvable:$true] %s221
          %224 = dma.hbm_to_vmem [thread:$0]  %s4, 64, %s222, [#allocation9]
        $region20: #{tpu_custom_call.1} parent=11 // pred_fallthru
          _
      $region12: #{tpu_custom_call.1} parent=5 // pred_fallthru
        _
      %p225 = scmp.lt.s32.totalorder %s19, 4
      // Predicated region
      $region21: #{tpu_custom_call.1} parent=5 // pred_check
        %p226 = pneg %p225
      $region22: #{tpu_custom_call.1} parent=5 // pred_check_branch
        %228 = sbr.rel (%p226) target = $region24
      $region23: #{tpu_custom_call.1} parent=5 // pred_region
        // Predicated region
        $region25: #{tpu_custom_call.1} parent=23 // pred_check
          %p229 = pneg %p77
        $region26: #{tpu_custom_call.1} parent=23 // pred_check_branch
          %231 = sbr.rel (%p229) target = $region28
        $region27: #{tpu_custom_call.1} parent=23 // pred_region
          %s232 = sand.u32 %s19, 1
          %s233 = scalar_lea.sflag [#allocation6], %s232
          %s234 = sand.u32 %s67, 1
          %s235 = smul.addr %s234, 2048
          %s236 = scalar_lea.vmem [#allocation5], %s235
          %s238 = ssub.s32 32768, 32768
          %239 = vsyncadd %s233, %s238
          %s240 = smul.addr %s27, 256
          %s241 = smul.addr %s240, 128
          %s242 = scalar_lea.hbm %s1, %s241
          %s243 = sshll.u32 %s236, 4
          %s244 = int_to_ptr.vmem [resolvable:$true] %s243
          %249 = dma.hbm_to_vmem [thread:$0]  %s242, 32768, %s244, %s233, 512, 512, 32
        $region28: #{tpu_custom_call.1} parent=23 // pred_fallthru
          _
        // Predicated region
        $region29: #{tpu_custom_call.1} parent=23 // pred_check
          %p250 = pneg %p103
        $region30: #{tpu_custom_call.1} parent=23 // pred_check_branch
          %252 = sbr.rel (%p250) target = $region32
        $region31: #{tpu_custom_call.1} parent=23 // pred_region
          %s253 = sand.u32 %s19, 1
          %s254 = scalar_lea.sflag [#allocation6], %s253
          %s255 = sand.u32 %s93, 1
          %s256 = smul.addr %s255, 4
          %s257 = scalar_lea.vmem [#allocation7], %s256
          %s258 = smul.u32 4, %s27
          %s260 = ssub.s32 64, 64
          %261 = vsyncadd %s254, %s260
          %s262 = smul.addr %s258, 16
          %s263 = scalar_lea.hbm %s2, %s262
          %s265 = sshll.u32 %s257, 4
          %s266 = int_to_ptr.vmem [resolvable:$true] %s265
          %268 = dma.hbm_to_vmem [thread:$0]  %s263, 64, %s266, %s254
        $region32: #{tpu_custom_call.1} parent=23 // pred_fallthru
          _
        // Predicated region
        $region33: #{tpu_custom_call.1} parent=23 // pred_check
          %p269 = pneg %p129
        $region34: #{tpu_custom_call.1} parent=23 // pred_check_branch
          %271 = sbr.rel (%p269) target = $region36
        $region35: #{tpu_custom_call.1} parent=23 // pred_region
          %s272 = sand.u32 %s19, 1
          %s273 = scalar_lea.sflag [#allocation9], %s272
          %s274 = sand.u32 %s119, 1
          %s275 = smul.addr %s274, 2048
          %s276 = scalar_lea.vmem [#allocation8], %s275
          %s277 = smul.u32 64, %s27
          %s279 = ssub.s32 32768, 32768
          %280 = vsyncadd %s273, %s279
          %s281 = smul.addr %s277, 4
          %s282 = smul.addr %s281, 128
          %s283 = scalar_lea.hbm %s3, %s282
          %s284 = sshll.u32 %s276, 4
          %s285 = int_to_ptr.vmem [resolvable:$true] %s284
          %290 = dma.hbm_to_vmem [thread:$0]  %s283, 32768, %s285, %s273, 512, 512, 32
        $region36: #{tpu_custom_call.1} parent=23 // pred_fallthru
          _
      $region24: #{tpu_custom_call.1} parent=5 // pred_fallthru
        _
      %p291 = scmp.le.s32.totalorder 1, %s19
      %p292 = scmp.lt.s32.totalorder %s19, 5
      %p293 = pnand %p291, %p292
      %p294 = pneg %p293
      // Predicated region
      $region37: #{tpu_custom_call.1} parent=5 // pred_check
        _
      $region38: #{tpu_custom_call.1} parent=5 // pred_check_branch
        %296 = sbr.rel (%p293) target = $region40
      $region39: #{tpu_custom_call.1} parent=5 // pred_region
        %s297 = ssub.s32 %s19, 1
        // Predicated region
        $region41: #{tpu_custom_call.1} parent=39 // pred_check
          %p298 = pneg %p57
        $region42: #{tpu_custom_call.1} parent=39 // pred_check_branch
          %300 = sbr.rel (%p298) target = $region44
        $region43: #{tpu_custom_call.1} parent=39 // pred_region
          %301 = dma.done [#allocation3], 12800
        $region44: #{tpu_custom_call.1} parent=39 // pred_fallthru
          _
        %s302 = sand.u32 %s24, 1
        %s303 = scalar_lea.sflag [#allocation6], %s302
        %s304 = sand.u32 %s70, 1
        %s305 = smul.addr %s304, 2048
        %s306 = scalar_lea.vmem [#allocation5], %s305
        // Predicated region
        $region45: #{tpu_custom_call.1} parent=39 // pred_check
          %p307 = pneg %p83
        $region46: #{tpu_custom_call.1} parent=39 // pred_check_branch
          %309 = sbr.rel (%p307) target = $region48
        $region47: #{tpu_custom_call.1} parent=39 // pred_region
          %310 = dma.done %s303, 32768
        $region48: #{tpu_custom_call.1} parent=39 // pred_fallthru
          _
        %s311 = sand.u32 %s24, 1
        %s312 = scalar_lea.sflag [#allocation6], %s311
        %s313 = sand.u32 %s96, 1
        %s314 = smul.addr %s313, 4
        %s315 = scalar_lea.vmem [#allocation7], %s314
        // Predicated region
        $region49: #{tpu_custom_call.1} parent=39 // pred_check
          %p316 = pneg %p109
        $region50: #{tpu_custom_call.1} parent=39 // pred_check_branch
          %318 = sbr.rel (%p316) target = $region52
        $region51: #{tpu_custom_call.1} parent=39 // pred_region
          %319 = dma.done %s312, 64
        $region52: #{tpu_custom_call.1} parent=39 // pred_fallthru
          _
        %s320 = sand.u32 %s24, 1
        %s321 = scalar_lea.sflag [#allocation9], %s320
        %s322 = sand.u32 %s122, 1
        %s323 = smul.addr %s322, 2048
        %s324 = scalar_lea.vmem [#allocation8], %s323
        // Predicated region
        $region53: #{tpu_custom_call.1} parent=39 // pred_check
          %p325 = pneg %p135
        $region54: #{tpu_custom_call.1} parent=39 // pred_check_branch
          %327 = sbr.rel (%p325) target = $region56
        $region55: #{tpu_custom_call.1} parent=39 // pred_region
          %328 = dma.done %s321, 32768
        $region56: #{tpu_custom_call.1} parent=39 // pred_fallthru
          _
        // Predicated region
        $region57: #{tpu_custom_call.1} parent=39 // pred_check
          %p329 = pneg %p156
        $region58: #{tpu_custom_call.1} parent=39 // pred_check_branch
          %331 = sbr.rel (%p329) target = $region60
        $region59: #{tpu_custom_call.1} parent=39 // pred_region
          %332 = dma.done [#allocation9], 64
        $region60: #{tpu_custom_call.1} parent=39 // pred_fallthru
          _
        %p333 = pneg %p57
        %p334 = pneg %p54
        %s335 = sand.u32 %s24, 1
        %s336 = scalar_lea.sflag [#allocation6], %s335
        %s337 = sand.u32 %s70, 1
        %s338 = smul.addr %s337, 2048
        %s339 = scalar_lea.vmem [#allocation5], %s338
        %p340 = pneg %p83
        %p341 = pneg %p80
        %s342 = sand.u32 %s24, 1
        %s343 = scalar_lea.sflag [#allocation6], %s342
        %s344 = sand.u32 %s96, 1
        %s345 = smul.addr %s344, 4
        %s346 = scalar_lea.vmem [#allocation7], %s345
        %p347 = pneg %p109
        %p348 = pneg %p106
        %s349 = sand.u32 %s24, 1
        %s350 = scalar_lea.sflag [#allocation9], %s349
        %s351 = sand.u32 %s122, 1
        %s352 = smul.addr %s351, 2048
        %s353 = scalar_lea.vmem [#allocation8], %s352
        %p354 = pneg %p135
        %p355 = pneg %p132
        %p356 = pneg %p156
        %p357 = pneg %p153
        %p358 = pneg %p182
        %p359 = pneg %p179
        %s360 = smul.u32 25, %s28
        %s361 = smul.u32 4, %s29
        %s362 = smul.u32 64, %s29
        %s363 = smul.u32 25, %s28
        %v364 = vld [vmem:[#allocation2] sm:$0xff]
        %v365 = vld [vmem:[#allocation2 + $0x8] sm:$0xff]
        %v366 = vld [vmem:[#allocation2 + $0x10] sm:$0xff]
        %v367 = vld [vmem:[#allocation2 + $0x18] sm:$0xff]
        %v368 = vld [vmem:[#allocation2 + $0x20] sm:$0xff]
        %v369 = vld [vmem:[#allocation2 + $0x28] sm:$0xff]
        %v370 = vld [vmem:[#allocation2 + $0x30] sm:$0xff]
        %v371 = vld [vmem:[#allocation2 + $0x38] sm:$0xff]
        %v372 = vld [vmem:[#allocation2 + $0x40] sm:$0xff]
        %v373 = vld [vmem:[#allocation2 + $0x48] sm:$0xff]
        %v374 = vld [vmem:[#allocation2 + $0x50] sm:$0xff]
        %v375 = vld [vmem:[#allocation2 + $0x58] sm:$0xff]
        %v376 = vld [vmem:[#allocation2 + $0x60] sm:$0xff]
        %v377 = vld [vmem:[#allocation2 + $0x68] sm:$0xff]
        %v378 = vld [vmem:[#allocation2 + $0x70] sm:$0xff]
        %v379 = vld [vmem:[#allocation2 + $0x78] sm:$0xff]
        %v380 = vld [vmem:[#allocation2 + $0x80] sm:$0xff]
        %v381 = vld [vmem:[#allocation2 + $0x88] sm:$0xff]
        %v382 = vld [vmem:[#allocation2 + $0x90] sm:$0xff]
        %v383 = vld [vmem:[#allocation2 + $0x98] sm:$0xff]
        %v384 = vld [vmem:[#allocation2 + $0xa0] sm:$0xff]
        %v385 = vld [vmem:[#allocation2 + $0xa8] sm:$0xff]
        %v386 = vld [vmem:[#allocation2 + $0xb0] sm:$0xff]
        %v387 = vld [vmem:[#allocation2 + $0xb8] sm:$0xff]
        %v388 = vld [vmem:[#allocation2 + $0xc0] sm:$0xff]
        %v389 = vld [vmem:[#allocation2 + $0xc8] sm:$0xff]
        %v390 = vld [vmem:[#allocation2 + $0xd0] sm:$0xff]
        %v391 = vld [vmem:[#allocation2 + $0xd8] sm:$0xff]
        %v392 = vld [vmem:[#allocation2 + $0xe0] sm:$0xff]
        %v393 = vld [vmem:[#allocation2 + $0xe8] sm:$0xff]
        %v394 = vld [vmem:[#allocation2 + $0xf0] sm:$0xff]
        %v395 = vld [vmem:[#allocation2 + $0xf8] sm:$0xff]
        %v396 = vld [vmem:[#allocation2 + $0x100] sm:$0xff]
        %v397 = vld [vmem:[#allocation2 + $0x108] sm:$0xff]
        %v398 = vld [vmem:[#allocation2 + $0x110] sm:$0xff]
        %v399 = vld [vmem:[#allocation2 + $0x118] sm:$0xff]
        %v400 = vld [vmem:[#allocation2 + $0x120] sm:$0xff]
        %v401 = vld [vmem:[#allocation2 + $0x128] sm:$0xff]
        %v402 = vld [vmem:[#allocation2 + $0x130] sm:$0xff]
        %v403 = vld [vmem:[#allocation2 + $0x138] sm:$0xff]
        %v404 = vld [vmem:[#allocation2 + $0x140] sm:$0xff]
        %v405 = vld [vmem:[#allocation2 + $0x148] sm:$0xff]
        %v406 = vld [vmem:[#allocation2 + $0x150] sm:$0xff]
        %v407 = vld [vmem:[#allocation2 + $0x158] sm:$0xff]
        %v408 = vld [vmem:[#allocation2 + $0x160] sm:$0xff]
        %v409 = vld [vmem:[#allocation2 + $0x168] sm:$0xff]
        %v410 = vld [vmem:[#allocation2 + $0x170] sm:$0xff]
        %v411 = vld [vmem:[#allocation2 + $0x178] sm:$0xff]
        %v412 = vld [vmem:[#allocation2 + $0x180] sm:$0xff]
        %v413 = vld [vmem:[#allocation2 + $0x188] sm:$0xff]
        %v414 = vld [vmem:[#allocation2 + $0x190] sm:$0xff]
        %v415 = vld [vmem:[#allocation2 + $0x198] sm:$0xff]
        %v416 = vld [vmem:[#allocation2 + $0x1a0] sm:$0xff]
        %v417 = vld [vmem:[#allocation2 + $0x1a8] sm:$0xff]
        %v418 = vld [vmem:[#allocation2 + $0x1b0] sm:$0xff]
        %v419 = vld [vmem:[#allocation2 + $0x1b8] sm:$0xff]
        %v420 = vld [vmem:[#allocation2 + $0x1c0] sm:$0xff]
        %v421 = vld [vmem:[#allocation2 + $0x1c8] sm:$0xff]
        %v422 = vld [vmem:[#allocation2 + $0x1d0] sm:$0xff]
        %v423 = vld [vmem:[#allocation2 + $0x1d8] sm:$0xff]
        %v424 = vld [vmem:[#allocation2 + $0x1e0] sm:$0xff]
        %v425 = vld [vmem:[#allocation2 + $0x1e8] sm:$0xff]
        %v426 = vld [vmem:[#allocation2 + $0x1f0] sm:$0xff]
        %v427 = vld [vmem:[#allocation2 + $0x1f8] sm:$0xff]
        %v428 = vld [vmem:[#allocation2 + $0x200] sm:$0xff]
        %v429 = vld [vmem:[#allocation2 + $0x208] sm:$0xff]
        %v430 = vld [vmem:[#allocation2 + $0x210] sm:$0xff]
        %v431 = vld [vmem:[#allocation2 + $0x218] sm:$0xff]
        %v432 = vld [vmem:[#allocation2 + $0x220] sm:$0xff]
        %v433 = vld [vmem:[#allocation2 + $0x228] sm:$0xff]
        %v434 = vld [vmem:[#allocation2 + $0x230] sm:$0xff]
        %v435 = vld [vmem:[#allocation2 + $0x238] sm:$0xff]
        %v436 = vld [vmem:[#allocation2 + $0x240] sm:$0xff]
        %v437 = vld [vmem:[#allocation2 + $0x248] sm:$0xff]
        %v438 = vld [vmem:[#allocation2 + $0x250] sm:$0xff]
        %v439 = vld [vmem:[#allocation2 + $0x258] sm:$0xff]
        %v440 = vld [vmem:[#allocation2 + $0x260] sm:$0xff]
        %v441 = vld [vmem:[#allocation2 + $0x268] sm:$0xff]
        %v442 = vld [vmem:[#allocation2 + $0x270] sm:$0xff]
        %v443 = vld [vmem:[#allocation2 + $0x278] sm:$0xff]
        %v444 = vld [vmem:[#allocation2 + $0x280] sm:$0xff]
        %v445 = vld [vmem:[#allocation2 + $0x288] sm:$0xff]
        %v446 = vld [vmem:[#allocation2 + $0x290] sm:$0xff]
        %v447 = vld [vmem:[#allocation2 + $0x298] sm:$0xff]
        %v448 = vld [vmem:[#allocation2 + $0x2a0] sm:$0xff]
        %v449 = vld [vmem:[#allocation2 + $0x2a8] sm:$0xff]
        %v450 = vld [vmem:[#allocation2 + $0x2b0] sm:$0xff]
        %v451 = vld [vmem:[#allocation2 + $0x2b8] sm:$0xff]
        %v452 = vld [vmem:[#allocation2 + $0x2c0] sm:$0xff]
        %v453 = vld [vmem:[#allocation2 + $0x2c8] sm:$0xff]
        %v454 = vld [vmem:[#allocation2 + $0x2d0] sm:$0xff]
        %v455 = vld [vmem:[#allocation2 + $0x2d8] sm:$0xff]
        %v456 = vld [vmem:[#allocation2 + $0x2e0] sm:$0xff]
        %v457 = vld [vmem:[#allocation2 + $0x2e8] sm:$0xff]
        %v458 = vld [vmem:[#allocation2 + $0x2f0] sm:$0xff]
        %v459 = vld [vmem:[#allocation2 + $0x2f8] sm:$0xff]
        %v460 = vld [vmem:[#allocation2 + $0x300] sm:$0xff]
        %v461 = vld [vmem:[#allocation2 + $0x308] sm:$0xff]
        %v462 = vld [vmem:[#allocation2 + $0x310] sm:$0xff]
        %v463 = vld [vmem:[#allocation2 + $0x318] sm:$0xff]
        %v464 = vld [vmem:[%s306] sm:$0xff]
        %v465 = vld [vmem:[%s306 + $0x8] sm:$0xff]
        %v466 = vld [vmem:[%s306 + $0x10] sm:$0xff]
        %v467 = vld [vmem:[%s306 + $0x18] sm:$0xff]
        %v468 = vld [vmem:[%s306 + $0x20] sm:$0xff]
        %v469 = vld [vmem:[%s306 + $0x28] sm:$0xff]
        %v470 = vld [vmem:[%s306 + $0x30] sm:$0xff]
        %v471 = vld [vmem:[%s306 + $0x38] sm:$0xff]
        %v472 = vld [vmem:[%s306 + $0x40] sm:$0xff]
        %v473 = vld [vmem:[%s306 + $0x48] sm:$0xff]
        %v474 = vld [vmem:[%s306 + $0x50] sm:$0xff]
        %v475 = vld [vmem:[%s306 + $0x58] sm:$0xff]
        %v476 = vld [vmem:[%s306 + $0x60] sm:$0xff]
        %v477 = vld [vmem:[%s306 + $0x68] sm:$0xff]
        %v478 = vld [vmem:[%s306 + $0x70] sm:$0xff]
        %v479 = vld [vmem:[%s306 + $0x78] sm:$0xff]
        %v480 = vld [vmem:[%s306 + $0x80] sm:$0xff]
        %v481 = vld [vmem:[%s306 + $0x88] sm:$0xff]
        %v482 = vld [vmem:[%s306 + $0x90] sm:$0xff]
        %v483 = vld [vmem:[%s306 + $0x98] sm:$0xff]
        %v484 = vld [vmem:[%s306 + $0xa0] sm:$0xff]
        %v485 = vld [vmem:[%s306 + $0xa8] sm:$0xff]
        %v486 = vld [vmem:[%s306 + $0xb0] sm:$0xff]
        %v487 = vld [vmem:[%s306 + $0xb8] sm:$0xff]
        %v488 = vld [vmem:[%s306 + $0xc0] sm:$0xff]
        %v489 = vld [vmem:[%s306 + $0xc8] sm:$0xff]
        %v490 = vld [vmem:[%s306 + $0xd0] sm:$0xff]
        %v491 = vld [vmem:[%s306 + $0xd8] sm:$0xff]
        %v492 = vld [vmem:[%s306 + $0xe0] sm:$0xff]
        %v493 = vld [vmem:[%s306 + $0xe8] sm:$0xff]
        %v494 = vld [vmem:[%s306 + $0xf0] sm:$0xff]
        %v495 = vld [vmem:[%s306 + $0xf8] sm:$0xff]
        %v496 = vld [vmem:[%s306 + $0x100] sm:$0xff]
        %v497 = vld [vmem:[%s306 + $0x108] sm:$0xff]
        %v498 = vld [vmem:[%s306 + $0x110] sm:$0xff]
        %v499 = vld [vmem:[%s306 + $0x118] sm:$0xff]
        %v500 = vld [vmem:[%s306 + $0x120] sm:$0xff]
        %v501 = vld [vmem:[%s306 + $0x128] sm:$0xff]
        %v502 = vld [vmem:[%s306 + $0x130] sm:$0xff]
        %v503 = vld [vmem:[%s306 + $0x138] sm:$0xff]
        %v504 = vld [vmem:[%s306 + $0x140] sm:$0xff]
        %v505 = vld [vmem:[%s306 + $0x148] sm:$0xff]
        %v506 = vld [vmem:[%s306 + $0x150] sm:$0xff]
        %v507 = vld [vmem:[%s306 + $0x158] sm:$0xff]
        %v508 = vld [vmem:[%s306 + $0x160] sm:$0xff]
        %v509 = vld [vmem:[%s306 + $0x168] sm:$0xff]
        %v510 = vld [vmem:[%s306 + $0x170] sm:$0xff]
        %v511 = vld [vmem:[%s306 + $0x178] sm:$0xff]
        %v512 = vld [vmem:[%s306 + $0x180] sm:$0xff]
        %v513 = vld [vmem:[%s306 + $0x188] sm:$0xff]
        %v514 = vld [vmem:[%s306 + $0x190] sm:$0xff]
        %v515 = vld [vmem:[%s306 + $0x198] sm:$0xff]
        %v516 = vld [vmem:[%s306 + $0x1a0] sm:$0xff]
        %v517 = vld [vmem:[%s306 + $0x1a8] sm:$0xff]
        %v518 = vld [vmem:[%s306 + $0x1b0] sm:$0xff]
        %v519 = vld [vmem:[%s306 + $0x1b8] sm:$0xff]
        %v520 = vld [vmem:[%s306 + $0x1c0] sm:$0xff]
        %v521 = vld [vmem:[%s306 + $0x1c8] sm:$0xff]
        %v522 = vld [vmem:[%s306 + $0x1d0] sm:$0xff]
        %v523 = vld [vmem:[%s306 + $0x1d8] sm:$0xff]
        %v524 = vld [vmem:[%s306 + $0x1e0] sm:$0xff]
        %v525 = vld [vmem:[%s306 + $0x1e8] sm:$0xff]
        %v526 = vld [vmem:[%s306 + $0x1f0] sm:$0xff]
        %v527 = vld [vmem:[%s306 + $0x1f8] sm:$0xff]
        %v528 = vld [vmem:[%s306 + $0x200] sm:$0xff]
        %v529 = vld [vmem:[%s306 + $0x208] sm:$0xff]
        %v530 = vld [vmem:[%s306 + $0x210] sm:$0xff]
        %v531 = vld [vmem:[%s306 + $0x218] sm:$0xff]
        %v532 = vld [vmem:[%s306 + $0x220] sm:$0xff]
        %v533 = vld [vmem:[%s306 + $0x228] sm:$0xff]
        %v534 = vld [vmem:[%s306 + $0x230] sm:$0xff]
        %v535 = vld [vmem:[%s306 + $0x238] sm:$0xff]
        %v536 = vld [vmem:[%s306 + $0x240] sm:$0xff]
        %v537 = vld [vmem:[%s306 + $0x248] sm:$0xff]
        %v538 = vld [vmem:[%s306 + $0x250] sm:$0xff]
        %v539 = vld [vmem:[%s306 + $0x258] sm:$0xff]
        %v540 = vld [vmem:[%s306 + $0x260] sm:$0xff]
        %v541 = vld [vmem:[%s306 + $0x268] sm:$0xff]
        %v542 = vld [vmem:[%s306 + $0x270] sm:$0xff]
        %v543 = vld [vmem:[%s306 + $0x278] sm:$0xff]
        %v544 = vld [vmem:[%s306 + $0x280] sm:$0xff]
        %v545 = vld [vmem:[%s306 + $0x288] sm:$0xff]
        %v546 = vld [vmem:[%s306 + $0x290] sm:$0xff]
        %v547 = vld [vmem:[%s306 + $0x298] sm:$0xff]
        %v548 = vld [vmem:[%s306 + $0x2a0] sm:$0xff]
        %v549 = vld [vmem:[%s306 + $0x2a8] sm:$0xff]
        %v550 = vld [vmem:[%s306 + $0x2b0] sm:$0xff]
        %v551 = vld [vmem:[%s306 + $0x2b8] sm:$0xff]
        %v552 = vld [vmem:[%s306 + $0x2c0] sm:$0xff]
        %v553 = vld [vmem:[%s306 + $0x2c8] sm:$0xff]
        %v554 = vld [vmem:[%s306 + $0x2d0] sm:$0xff]
        %v555 = vld [vmem:[%s306 + $0x2d8] sm:$0xff]
        %v556 = vld [vmem:[%s306 + $0x2e0] sm:$0xff]
        %v557 = vld [vmem:[%s306 + $0x2e8] sm:$0xff]
        %v558 = vld [vmem:[%s306 + $0x2f0] sm:$0xff]
        %v559 = vld [vmem:[%s306 + $0x2f8] sm:$0xff]
        %v560 = vld [vmem:[%s306 + $0x300] sm:$0xff]
        %v561 = vld [vmem:[%s306 + $0x308] sm:$0xff]
        %v562 = vld [vmem:[%s306 + $0x310] sm:$0xff]
        %v563 = vld [vmem:[%s306 + $0x318] sm:$0xff]
        %v564 = vld [vmem:[%s306 + $0x320] sm:$0xff]
        %v565 = vld [vmem:[%s306 + $0x328] sm:$0xff]
        %v566 = vld [vmem:[%s306 + $0x330] sm:$0xff]
        %v567 = vld [vmem:[%s306 + $0x338] sm:$0xff]
        %v568 = vld [vmem:[%s306 + $0x340] sm:$0xff]
        %v569 = vld [vmem:[%s306 + $0x348] sm:$0xff]
        %v570 = vld [vmem:[%s306 + $0x350] sm:$0xff]
        %v571 = vld [vmem:[%s306 + $0x358] sm:$0xff]
        %v572 = vld [vmem:[%s306 + $0x360] sm:$0xff]
        %v573 = vld [vmem:[%s306 + $0x368] sm:$0xff]
        %v574 = vld [vmem:[%s306 + $0x370] sm:$0xff]
        %v575 = vld [vmem:[%s306 + $0x378] sm:$0xff]
        %v576 = vld [vmem:[%s306 + $0x380] sm:$0xff]
        %v577 = vld [vmem:[%s306 + $0x388] sm:$0xff]
        %v578 = vld [vmem:[%s306 + $0x390] sm:$0xff]
        %v579 = vld [vmem:[%s306 + $0x398] sm:$0xff]
        %v580 = vld [vmem:[%s306 + $0x3a0] sm:$0xff]
        %v581 = vld [vmem:[%s306 + $0x3a8] sm:$0xff]
        %v582 = vld [vmem:[%s306 + $0x3b0] sm:$0xff]
        %v583 = vld [vmem:[%s306 + $0x3b8] sm:$0xff]
        %v584 = vld [vmem:[%s306 + $0x3c0] sm:$0xff]
        %v585 = vld [vmem:[%s306 + $0x3c8] sm:$0xff]
        %v586 = vld [vmem:[%s306 + $0x3d0] sm:$0xff]
        %v587 = vld [vmem:[%s306 + $0x3d8] sm:$0xff]
        %v588 = vld [vmem:[%s306 + $0x3e0] sm:$0xff]
        %v589 = vld [vmem:[%s306 + $0x3e8] sm:$0xff]
        %v590 = vld [vmem:[%s306 + $0x3f0] sm:$0xff]
        %v591 = vld [vmem:[%s306 + $0x3f8] sm:$0xff]
        %v592 = vld [vmem:[%s306 + $0x400] sm:$0xff]
        %v593 = vld [vmem:[%s306 + $0x408] sm:$0xff]
        %v594 = vld [vmem:[%s306 + $0x410] sm:$0xff]
        %v595 = vld [vmem:[%s306 + $0x418] sm:$0xff]
        %v596 = vld [vmem:[%s306 + $0x420] sm:$0xff]
        %v597 = vld [vmem:[%s306 + $0x428] sm:$0xff]
        %v598 = vld [vmem:[%s306 + $0x430] sm:$0xff]
        %v599 = vld [vmem:[%s306 + $0x438] sm:$0xff]
        %v600 = vld [vmem:[%s306 + $0x440] sm:$0xff]
        %v601 = vld [vmem:[%s306 + $0x448] sm:$0xff]
        %v602 = vld [vmem:[%s306 + $0x450] sm:$0xff]
        %v603 = vld [vmem:[%s306 + $0x458] sm:$0xff]
        %v604 = vld [vmem:[%s306 + $0x460] sm:$0xff]
        %v605 = vld [vmem:[%s306 + $0x468] sm:$0xff]
        %v606 = vld [vmem:[%s306 + $0x470] sm:$0xff]
        %v607 = vld [vmem:[%s306 + $0x478] sm:$0xff]
        %v608 = vld [vmem:[%s306 + $0x480] sm:$0xff]
        %v609 = vld [vmem:[%s306 + $0x488] sm:$0xff]
        %v610 = vld [vmem:[%s306 + $0x490] sm:$0xff]
        %v611 = vld [vmem:[%s306 + $0x498] sm:$0xff]
        %v612 = vld [vmem:[%s306 + $0x4a0] sm:$0xff]
        %v613 = vld [vmem:[%s306 + $0x4a8] sm:$0xff]
        %v614 = vld [vmem:[%s306 + $0x4b0] sm:$0xff]
        %v615 = vld [vmem:[%s306 + $0x4b8] sm:$0xff]
        %v616 = vld [vmem:[%s306 + $0x4c0] sm:$0xff]
        %v617 = vld [vmem:[%s306 + $0x4c8] sm:$0xff]
        %v618 = vld [vmem:[%s306 + $0x4d0] sm:$0xff]
        %v619 = vld [vmem:[%s306 + $0x4d8] sm:$0xff]
        %v620 = vld [vmem:[%s306 + $0x4e0] sm:$0xff]
        %v621 = vld [vmem:[%s306 + $0x4e8] sm:$0xff]
        %v622 = vld [vmem:[%s306 + $0x4f0] sm:$0xff]
        %v623 = vld [vmem:[%s306 + $0x4f8] sm:$0xff]
        %v624 = vld [vmem:[%s306 + $0x500] sm:$0xff]
        %v625 = vld [vmem:[%s306 + $0x508] sm:$0xff]
        %v626 = vld [vmem:[%s306 + $0x510] sm:$0xff]
        %v627 = vld [vmem:[%s306 + $0x518] sm:$0xff]
        %v628 = vld [vmem:[%s306 + $0x520] sm:$0xff]
        %v629 = vld [vmem:[%s306 + $0x528] sm:$0xff]
        %v630 = vld [vmem:[%s306 + $0x530] sm:$0xff]
        %v631 = vld [vmem:[%s306 + $0x538] sm:$0xff]
        %v632 = vld [vmem:[%s306 + $0x540] sm:$0xff]
        %v633 = vld [vmem:[%s306 + $0x548] sm:$0xff]
        %v634 = vld [vmem:[%s306 + $0x550] sm:$0xff]
        %v635 = vld [vmem:[%s306 + $0x558] sm:$0xff]
        %v636 = vld [vmem:[%s306 + $0x560] sm:$0xff]
        %v637 = vld [vmem:[%s306 + $0x568] sm:$0xff]
        %v638 = vld [vmem:[%s306 + $0x570] sm:$0xff]
        %v639 = vld [vmem:[%s306 + $0x578] sm:$0xff]
        %v640 = vld [vmem:[%s306 + $0x580] sm:$0xff]
        %v641 = vld [vmem:[%s306 + $0x588] sm:$0xff]
        %v642 = vld [vmem:[%s306 + $0x590] sm:$0xff]
        %v643 = vld [vmem:[%s306 + $0x598] sm:$0xff]
        %v644 = vld [vmem:[%s306 + $0x5a0] sm:$0xff]
        %v645 = vld [vmem:[%s306 + $0x5a8] sm:$0xff]
        %v646 = vld [vmem:[%s306 + $0x5b0] sm:$0xff]
        %v647 = vld [vmem:[%s306 + $0x5b8] sm:$0xff]
        %v648 = vld [vmem:[%s306 + $0x5c0] sm:$0xff]
        %v649 = vld [vmem:[%s306 + $0x5c8] sm:$0xff]
        %v650 = vld [vmem:[%s306 + $0x5d0] sm:$0xff]
        %v651 = vld [vmem:[%s306 + $0x5d8] sm:$0xff]
        %v652 = vld [vmem:[%s306 + $0x5e0] sm:$0xff]
        %v653 = vld [vmem:[%s306 + $0x5e8] sm:$0xff]
        %v654 = vld [vmem:[%s306 + $0x5f0] sm:$0xff]
        %v655 = vld [vmem:[%s306 + $0x5f8] sm:$0xff]
        %v656 = vld [vmem:[%s306 + $0x600] sm:$0xff]
        %v657 = vld [vmem:[%s306 + $0x608] sm:$0xff]
        %v658 = vld [vmem:[%s306 + $0x610] sm:$0xff]
        %v659 = vld [vmem:[%s306 + $0x618] sm:$0xff]
        %v660 = vld [vmem:[%s306 + $0x620] sm:$0xff]
        %v661 = vld [vmem:[%s306 + $0x628] sm:$0xff]
        %v662 = vld [vmem:[%s306 + $0x630] sm:$0xff]
        %v663 = vld [vmem:[%s306 + $0x638] sm:$0xff]
        %v664 = vld [vmem:[%s306 + $0x640] sm:$0xff]
        %v665 = vld [vmem:[%s306 + $0x648] sm:$0xff]
        %v666 = vld [vmem:[%s306 + $0x650] sm:$0xff]
        %v667 = vld [vmem:[%s306 + $0x658] sm:$0xff]
        %v668 = vld [vmem:[%s306 + $0x660] sm:$0xff]
        %v669 = vld [vmem:[%s306 + $0x668] sm:$0xff]
        %v670 = vld [vmem:[%s306 + $0x670] sm:$0xff]
        %v671 = vld [vmem:[%s306 + $0x678] sm:$0xff]
        %v672 = vld [vmem:[%s306 + $0x680] sm:$0xff]
        %v673 = vld [vmem:[%s306 + $0x688] sm:$0xff]
        %v674 = vld [vmem:[%s306 + $0x690] sm:$0xff]
        %v675 = vld [vmem:[%s306 + $0x698] sm:$0xff]
        %v676 = vld [vmem:[%s306 + $0x6a0] sm:$0xff]
        %v677 = vld [vmem:[%s306 + $0x6a8] sm:$0xff]
        %v678 = vld [vmem:[%s306 + $0x6b0] sm:$0xff]
        %v679 = vld [vmem:[%s306 + $0x6b8] sm:$0xff]
        %v680 = vld [vmem:[%s306 + $0x6c0] sm:$0xff]
        %v681 = vld [vmem:[%s306 + $0x6c8] sm:$0xff]
        %v682 = vld [vmem:[%s306 + $0x6d0] sm:$0xff]
        %v683 = vld [vmem:[%s306 + $0x6d8] sm:$0xff]
        %v684 = vld [vmem:[%s306 + $0x6e0] sm:$0xff]
        %v685 = vld [vmem:[%s306 + $0x6e8] sm:$0xff]
        %v686 = vld [vmem:[%s306 + $0x6f0] sm:$0xff]
        %v687 = vld [vmem:[%s306 + $0x6f8] sm:$0xff]
        %v688 = vld [vmem:[%s306 + $0x700] sm:$0xff]
        %v689 = vld [vmem:[%s306 + $0x708] sm:$0xff]
        %v690 = vld [vmem:[%s306 + $0x710] sm:$0xff]
        %v691 = vld [vmem:[%s306 + $0x718] sm:$0xff]
        %v692 = vld [vmem:[%s306 + $0x720] sm:$0xff]
        %v693 = vld [vmem:[%s306 + $0x728] sm:$0xff]
        %v694 = vld [vmem:[%s306 + $0x730] sm:$0xff]
        %v695 = vld [vmem:[%s306 + $0x738] sm:$0xff]
        %v696 = vld [vmem:[%s306 + $0x740] sm:$0xff]
        %v697 = vld [vmem:[%s306 + $0x748] sm:$0xff]
        %v698 = vld [vmem:[%s306 + $0x750] sm:$0xff]
        %v699 = vld [vmem:[%s306 + $0x758] sm:$0xff]
        %v700 = vld [vmem:[%s306 + $0x760] sm:$0xff]
        %v701 = vld [vmem:[%s306 + $0x768] sm:$0xff]
        %v702 = vld [vmem:[%s306 + $0x770] sm:$0xff]
        %v703 = vld [vmem:[%s306 + $0x778] sm:$0xff]
        %v704 = vld [vmem:[%s306 + $0x780] sm:$0xff]
        %v705 = vld [vmem:[%s306 + $0x788] sm:$0xff]
        %v706 = vld [vmem:[%s306 + $0x790] sm:$0xff]
        %v707 = vld [vmem:[%s306 + $0x798] sm:$0xff]
        %v708 = vld [vmem:[%s306 + $0x7a0] sm:$0xff]
        %v709 = vld [vmem:[%s306 + $0x7a8] sm:$0xff]
        %v710 = vld [vmem:[%s306 + $0x7b0] sm:$0xff]
        %v711 = vld [vmem:[%s306 + $0x7b8] sm:$0xff]
        %v712 = vld [vmem:[%s306 + $0x7c0] sm:$0xff]
        %v713 = vld [vmem:[%s306 + $0x7c8] sm:$0xff]
        %v714 = vld [vmem:[%s306 + $0x7d0] sm:$0xff]
        %v715 = vld [vmem:[%s306 + $0x7d8] sm:$0xff]
        %v716 = vld [vmem:[%s306 + $0x7e0] sm:$0xff]
        %v717 = vld [vmem:[%s306 + $0x7e8] sm:$0xff]
        %v718 = vld [vmem:[%s306 + $0x7f0] sm:$0xff]
        %v719 = vld [vmem:[%s306 + $0x7f8] sm:$0xff]
        %v720 = vld [vmem:[%s315] sm:$0xf]
        %v722 = vlaneseq
        %v723 = vshrl.u32 %v722, 7
        %v724 = vsub.s32 0, %v723
        %v725 = vrot.slane %v720, %v724
        %v726 = vlaneseq
        %v727 = vshrl.u32 %v726, 7
        %v728 = vsub.s32 1, %v727
        %v729 = vrot.slane %v720, %v728
        %v730 = vlaneseq
        %v731 = vshrl.u32 %v730, 7
        %v732 = vsub.s32 2, %v731
        %v733 = vrot.slane %v720, %v732
        %v734 = vlaneseq
        %v735 = vshrl.u32 %v734, 7
        %v736 = vsub.s32 3, %v735
        %v737 = vrot.slane %v720, %v736
        %742 = vmatprep.subr.mxu0 %v465
        %743 = vmatpush1.msra.mxu0 %v464
        %744 = vmatprep.subr.mxu0 %v469
        %745 = vmatpush1.msra.mxu0 %v468
        %746 = vmatprep.subr.mxu0 %v473
        %747 = vmatpush1.msra.mxu0 %v472
        %748 = vmatprep.subr.mxu0 %v477
        %749 = vmatpush1.msra.mxu0 %v476
        %750 = vmatprep.subr.mxu0 %v481
        %751 = vmatpush1.msra.mxu0 %v480
        %752 = vmatprep.subr.mxu0 %v485
        %753 = vmatpush1.msra.mxu0 %v484
        %754 = vmatprep.subr.mxu0 %v489
        %755 = vmatpush1.msra.mxu0 %v488
        %756 = vmatprep.subr.mxu0 %v493
        %757 = vmatpush1.msra.mxu0 %v492
        %758 = vmatprep.subr.mxu0 %v497
        %759 = vmatpush1.msra.mxu0 %v496
        %760 = vmatprep.subr.mxu0 %v501
        %761 = vmatpush1.msra.mxu0 %v500
        %762 = vmatprep.subr.mxu0 %v505
        %763 = vmatpush1.msra.mxu0 %v504
        %764 = vmatprep.subr.mxu0 %v509
        %765 = vmatpush1.msra.mxu0 %v508
        %766 = vmatprep.subr.mxu0 %v513
        %767 = vmatpush1.msra.mxu0 %v512
        %768 = vmatprep.subr.mxu0 %v517
        %769 = vmatpush1.msra.mxu0 %v516
        %770 = vmatprep.subr.mxu0 %v521
        %771 = vmatpush1.msra.mxu0 %v520
        %772 = vmatprep.subr.mxu0 %v525
        %773 = vmatpush1.msra.mxu0 %v524
        %774 = vmatprep.subr.mxu0 %v529
        %775 = vmatpush1.msra.mxu0 %v528
        %776 = vmatprep.subr.mxu0 %v533
        %777 = vmatpush1.msra.mxu0 %v532
        %778 = vmatprep.subr.mxu0 %v537
        %779 = vmatpush1.msra.mxu0 %v536
        %780 = vmatprep.subr.mxu0 %v541
        %781 = vmatpush1.msra.mxu0 %v540
        %782 = vmatprep.subr.mxu0 %v545
        %783 = vmatpush1.msra.mxu0 %v544
        %784 = vmatprep.subr.mxu0 %v549
        %785 = vmatpush1.msra.mxu0 %v548
        %786 = vmatprep.subr.mxu0 %v553
        %787 = vmatpush1.msra.mxu0 %v552
        %788 = vmatprep.subr.mxu0 %v557
        %789 = vmatpush1.msra.mxu0 %v556
        %790 = vmatprep.subr.mxu0 %v561
        %791 = vmatpush1.msra.mxu0 %v560
        %792 = vmatprep.subr.mxu0 %v565
        %793 = vmatpush1.msra.mxu0 %v564
        %794 = vmatprep.subr.mxu0 %v569
        %795 = vmatpush1.msra.mxu0 %v568
        %796 = vmatprep.subr.mxu0 %v573
        %797 = vmatpush1.msra.mxu0 %v572
        %798 = vmatprep.subr.mxu0 %v577
        %799 = vmatpush1.msra.mxu0 %v576
        %800 = vmatprep.subr.mxu0 %v581
        %801 = vmatpush1.msra.mxu0 %v580
        %802 = vmatprep.subr.mxu0 %v585
        %803 = vmatpush1.msra.mxu0 %v584
        %804 = vmatprep.subr.mxu0 %v589
        %805 = vmatpush1.msra.mxu0 %v588
        %806 = vmatprep.mubr.f32.mxu0 %v365
        %807 = vmatmul.mubr.f32.gmra.mrb[0].mxu0 %v364
        %v808 = vpop.f32.mrb[0].mxu0
        %v809 = vadd.f32 %v725, %v808
        %v810 = vpop.f32.mrb[0].mxu0
        %v811 = vadd.f32 %v729, %v810
        %812 = vmatprep.mubr.f32.mxu0 %v369
        %813 = vmatmul.mubr.f32.gmra.mrb[0].mxu0 %v368
        %v814 = vpop.f32.mrb[0].mxu0
        %v815 = vadd.f32 %v725, %v814
        %v816 = vpop.f32.mrb[0].mxu0
        %v817 = vadd.f32 %v729, %v816
        %818 = vmatprep.mubr.f32.mxu0 %v373
        %819 = vmatmul.mubr.f32.gmra.mrb[0].mxu0 %v372
        %v820 = vpop.f32.mrb[0].mxu0
        %v821 = vadd.f32 %v725, %v820
        %v822 = vpop.f32.mrb[0].mxu0
        %v823 = vadd.f32 %v729, %v822
        %824 = vmatprep.mubr.f32.mxu0 %v377
        %825 = vmatmul.mubr.f32.gmra.mrb[0].mxu0 %v376
        %v826 = vpop.f32.mrb[0].mxu0
        %v827 = vadd.f32 %v725, %v826
        %v828 = vpop.f32.mrb[0].mxu0
        %v829 = vadd.f32 %v729, %v828
        %830 = vmatprep.mubr.f32.mxu0 %v381
        %831 = vmatmul.mubr.f32.gmra.mrb[0].mxu0 %v380
        %v832 = vpop.f32.mrb[0].mxu0
        %v833 = vadd.f32 %v725, %v832
        %v834 = vpop.f32.mrb[0].mxu0
        %v835 = vadd.f32 %v729, %v834
        %836 = vmatprep.mubr.f32.mxu0 %v385
        %837 = vmatmul.mubr.f32.gmra.mrb[0].mxu0 %v384
        %v838 = vpop.f32.mrb[0].mxu0
        %v839 = vadd.f32 %v725, %v838
        %v840 = vpop.f32.mrb[0].mxu0
        %v841 = vadd.f32 %v729, %v840
        %842 = vmatprep.mubr.f32.mxu0 %v389
        %843 = vmatmul.mubr.f32.gmra.mrb[0].mxu0 %v388
        %v844 = vpop.f32.mrb[0].mxu0
        %v845 = vadd.f32 %v725, %v844
        %v846 = vpop.f32.mrb[0].mxu0
        %v847 = vadd.f32 %v729, %v846
        %848 = vmatprep.mubr.f32.mxu0 %v393
        %849 = vmatmul.mubr.f32.gmra.mrb[0].mxu0 %v392
        %v850 = vpop.f32.mrb[0].mxu0
        %v851 = vadd.f32 %v725, %v850
        %v852 = vpop.f32.mrb[0].mxu0
        %v853 = vadd.f32 %v729, %v852
        %854 = vmatprep.mubr.f32.mxu0 %v397
        %855 = vmatmul.mubr.f32.gmra.mrb[0].mxu0 %v396
        %v856 = vpop.f32.mrb[0].mxu0
        %v857 = vadd.f32 %v725, %v856
        %v858 = vpop.f32.mrb[0].mxu0
        %v859 = vadd.f32 %v729, %v858
        %860 = vmatprep.mubr.f32.mxu0 %v401
        %861 = vmatmul.mubr.f32.gmra.mrb[0].mxu0 %v400
        %v862 = vpop.f32.mrb[0].mxu0
        %v863 = vadd.f32 %v725, %v862
        %v864 = vpop.f32.mrb[0].mxu0
        %v865 = vadd.f32 %v729, %v864
        %866 = vmatprep.mubr.f32.mxu0 %v405
        %867 = vmatmul.mubr.f32.gmra.mrb[0].mxu0 %v404
        %v868 = vpop.f32.mrb[0].mxu0
        %v869 = vadd.f32 %v725, %v868
        %v870 = vpop.f32.mrb[0].mxu0
        %v871 = vadd.f32 %v729, %v870
        %872 = vmatprep.mubr.f32.mxu0 %v409
        %873 = vmatmul.mubr.f32.gmra.mrb[0].mxu0 %v408
        %v874 = vpop.f32.mrb[0].mxu0
        %v875 = vadd.f32 %v725, %v874
        %v876 = vpop.f32.mrb[0].mxu0
        %v877 = vadd.f32 %v729, %v876
        %878 = vmatprep.mubr.f32.mxu0 %v413
        %879 = vmatmul.mubr.f32.gmra.mrb[0].mxu0 %v412
        %v880 = vpop.f32.mrb[0].mxu0
        %v881 = vadd.f32 %v725, %v880
        %v882 = vpop.f32.mrb[0].mxu0
        %v883 = vadd.f32 %v729, %v882
        %884 = vmatprep.mubr.f32.mxu0 %v417
        %885 = vmatmul.mubr.f32.gmra.mrb[0].mxu0 %v416
        %v886 = vpop.f32.mrb[0].mxu0
        %v887 = vadd.f32 %v725, %v886
        %v888 = vpop.f32.mrb[0].mxu0
        %v889 = vadd.f32 %v729, %v888
        %890 = vmatprep.mubr.f32.mxu0 %v421
        %891 = vmatmul.mubr.f32.gmra.mrb[0].mxu0 %v420
        %v892 = vpop.f32.mrb[0].mxu0
        %v893 = vadd.f32 %v725, %v892
        %v894 = vpop.f32.mrb[0].mxu0
        %v895 = vadd.f32 %v729, %v894
        %896 = vmatprep.mubr.f32.mxu0 %v425
        %897 = vmatmul.mubr.f32.gmra.mrb[0].mxu0 %v424
        %v898 = vpop.f32.mrb[0].mxu0
        %v899 = vadd.f32 %v725, %v898
        %v900 = vpop.f32.mrb[0].mxu0
        %v901 = vadd.f32 %v729, %v900
        %902 = vmatprep.mubr.f32.mxu0 %v429
        %903 = vmatmul.mubr.f32.gmra.mrb[0].mxu0 %v428
        %v904 = vpop.f32.mrb[0].mxu0
        %v905 = vadd.f32 %v725, %v904
        %v906 = vpop.f32.mrb[0].mxu0
        %v907 = vadd.f32 %v729, %v906
        %908 = vmatprep.mubr.f32.mxu0 %v433
        %909 = vmatmul.mubr.f32.gmra.mrb[0].mxu0 %v432
        %v910 = vpop.f32.mrb[0].mxu0
        %v911 = vadd.f32 %v725, %v910
        %v912 = vpop.f32.mrb[0].mxu0
        %v913 = vadd.f32 %v729, %v912
        %914 = vmatprep.mubr.f32.mxu0 %v437
        %915 = vmatmul.mubr.f32.gmra.mrb[0].mxu0 %v436
        %v916 = vpop.f32.mrb[0].mxu0
        %v917 = vadd.f32 %v725, %v916
        %v918 = vpop.f32.mrb[0].mxu0
        %v919 = vadd.f32 %v729, %v918
        %920 = vmatprep.mubr.f32.mxu0 %v441
        %921 = vmatmul.mubr.f32.gmra.mrb[0].mxu0 %v440
        %v922 = vpop.f32.mrb[0].mxu0
        %v923 = vadd.f32 %v725, %v922
        %v924 = vpop.f32.mrb[0].mxu0
        %v925 = vadd.f32 %v729, %v924
        %926 = vmatprep.mubr.f32.mxu0 %v445
        %927 = vmatmul.mubr.f32.gmra.mrb[0].mxu0 %v444
        %v928 = vpop.f32.mrb[0].mxu0
        %v929 = vadd.f32 %v725, %v928
        %v930 = vpop.f32.mrb[0].mxu0
        %v931 = vadd.f32 %v729, %v930
        %932 = vmatprep.mubr.f32.mxu0 %v449
        %933 = vmatmul.mubr.f32.gmra.mrb[0].mxu0 %v448
        %v934 = vpop.f32.mrb[0].mxu0
        %v935 = vadd.f32 %v725, %v934
        %v936 = vpop.f32.mrb[0].mxu0
        %v937 = vadd.f32 %v729, %v936
        %938 = vmatprep.mubr.f32.mxu0 %v453
        %939 = vmatmul.mubr.f32.gmra.mrb[0].mxu0 %v452
        %v940 = vpop.f32.mrb[0].mxu0
        %v941 = vadd.f32 %v725, %v940
        %v942 = vpop.f32.mrb[0].mxu0
        %v943 = vadd.f32 %v729, %v942
        %944 = vmatprep.mubr.f32.mxu0 %v457
        %945 = vmatmul.mubr.f32.gmra.mrb[0].mxu0 %v456
        %v946 = vpop.f32.mrb[0].mxu0
        %v947 = vadd.f32 %v725, %v946
        %v948 = vpop.f32.mrb[0].mxu0
        %v949 = vadd.f32 %v729, %v948
        %950 = vmatprep.mubr.f32.mxu0 %v461
        %951 = vmatmul.mubr.f32.gmra.mrb[0].mxu0 %v460
        %v952 = vpop.f32.mrb[0].mxu0
        %v953 = vadd.f32 %v725, %v952
        %v954 = vpop.f32.mrb[0].mxu0
        %v955 = vadd.f32 %v729, %v954
        %956 = vdwg.mxu0
        %957 = vmatprep.subr.mxu0 %v593
        %958 = vmatpush1.msra.mxu0 %v592
        %959 = vmatprep.subr.mxu0 %v597
        %960 = vmatpush1.msra.mxu0 %v596
        %961 = vmatprep.subr.mxu0 %v601
        %962 = vmatpush1.msra.mxu0 %v600
        %963 = vmatprep.subr.mxu0 %v605
        %964 = vmatpush1.msra.mxu0 %v604
        %965 = vmatprep.subr.mxu0 %v609
        %966 = vmatpush1.msra.mxu0 %v608
        %967 = vmatprep.subr.mxu0 %v613
        %968 = vmatpush1.msra.mxu0 %v612
        %969 = vmatprep.subr.mxu0 %v617
        %970 = vmatpush1.msra.mxu0 %v616
        %971 = vmatprep.subr.mxu0 %v621
        %972 = vmatpush1.msra.mxu0 %v620
        %973 = vmatprep.subr.mxu0 %v625
        %974 = vmatpush1.msra.mxu0 %v624
        %975 = vmatprep.subr.mxu0 %v629
        %976 = vmatpush1.msra.mxu0 %v628
        %977 = vmatprep.subr.mxu0 %v633
        %978 = vmatpush1.msra.mxu0 %v632
        %979 = vmatprep.subr.mxu0 %v637
        %980 = vmatpush1.msra.mxu0 %v636
        %981 = vmatprep.subr.mxu0 %v641
        %982 = vmatpush1.msra.mxu0 %v640
        %983 = vmatprep.subr.mxu0 %v645
        %984 = vmatpush1.msra.mxu0 %v644
        %985 = vmatprep.subr.mxu0 %v649
        %986 = vmatpush1.msra.mxu0 %v648
        %987 = vmatprep.subr.mxu0 %v653
        %988 = vmatpush1.msra.mxu0 %v652
        %989 = vmatprep.subr.mxu0 %v657
        %990 = vmatpush1.msra.mxu0 %v656
        %991 = vmatprep.subr.mxu0 %v661
        %992 = vmatpush1.msra.mxu0 %v660
        %993 = vmatprep.subr.mxu0 %v665
        %994 = vmatpush1.msra.mxu0 %v664
        %995 = vmatprep.subr.mxu0 %v669
        %996 = vmatpush1.msra.mxu0 %v668
        %997 = vmatprep.subr.mxu0 %v673
        %998 = vmatpush1.msra.mxu0 %v672
        %999 = vmatprep.subr.mxu0 %v677
        %1000 = vmatpush1.msra.mxu0 %v676
        %1001 = vmatprep.subr.mxu0 %v681
        %1002 = vmatpush1.msra.mxu0 %v680
        %1003 = vmatprep.subr.mxu0 %v685
        %1004 = vmatpush1.msra.mxu0 %v684
        %1005 = vmatprep.subr.mxu0 %v689
        %1006 = vmatpush1.msra.mxu0 %v688
        %1007 = vmatprep.subr.mxu0 %v693
        %1008 = vmatpush1.msra.mxu0 %v692
        %1009 = vmatprep.subr.mxu0 %v697
        %1010 = vmatpush1.msra.mxu0 %v696
        %1011 = vmatprep.subr.mxu0 %v701
        %1012 = vmatpush1.msra.mxu0 %v700
        %1013 = vmatprep.subr.mxu0 %v705
        %1014 = vmatpush1.msra.mxu0 %v704
        %1015 = vmatprep.subr.mxu0 %v709
        %1016 = vmatpush1.msra.mxu0 %v708
        %1017 = vmatprep.subr.mxu0 %v713
        %1018 = vmatpush1.msra.mxu0 %v712
        %1019 = vmatprep.subr.mxu0 %v717
        %1020 = vmatpush1.msra.mxu0 %v716
        %1021 = vmatprep.mubr.f32.mxu0 %v367
        %1022 = vmatmul.mubr.f32.gmra.mrb[0].mxu0 %v366
        %v1023 = vpop.f32.mrb[0].mxu0
        %v1024 = vadd.f32 %v809, %v1023
        %v1025 = vpop.f32.mrb[0].mxu0
        %v1026 = vadd.f32 %v811, %v1025
        %1027 = vmatprep.mubr.f32.mxu0 %v371
        %1028 = vmatmul.mubr.f32.gmra.mrb[0].mxu0 %v370
        %v1029 = vpop.f32.mrb[0].mxu0
        %v1030 = vadd.f32 %v815, %v1029
        %v1031 = vpop.f32.mrb[0].mxu0
        %v1032 = vadd.f32 %v817, %v1031
        %1033 = vmatprep.mubr.f32.mxu0 %v375
        %1034 = vmatmul.mubr.f32.gmra.mrb[0].mxu0 %v374
        %v1035 = vpop.f32.mrb[0].mxu0
        %v1036 = vadd.f32 %v821, %v1035
        %v1037 = vpop.f32.mrb[0].mxu0
        %v1038 = vadd.f32 %v823, %v1037
        %1039 = vmatprep.mubr.f32.mxu0 %v379
        %1040 = vmatmul.mubr.f32.gmra.mrb[0].mxu0 %v378
        %v1041 = vpop.f32.mrb[0].mxu0
        %v1042 = vadd.f32 %v827, %v1041
        %v1043 = vpop.f32.mrb[0].mxu0
        %v1044 = vadd.f32 %v829, %v1043
        %1045 = vmatprep.mubr.f32.mxu0 %v383
        %1046 = vmatmul.mubr.f32.gmra.mrb[0].mxu0 %v382
        %v1047 = vpop.f32.mrb[0].mxu0
        %v1048 = vadd.f32 %v833, %v1047
        %v1049 = vpop.f32.mrb[0].mxu0
        %v1050 = vadd.f32 %v835, %v1049
        %1051 = vmatprep.mubr.f32.mxu0 %v387
        %1052 = vmatmul.mubr.f32.gmra.mrb[0].mxu0 %v386
        %v1053 = vpop.f32.mrb[0].mxu0
        %v1054 = vadd.f32 %v839, %v1053
        %v1055 = vpop.f32.mrb[0].mxu0
        %v1056 = vadd.f32 %v841, %v1055
        %1057 = vmatprep.mubr.f32.mxu0 %v391
        %1058 = vmatmul.mubr.f32.gmra.mrb[0].mxu0 %v390
        %v1059 = vpop.f32.mrb[0].mxu0
        %v1060 = vadd.f32 %v845, %v1059
        %v1061 = vpop.f32.mrb[0].mxu0
        %v1062 = vadd.f32 %v847, %v1061
        %1063 = vmatprep.mubr.f32.mxu0 %v395
        %1064 = vmatmul.mubr.f32.gmra.mrb[0].mxu0 %v394
        %v1065 = vpop.f32.mrb[0].mxu0
        %v1066 = vadd.f32 %v851, %v1065
        %v1067 = vpop.f32.mrb[0].mxu0
        %v1068 = vadd.f32 %v853, %v1067
        %1069 = vmatprep.mubr.f32.mxu0 %v399
        %1070 = vmatmul.mubr.f32.gmra.mrb[0].mxu0 %v398
        %v1071 = vpop.f32.mrb[0].mxu0
        %v1072 = vadd.f32 %v857, %v1071
        %v1073 = vpop.f32.mrb[0].mxu0
        %v1074 = vadd.f32 %v859, %v1073
        %1075 = vmatprep.mubr.f32.mxu0 %v403
        %1076 = vmatmul.mubr.f32.gmra.mrb[0].mxu0 %v402
        %v1077 = vpop.f32.mrb[0].mxu0
        %v1078 = vadd.f32 %v863, %v1077
        %v1079 = vpop.f32.mrb[0].mxu0
        %v1080 = vadd.f32 %v865, %v1079
        %1081 = vmatprep.mubr.f32.mxu0 %v407
        %1082 = vmatmul.mubr.f32.gmra.mrb[0].mxu0 %v406
        %v1083 = vpop.f32.mrb[0].mxu0
        %v1084 = vadd.f32 %v869, %v1083
        %v1085 = vpop.f32.mrb[0].mxu0
        %v1086 = vadd.f32 %v871, %v1085
        %1087 = vmatprep.mubr.f32.mxu0 %v411
        %1088 = vmatmul.mubr.f32.gmra.mrb[0].mxu0 %v410
        %v1089 = vpop.f32.mrb[0].mxu0
        %v1090 = vadd.f32 %v875, %v1089
        %v1091 = vpop.f32.mrb[0].mxu0
        %v1092 = vadd.f32 %v877, %v1091
        %1093 = vmatprep.mubr.f32.mxu0 %v415
        %1094 = vmatmul.mubr.f32.gmra.mrb[0].mxu0 %v414
        %v1095 = vpop.f32.mrb[0].mxu0
        %v1096 = vadd.f32 %v881, %v1095
        %v1097 = vpop.f32.mrb[0].mxu0
        %v1098 = vadd.f32 %v883, %v1097
        %1099 = vmatprep.mubr.f32.mxu0 %v419
        %1100 = vmatmul.mubr.f32.gmra.mrb[0].mxu0 %v418
        %v1101 = vpop.f32.mrb[0].mxu0
        %v1102 = vadd.f32 %v887, %v1101
        %v1103 = vpop.f32.mrb[0].mxu0
        %v1104 = vadd.f32 %v889, %v1103
        %1105 = vmatprep.mubr.f32.mxu0 %v423
        %1106 = vmatmul.mubr.f32.gmra.mrb[0].mxu0 %v422
        %v1107 = vpop.f32.mrb[0].mxu0
        %v1108 = vadd.f32 %v893, %v1107
        %v1109 = vpop.f32.mrb[0].mxu0
        %v1110 = vadd.f32 %v895, %v1109
        %1111 = vmatprep.mubr.f32.mxu0 %v427
        %1112 = vmatmul.mubr.f32.gmra.mrb[0].mxu0 %v426
        %v1113 = vpop.f32.mrb[0].mxu0
        %v1114 = vadd.f32 %v899, %v1113
        %v1115 = vpop.f32.mrb[0].mxu0
        %v1116 = vadd.f32 %v901, %v1115
        %1117 = vmatprep.mubr.f32.mxu0 %v431
        %1118 = vmatmul.mubr.f32.gmra.mrb[0].mxu0 %v430
        %v1119 = vpop.f32.mrb[0].mxu0
        %v1120 = vadd.f32 %v905, %v1119
        %v1121 = vpop.f32.mrb[0].mxu0
        %v1122 = vadd.f32 %v907, %v1121
        %1123 = vmatprep.mubr.f32.mxu0 %v435
        %1124 = vmatmul.mubr.f32.gmra.mrb[0].mxu0 %v434
        %v1125 = vpop.f32.mrb[0].mxu0
        %v1126 = vadd.f32 %v911, %v1125
        %v1127 = vpop.f32.mrb[0].mxu0
        %v1128 = vadd.f32 %v913, %v1127
        %1129 = vmatprep.mubr.f32.mxu0 %v439
        %1130 = vmatmul.mubr.f32.gmra.mrb[0].mxu0 %v438
        %v1131 = vpop.f32.mrb[0].mxu0
        %v1132 = vadd.f32 %v917, %v1131
        %v1133 = vpop.f32.mrb[0].mxu0
        %v1134 = vadd.f32 %v919, %v1133
        %1135 = vmatprep.mubr.f32.mxu0 %v443
        %1136 = vmatmul.mubr.f32.gmra.mrb[0].mxu0 %v442
        %v1137 = vpop.f32.mrb[0].mxu0
        %v1138 = vadd.f32 %v923, %v1137
        %v1139 = vpop.f32.mrb[0].mxu0
        %v1140 = vadd.f32 %v925, %v1139
        %1141 = vmatprep.mubr.f32.mxu0 %v447
        %1142 = vmatmul.mubr.f32.gmra.mrb[0].mxu0 %v446
        %v1143 = vpop.f32.mrb[0].mxu0
        %v1144 = vadd.f32 %v929, %v1143
        %v1145 = vpop.f32.mrb[0].mxu0
        %v1146 = vadd.f32 %v931, %v1145
        %1147 = vmatprep.mubr.f32.mxu0 %v451
        %1148 = vmatmul.mubr.f32.gmra.mrb[0].mxu0 %v450
        %v1149 = vpop.f32.mrb[0].mxu0
        %v1150 = vadd.f32 %v935, %v1149
        %v1151 = vpop.f32.mrb[0].mxu0
        %v1152 = vadd.f32 %v937, %v1151
        %1153 = vmatprep.mubr.f32.mxu0 %v455
        %1154 = vmatmul.mubr.f32.gmra.mrb[0].mxu0 %v454
        %v1155 = vpop.f32.mrb[0].mxu0
        %v1156 = vadd.f32 %v941, %v1155
        %v1157 = vpop.f32.mrb[0].mxu0
        %v1158 = vadd.f32 %v943, %v1157
        %1159 = vmatprep.mubr.f32.mxu0 %v459
        %1160 = vmatmul.mubr.f32.gmra.mrb[0].mxu0 %v458
        %v1161 = vpop.f32.mrb[0].mxu0
        %v1162 = vadd.f32 %v947, %v1161
        %v1163 = vpop.f32.mrb[0].mxu0
        %v1164 = vadd.f32 %v949, %v1163
        %1165 = vmatprep.mubr.f32.mxu0 %v463
        %1166 = vmatmul.mubr.f32.gmra.mrb[0].mxu0 %v462
        %v1167 = vpop.f32.mrb[0].mxu0
        %v1168 = vadd.f32 %v953, %v1167
        %v1169 = vpop.f32.mrb[0].mxu0
        %v1170 = vadd.f32 %v955, %v1169
        %1171 = vdwg.mxu0
        %1172 = vmatprep.subr.mxu0 %v467
        %1173 = vmatpush1.msra.mxu0 %v466
        %1174 = vmatprep.subr.mxu0 %v471
        %1175 = vmatpush1.msra.mxu0 %v470
        %1176 = vmatprep.subr.mxu0 %v475
        %1177 = vmatpush1.msra.mxu0 %v474
        %1178 = vmatprep.subr.mxu0 %v479
        %1179 = vmatpush1.msra.mxu0 %v478
        %1180 = vmatprep.subr.mxu0 %v483
        %1181 = vmatpush1.msra.mxu0 %v482
        %1182 = vmatprep.subr.mxu0 %v487
        %1183 = vmatpush1.msra.mxu0 %v486
        %1184 = vmatprep.subr.mxu0 %v491
        %1185 = vmatpush1.msra.mxu0 %v490
        %1186 = vmatprep.subr.mxu0 %v495
        %1187 = vmatpush1.msra.mxu0 %v494
        %1188 = vmatprep.subr.mxu0 %v499
        %1189 = vmatpush1.msra.mxu0 %v498
        %1190 = vmatprep.subr.mxu0 %v503
        %1191 = vmatpush1.msra.mxu0 %v502
        %1192 = vmatprep.subr.mxu0 %v507
        %1193 = vmatpush1.msra.mxu0 %v506
        %1194 = vmatprep.subr.mxu0 %v511
        %1195 = vmatpush1.msra.mxu0 %v510
        %1196 = vmatprep.subr.mxu0 %v515
        %1197 = vmatpush1.msra.mxu0 %v514
        %1198 = vmatprep.subr.mxu0 %v519
        %1199 = vmatpush1.msra.mxu0 %v518
        %1200 = vmatprep.subr.mxu0 %v523
        %1201 = vmatpush1.msra.mxu0 %v522
        %1202 = vmatprep.subr.mxu0 %v527
        %1203 = vmatpush1.msra.mxu0 %v526
        %1204 = vmatprep.subr.mxu0 %v531
        %1205 = vmatpush1.msra.mxu0 %v530
        %1206 = vmatprep.subr.mxu0 %v535
        %1207 = vmatpush1.msra.mxu0 %v534
        %1208 = vmatprep.subr.mxu0 %v539
        %1209 = vmatpush1.msra.mxu0 %v538
        %1210 = vmatprep.subr.mxu0 %v543
        %1211 = vmatpush1.msra.mxu0 %v542
        %1212 = vmatprep.subr.mxu0 %v547
        %1213 = vmatpush1.msra.mxu0 %v546
        %1214 = vmatprep.subr.mxu0 %v551
        %1215 = vmatpush1.msra.mxu0 %v550
        %1216 = vmatprep.subr.mxu0 %v555
        %1217 = vmatpush1.msra.mxu0 %v554
        %1218 = vmatprep.subr.mxu0 %v559
        %1219 = vmatpush1.msra.mxu0 %v558
        %1220 = vmatprep.subr.mxu0 %v563
        %1221 = vmatpush1.msra.mxu0 %v562
        %1222 = vmatprep.subr.mxu0 %v567
        %1223 = vmatpush1.msra.mxu0 %v566
        %1224 = vmatprep.subr.mxu0 %v571
        %1225 = vmatpush1.msra.mxu0 %v570
        %1226 = vmatprep.subr.mxu0 %v575
        %1227 = vmatpush1.msra.mxu0 %v574
        %1228 = vmatprep.subr.mxu0 %v579
        %1229 = vmatpush1.msra.mxu0 %v578
        %1230 = vmatprep.subr.mxu0 %v583
        %1231 = vmatpush1.msra.mxu0 %v582
        %1232 = vmatprep.subr.mxu0 %v587
        %1233 = vmatpush1.msra.mxu0 %v586
        %1234 = vmatprep.subr.mxu0 %v591
        %1235 = vmatpush1.msra.mxu0 %v590
        %1236 = vmatprep.mubr.f32.mxu0 %v365
        %1237 = vmatmul.mubr.f32.gmra.mrb[0].mxu0 %v364
        %v1238 = vpop.f32.mrb[0].mxu0
        %v1239 = vadd.f32 %v733, %v1238
        %v1240 = vpop.f32.mrb[0].mxu0
        %v1241 = vadd.f32 %v737, %v1240
        %1242 = vmatprep.mubr.f32.mxu0 %v369
        %1243 = vmatmul.mubr.f32.gmra.mrb[0].mxu0 %v368
        %v1244 = vpop.f32.mrb[0].mxu0
        %v1245 = vadd.f32 %v733, %v1244
        %v1246 = vpop.f32.mrb[0].mxu0
        %v1247 = vadd.f32 %v737, %v1246
        %1248 = vmatprep.mubr.f32.mxu0 %v373
        %1249 = vmatmul.mubr.f32.gmra.mrb[0].mxu0 %v372
        %v1250 = vpop.f32.mrb[0].mxu0
        %v1251 = vadd.f32 %v733, %v1250
        %v1252 = vpop.f32.mrb[0].mxu0
        %v1253 = vadd.f32 %v737, %v1252
        %1254 = vmatprep.mubr.f32.mxu0 %v377
        %1255 = vmatmul.mubr.f32.gmra.mrb[0].mxu0 %v376
        %v1256 = vpop.f32.mrb[0].mxu0
        %v1257 = vadd.f32 %v733, %v1256
        %v1258 = vpop.f32.mrb[0].mxu0
        %v1259 = vadd.f32 %v737, %v1258
        %1260 = vmatprep.mubr.f32.mxu0 %v381
        %1261 = vmatmul.mubr.f32.gmra.mrb[0].mxu0 %v380
        %v1262 = vpop.f32.mrb[0].mxu0
        %v1263 = vadd.f32 %v733, %v1262
        %v1264 = vpop.f32.mrb[0].mxu0
        %v1265 = vadd.f32 %v737, %v1264
        %1266 = vmatprep.mubr.f32.mxu0 %v385
        %1267 = vmatmul.mubr.f32.gmra.mrb[0].mxu0 %v384
        %v1268 = vpop.f32.mrb[0].mxu0
        %v1269 = vadd.f32 %v733, %v1268
        %v1270 = vpop.f32.mrb[0].mxu0
        %v1271 = vadd.f32 %v737, %v1270
        %1272 = vmatprep.mubr.f32.mxu0 %v389
        %1273 = vmatmul.mubr.f32.gmra.mrb[0].mxu0 %v388
        %v1274 = vpop.f32.mrb[0].mxu0
        %v1275 = vadd.f32 %v733, %v1274
        %v1276 = vpop.f32.mrb[0].mxu0
        %v1277 = vadd.f32 %v737, %v1276
        %1278 = vmatprep.mubr.f32.mxu0 %v393
        %1279 = vmatmul.mubr.f32.gmra.mrb[0].mxu0 %v392
        %v1280 = vpop.f32.mrb[0].mxu0
        %v1281 = vadd.f32 %v733, %v1280
        %v1282 = vpop.f32.mrb[0].mxu0
        %v1283 = vadd.f32 %v737, %v1282
        %1284 = vmatprep.mubr.f32.mxu0 %v397
        %1285 = vmatmul.mubr.f32.gmra.mrb[0].mxu0 %v396
        %v1286 = vpop.f32.mrb[0].mxu0
        %v1287 = vadd.f32 %v733, %v1286
        %v1288 = vpop.f32.mrb[0].mxu0
        %v1289 = vadd.f32 %v737, %v1288
        %1290 = vmatprep.mubr.f32.mxu0 %v401
        %1291 = vmatmul.mubr.f32.gmra.mrb[0].mxu0 %v400
        %v1292 = vpop.f32.mrb[0].mxu0
        %v1293 = vadd.f32 %v733, %v1292
        %v1294 = vpop.f32.mrb[0].mxu0
        %v1295 = vadd.f32 %v737, %v1294
        %1296 = vmatprep.mubr.f32.mxu0 %v405
        %1297 = vmatmul.mubr.f32.gmra.mrb[0].mxu0 %v404
        %v1298 = vpop.f32.mrb[0].mxu0
        %v1299 = vadd.f32 %v733, %v1298
        %v1300 = vpop.f32.mrb[0].mxu0
        %v1301 = vadd.f32 %v737, %v1300
        %1302 = vmatprep.mubr.f32.mxu0 %v409
        %1303 = vmatmul.mubr.f32.gmra.mrb[0].mxu0 %v408
        %v1304 = vpop.f32.mrb[0].mxu0
        %v1305 = vadd.f32 %v733, %v1304
        %v1306 = vpop.f32.mrb[0].mxu0
        %v1307 = vadd.f32 %v737, %v1306
        %1308 = vmatprep.mubr.f32.mxu0 %v413
        %1309 = vmatmul.mubr.f32.gmra.mrb[0].mxu0 %v412
        %v1310 = vpop.f32.mrb[0].mxu0
        %v1311 = vadd.f32 %v733, %v1310
        %v1312 = vpop.f32.mrb[0].mxu0
        %v1313 = vadd.f32 %v737, %v1312
        %1314 = vmatprep.mubr.f32.mxu0 %v417
        %1315 = vmatmul.mubr.f32.gmra.mrb[0].mxu0 %v416
        %v1316 = vpop.f32.mrb[0].mxu0
        %v1317 = vadd.f32 %v733, %v1316
        %v1318 = vpop.f32.mrb[0].mxu0
        %v1319 = vadd.f32 %v737, %v1318
        %1320 = vmatprep.mubr.f32.mxu0 %v421
        %1321 = vmatmul.mubr.f32.gmra.mrb[0].mxu0 %v420
        %v1322 = vpop.f32.mrb[0].mxu0
        %v1323 = vadd.f32 %v733, %v1322
        %v1324 = vpop.f32.mrb[0].mxu0
        %v1325 = vadd.f32 %v737, %v1324
        %1326 = vmatprep.mubr.f32.mxu0 %v425
        %1327 = vmatmul.mubr.f32.gmra.mrb[0].mxu0 %v424
        %v1328 = vpop.f32.mrb[0].mxu0
        %v1329 = vadd.f32 %v733, %v1328
        %v1330 = vpop.f32.mrb[0].mxu0
        %v1331 = vadd.f32 %v737, %v1330
        %1332 = vmatprep.mubr.f32.mxu0 %v429
        %1333 = vmatmul.mubr.f32.gmra.mrb[0].mxu0 %v428
        %v1334 = vpop.f32.mrb[0].mxu0
        %v1335 = vadd.f32 %v733, %v1334
        %v1336 = vpop.f32.mrb[0].mxu0
        %v1337 = vadd.f32 %v737, %v1336
        %1338 = vmatprep.mubr.f32.mxu0 %v433
        %1339 = vmatmul.mubr.f32.gmra.mrb[0].mxu0 %v432
        %v1340 = vpop.f32.mrb[0].mxu0
        %v1341 = vadd.f32 %v733, %v1340
        %v1342 = vpop.f32.mrb[0].mxu0
        %v1343 = vadd.f32 %v737, %v1342
        %1344 = vmatprep.mubr.f32.mxu0 %v437
        %1345 = vmatmul.mubr.f32.gmra.mrb[0].mxu0 %v436
        %v1346 = vpop.f32.mrb[0].mxu0
        %v1347 = vadd.f32 %v733, %v1346
        %v1348 = vpop.f32.mrb[0].mxu0
        %v1349 = vadd.f32 %v737, %v1348
        %1350 = vmatprep.mubr.f32.mxu0 %v441
        %1351 = vmatmul.mubr.f32.gmra.mrb[0].mxu0 %v440
        %v1352 = vpop.f32.mrb[0].mxu0
        %v1353 = vadd.f32 %v733, %v1352
        %v1354 = vpop.f32.mrb[0].mxu0
        %v1355 = vadd.f32 %v737, %v1354
        %1356 = vmatprep.mubr.f32.mxu0 %v445
        %1357 = vmatmul.mubr.f32.gmra.mrb[0].mxu0 %v444
        %v1358 = vpop.f32.mrb[0].mxu0
        %v1359 = vadd.f32 %v733, %v1358
        %v1360 = vpop.f32.mrb[0].mxu0
        %v1361 = vadd.f32 %v737, %v1360
        %1362 = vmatprep.mubr.f32.mxu0 %v449
        %1363 = vmatmul.mubr.f32.gmra.mrb[0].mxu0 %v448
        %v1364 = vpop.f32.mrb[0].mxu0
        %v1365 = vadd.f32 %v733, %v1364
        %v1366 = vpop.f32.mrb[0].mxu0
        %v1367 = vadd.f32 %v737, %v1366
        %1368 = vmatprep.mubr.f32.mxu0 %v453
        %1369 = vmatmul.mubr.f32.gmra.mrb[0].mxu0 %v452
        %v1370 = vpop.f32.mrb[0].mxu0
        %v1371 = vadd.f32 %v733, %v1370
        %v1372 = vpop.f32.mrb[0].mxu0
        %v1373 = vadd.f32 %v737, %v1372
        %1374 = vmatprep.mubr.f32.mxu0 %v457
        %1375 = vmatmul.mubr.f32.gmra.mrb[0].mxu0 %v456
        %v1376 = vpop.f32.mrb[0].mxu0
        %v1377 = vadd.f32 %v733, %v1376
        %v1378 = vpop.f32.mrb[0].mxu0
        %v1379 = vadd.f32 %v737, %v1378
        %1380 = vmatprep.mubr.f32.mxu0 %v461
        %1381 = vmatmul.mubr.f32.gmra.mrb[0].mxu0 %v460
        %v1382 = vpop.f32.mrb[0].mxu0
        %v1383 = vadd.f32 %v733, %v1382
        %v1384 = vpop.f32.mrb[0].mxu0
        %v1385 = vadd.f32 %v737, %v1384
        %1386 = vdwg.mxu0
        %1387 = vmatprep.subr.mxu0 %v595
        %1388 = vmatpush1.msra.mxu0 %v594
        %1389 = vmatprep.subr.mxu0 %v599
        %1390 = vmatpush1.msra.mxu0 %v598
        %1391 = vmatprep.subr.mxu0 %v603
        %1392 = vmatpush1.msra.mxu0 %v602
        %1393 = vmatprep.subr.mxu0 %v607
        %1394 = vmatpush1.msra.mxu0 %v606
        %1395 = vmatprep.subr.mxu0 %v611
        %1396 = vmatpush1.msra.mxu0 %v610
        %1397 = vmatprep.subr.mxu0 %v615
        %1398 = vmatpush1.msra.mxu0 %v614
        %1399 = vmatprep.subr.mxu0 %v619
        %1400 = vmatpush1.msra.mxu0 %v618
        %1401 = vmatprep.subr.mxu0 %v623
        %1402 = vmatpush1.msra.mxu0 %v622
        %1403 = vmatprep.subr.mxu0 %v627
        %1404 = vmatpush1.msra.mxu0 %v626
        %1405 = vmatprep.subr.mxu0 %v631
        %1406 = vmatpush1.msra.mxu0 %v630
        %1407 = vmatprep.subr.mxu0 %v635
        %1408 = vmatpush1.msra.mxu0 %v634
        %1409 = vmatprep.subr.mxu0 %v639
        %1410 = vmatpush1.msra.mxu0 %v638
        %1411 = vmatprep.subr.mxu0 %v643
        %1412 = vmatpush1.msra.mxu0 %v642
        %1413 = vmatprep.subr.mxu0 %v647
        %1414 = vmatpush1.msra.mxu0 %v646
        %1415 = vmatprep.subr.mxu0 %v651
        %1416 = vmatpush1.msra.mxu0 %v650
        %1417 = vmatprep.subr.mxu0 %v655
        %1418 = vmatpush1.msra.mxu0 %v654
        %1419 = vmatprep.subr.mxu0 %v659
        %1420 = vmatpush1.msra.mxu0 %v658
        %1421 = vmatprep.subr.mxu0 %v663
        %1422 = vmatpush1.msra.mxu0 %v662
        %1423 = vmatprep.subr.mxu0 %v667
        %1424 = vmatpush1.msra.mxu0 %v666
        %1425 = vmatprep.subr.mxu0 %v671
        %1426 = vmatpush1.msra.mxu0 %v670
        %1427 = vmatprep.subr.mxu0 %v675
        %1428 = vmatpush1.msra.mxu0 %v674
        %1429 = vmatprep.subr.mxu0 %v679
        %1430 = vmatpush1.msra.mxu0 %v678
        %1431 = vmatprep.subr.mxu0 %v683
        %1432 = vmatpush1.msra.mxu0 %v682
        %1433 = vmatprep.subr.mxu0 %v687
        %1434 = vmatpush1.msra.mxu0 %v686
        %1435 = vmatprep.subr.mxu0 %v691
        %1436 = vmatpush1.msra.mxu0 %v690
        %1437 = vmatprep.subr.mxu0 %v695
        %1438 = vmatpush1.msra.mxu0 %v694
        %1439 = vmatprep.subr.mxu0 %v699
        %1440 = vmatpush1.msra.mxu0 %v698
        %1441 = vmatprep.subr.mxu0 %v703
        %1442 = vmatpush1.msra.mxu0 %v702
        %1443 = vmatprep.subr.mxu0 %v707
        %1444 = vmatpush1.msra.mxu0 %v706
        %1445 = vmatprep.subr.mxu0 %v711
        %1446 = vmatpush1.msra.mxu0 %v710
        %1447 = vmatprep.subr.mxu0 %v715
        %1448 = vmatpush1.msra.mxu0 %v714
        %1449 = vmatprep.subr.mxu0 %v719
        %1450 = vmatpush1.msra.mxu0 %v718
        %1451 = vmatprep.mubr.f32.mxu0 %v367
        %1452 = vmatmul.mubr.f32.gmra.mrb[0].mxu0 %v366
        %v1453 = vpop.f32.mrb[0].mxu0
        %v1454 = vadd.f32 %v1239, %v1453
        %v1455 = vpop.f32.mrb[0].mxu0
        %v1456 = vadd.f32 %v1241, %v1455
        %1457 = vmatprep.mubr.f32.mxu0 %v371
        %1458 = vmatmul.mubr.f32.gmra.mrb[0].mxu0 %v370
        %v1459 = vpop.f32.mrb[0].mxu0
        %v1460 = vadd.f32 %v1245, %v1459
        %v1461 = vpop.f32.mrb[0].mxu0
        %v1462 = vadd.f32 %v1247, %v1461
        %1463 = vmatprep.mubr.f32.mxu0 %v375
        %1464 = vmatmul.mubr.f32.gmra.mrb[0].mxu0 %v374
        %v1465 = vpop.f32.mrb[0].mxu0
        %v1466 = vadd.f32 %v1251, %v1465
        %v1467 = vpop.f32.mrb[0].mxu0
        %v1468 = vadd.f32 %v1253, %v1467
        %1469 = vmatprep.mubr.f32.mxu0 %v379
        %1470 = vmatmul.mubr.f32.gmra.mrb[0].mxu0 %v378
        %v1471 = vpop.f32.mrb[0].mxu0
        %v1472 = vadd.f32 %v1257, %v1471
        %v1473 = vpop.f32.mrb[0].mxu0
        %v1474 = vadd.f32 %v1259, %v1473
        %1475 = vmatprep.mubr.f32.mxu0 %v383
        %1476 = vmatmul.mubr.f32.gmra.mrb[0].mxu0 %v382
        %v1477 = vpop.f32.mrb[0].mxu0
        %v1478 = vadd.f32 %v1263, %v1477
        %v1479 = vpop.f32.mrb[0].mxu0
        %v1480 = vadd.f32 %v1265, %v1479
        %1481 = vmatprep.mubr.f32.mxu0 %v387
        %1482 = vmatmul.mubr.f32.gmra.mrb[0].mxu0 %v386
        %v1483 = vpop.f32.mrb[0].mxu0
        %v1484 = vadd.f32 %v1269, %v1483
        %v1485 = vpop.f32.mrb[0].mxu0
        %v1486 = vadd.f32 %v1271, %v1485
        %1487 = vmatprep.mubr.f32.mxu0 %v391
        %1488 = vmatmul.mubr.f32.gmra.mrb[0].mxu0 %v390
        %v1489 = vpop.f32.mrb[0].mxu0
        %v1490 = vadd.f32 %v1275, %v1489
        %v1491 = vpop.f32.mrb[0].mxu0
        %v1492 = vadd.f32 %v1277, %v1491
        %1493 = vmatprep.mubr.f32.mxu0 %v395
        %1494 = vmatmul.mubr.f32.gmra.mrb[0].mxu0 %v394
        %v1495 = vpop.f32.mrb[0].mxu0
        %v1496 = vadd.f32 %v1281, %v1495
        %v1497 = vpop.f32.mrb[0].mxu0
        %v1498 = vadd.f32 %v1283, %v1497
        %1499 = vmatprep.mubr.f32.mxu0 %v399
        %1500 = vmatmul.mubr.f32.gmra.mrb[0].mxu0 %v398
        %v1501 = vpop.f32.mrb[0].mxu0
        %v1502 = vadd.f32 %v1287, %v1501
        %v1503 = vpop.f32.mrb[0].mxu0
        %v1504 = vadd.f32 %v1289, %v1503
        %1505 = vmatprep.mubr.f32.mxu0 %v403
        %1506 = vmatmul.mubr.f32.gmra.mrb[0].mxu0 %v402
        %v1507 = vpop.f32.mrb[0].mxu0
        %v1508 = vadd.f32 %v1293, %v1507
        %v1509 = vpop.f32.mrb[0].mxu0
        %v1510 = vadd.f32 %v1295, %v1509
        %1511 = vmatprep.mubr.f32.mxu0 %v407
        %1512 = vmatmul.mubr.f32.gmra.mrb[0].mxu0 %v406
        %v1513 = vpop.f32.mrb[0].mxu0
        %v1514 = vadd.f32 %v1299, %v1513
        %v1515 = vpop.f32.mrb[0].mxu0
        %v1516 = vadd.f32 %v1301, %v1515
        %1517 = vmatprep.mubr.f32.mxu0 %v411
        %1518 = vmatmul.mubr.f32.gmra.mrb[0].mxu0 %v410
        %v1519 = vpop.f32.mrb[0].mxu0
        %v1520 = vadd.f32 %v1305, %v1519
        %v1521 = vpop.f32.mrb[0].mxu0
        %v1522 = vadd.f32 %v1307, %v1521
        %1523 = vmatprep.mubr.f32.mxu0 %v415
        %1524 = vmatmul.mubr.f32.gmra.mrb[0].mxu0 %v414
        %v1525 = vpop.f32.mrb[0].mxu0
        %v1526 = vadd.f32 %v1311, %v1525
        %v1527 = vpop.f32.mrb[0].mxu0
        %v1528 = vadd.f32 %v1313, %v1527
        %1529 = vmatprep.mubr.f32.mxu0 %v419
        %1530 = vmatmul.mubr.f32.gmra.mrb[0].mxu0 %v418
        %v1531 = vpop.f32.mrb[0].mxu0
        %v1532 = vadd.f32 %v1317, %v1531
        %v1533 = vpop.f32.mrb[0].mxu0
        %v1534 = vadd.f32 %v1319, %v1533
        %1535 = vmatprep.mubr.f32.mxu0 %v423
        %1536 = vmatmul.mubr.f32.gmra.mrb[0].mxu0 %v422
        %v1537 = vpop.f32.mrb[0].mxu0
        %v1538 = vadd.f32 %v1323, %v1537
        %v1539 = vpop.f32.mrb[0].mxu0
        %v1540 = vadd.f32 %v1325, %v1539
        %1541 = vmatprep.mubr.f32.mxu0 %v427
        %1542 = vmatmul.mubr.f32.gmra.mrb[0].mxu0 %v426
        %v1543 = vpop.f32.mrb[0].mxu0
        %v1544 = vadd.f32 %v1329, %v1543
        %v1545 = vpop.f32.mrb[0].mxu0
        %v1546 = vadd.f32 %v1331, %v1545
        %1547 = vmatprep.mubr.f32.mxu0 %v431
        %1548 = vmatmul.mubr.f32.gmra.mrb[0].mxu0 %v430
        %v1549 = vpop.f32.mrb[0].mxu0
        %v1550 = vadd.f32 %v1335, %v1549
        %v1551 = vpop.f32.mrb[0].mxu0
        %v1552 = vadd.f32 %v1337, %v1551
        %1553 = vmatprep.mubr.f32.mxu0 %v435
        %1554 = vmatmul.mubr.f32.gmra.mrb[0].mxu0 %v434
        %v1555 = vpop.f32.mrb[0].mxu0
        %v1556 = vadd.f32 %v1341, %v1555
        %v1557 = vpop.f32.mrb[0].mxu0
        %v1558 = vadd.f32 %v1343, %v1557
        %1559 = vmatprep.mubr.f32.mxu0 %v439
        %1560 = vmatmul.mubr.f32.gmra.mrb[0].mxu0 %v438
        %v1561 = vpop.f32.mrb[0].mxu0
        %v1562 = vadd.f32 %v1347, %v1561
        %v1563 = vpop.f32.mrb[0].mxu0
        %v1564 = vadd.f32 %v1349, %v1563
        %1565 = vmatprep.mubr.f32.mxu0 %v443
        %1566 = vmatmul.mubr.f32.gmra.mrb[0].mxu0 %v442
        %v1567 = vpop.f32.mrb[0].mxu0
        %v1568 = vadd.f32 %v1353, %v1567
        %v1569 = vpop.f32.mrb[0].mxu0
        %v1570 = vadd.f32 %v1355, %v1569
        %1571 = vmatprep.mubr.f32.mxu0 %v447
        %1572 = vmatmul.mubr.f32.gmra.mrb[0].mxu0 %v446
        %v1573 = vpop.f32.mrb[0].mxu0
        %v1574 = vadd.f32 %v1359, %v1573
        %v1575 = vpop.f32.mrb[0].mxu0
        %v1576 = vadd.f32 %v1361, %v1575
        %1577 = vmatprep.mubr.f32.mxu0 %v451
        %1578 = vmatmul.mubr.f32.gmra.mrb[0].mxu0 %v450
        %v1579 = vpop.f32.mrb[0].mxu0
        %v1580 = vadd.f32 %v1365, %v1579
        %v1581 = vpop.f32.mrb[0].mxu0
        %v1582 = vadd.f32 %v1367, %v1581
        %1583 = vmatprep.mubr.f32.mxu0 %v455
        %1584 = vmatmul.mubr.f32.gmra.mrb[0].mxu0 %v454
        %v1585 = vpop.f32.mrb[0].mxu0
        %v1586 = vadd.f32 %v1371, %v1585
        %v1587 = vpop.f32.mrb[0].mxu0
        %v1588 = vadd.f32 %v1373, %v1587
        %1589 = vmatprep.mubr.f32.mxu0 %v459
        %1590 = vmatmul.mubr.f32.gmra.mrb[0].mxu0 %v458
        %v1591 = vpop.f32.mrb[0].mxu0
        %v1592 = vadd.f32 %v1377, %v1591
        %v1593 = vpop.f32.mrb[0].mxu0
        %v1594 = vadd.f32 %v1379, %v1593
        %1595 = vmatprep.mubr.f32.mxu0 %v463
        %1596 = vmatmul.mubr.f32.gmra.mrb[0].mxu0 %v462
        %v1597 = vpop.f32.mrb[0].mxu0
        %v1598 = vadd.f32 %v1383, %v1597
        %v1599 = vpop.f32.mrb[0].mxu0
        %v1600 = vadd.f32 %v1385, %v1599
        %1601 = vdwg.mxu0
        %v1602 = vmul.f32 %v1024, 0.5
        %v1603 = vmul.f32 %v1026, 0.5
        %v1604 = vmul.f32 %v1454, 0.5
        %v1605 = vmul.f32 %v1456, 0.5
        %v1606 = vmul.f32 %v1030, 0.5
        %v1607 = vmul.f32 %v1032, 0.5
        %v1608 = vmul.f32 %v1460, 0.5
        %v1609 = vmul.f32 %v1462, 0.5
        %v1610 = vmul.f32 %v1036, 0.5
        %v1611 = vmul.f32 %v1038, 0.5
        %v1612 = vmul.f32 %v1466, 0.5
        %v1613 = vmul.f32 %v1468, 0.5
        %v1614 = vmul.f32 %v1042, 0.5
        %v1615 = vmul.f32 %v1044, 0.5
        %v1616 = vmul.f32 %v1472, 0.5
        %v1617 = vmul.f32 %v1474, 0.5
        %v1618 = vmul.f32 %v1048, 0.5
        %v1619 = vmul.f32 %v1050, 0.5
        %v1620 = vmul.f32 %v1478, 0.5
        %v1621 = vmul.f32 %v1480, 0.5
        %v1622 = vmul.f32 %v1054, 0.5
        %v1623 = vmul.f32 %v1056, 0.5
        %v1624 = vmul.f32 %v1484, 0.5
        %v1625 = vmul.f32 %v1486, 0.5
        %v1626 = vmul.f32 %v1060, 0.5
        %v1627 = vmul.f32 %v1062, 0.5
        %v1628 = vmul.f32 %v1490, 0.5
        %v1629 = vmul.f32 %v1492, 0.5
        %v1630 = vmul.f32 %v1066, 0.5
        %v1631 = vmul.f32 %v1068, 0.5
        %v1632 = vmul.f32 %v1496, 0.5
        %v1633 = vmul.f32 %v1498, 0.5
        %v1634 = vmul.f32 %v1072, 0.5
        %v1635 = vmul.f32 %v1074, 0.5
        %v1636 = vmul.f32 %v1502, 0.5
        %v1637 = vmul.f32 %v1504, 0.5
        %v1638 = vmul.f32 %v1078, 0.5
        %v1639 = vmul.f32 %v1080, 0.5
        %v1640 = vmul.f32 %v1508, 0.5
        %v1641 = vmul.f32 %v1510, 0.5
        %v1642 = vmul.f32 %v1084, 0.5
        %v1643 = vmul.f32 %v1086, 0.5
        %v1644 = vmul.f32 %v1514, 0.5
        %v1645 = vmul.f32 %v1516, 0.5
        %v1646 = vmul.f32 %v1090, 0.5
        %v1647 = vmul.f32 %v1092, 0.5
        %v1648 = vmul.f32 %v1520, 0.5
        %v1649 = vmul.f32 %v1522, 0.5
        %v1650 = vmul.f32 %v1096, 0.5
        %v1651 = vmul.f32 %v1098, 0.5
        %v1652 = vmul.f32 %v1526, 0.5
        %v1653 = vmul.f32 %v1528, 0.5
        %v1654 = vmul.f32 %v1102, 0.5
        %v1655 = vmul.f32 %v1104, 0.5
        %v1656 = vmul.f32 %v1532, 0.5
        %v1657 = vmul.f32 %v1534, 0.5
        %v1658 = vmul.f32 %v1108, 0.5
        %v1659 = vmul.f32 %v1110, 0.5
        %v1660 = vmul.f32 %v1538, 0.5
        %v1661 = vmul.f32 %v1540, 0.5
        %v1662 = vmul.f32 %v1114, 0.5
        %v1663 = vmul.f32 %v1116, 0.5
        %v1664 = vmul.f32 %v1544, 0.5
        %v1665 = vmul.f32 %v1546, 0.5
        %v1666 = vmul.f32 %v1120, 0.5
        %v1667 = vmul.f32 %v1122, 0.5
        %v1668 = vmul.f32 %v1550, 0.5
        %v1669 = vmul.f32 %v1552, 0.5
        %v1670 = vmul.f32 %v1126, 0.5
        %v1671 = vmul.f32 %v1128, 0.5
        %v1672 = vmul.f32 %v1556, 0.5
        %v1673 = vmul.f32 %v1558, 0.5
        %v1674 = vmul.f32 %v1132, 0.5
        %v1675 = vmul.f32 %v1134, 0.5
        %v1676 = vmul.f32 %v1562, 0.5
        %v1677 = vmul.f32 %v1564, 0.5
        %v1678 = vmul.f32 %v1138, 0.5
        %v1679 = vmul.f32 %v1140, 0.5
        %v1680 = vmul.f32 %v1568, 0.5
        %v1681 = vmul.f32 %v1570, 0.5
        %v1682 = vmul.f32 %v1144, 0.5
        %v1683 = vmul.f32 %v1146, 0.5
        %v1684 = vmul.f32 %v1574, 0.5
        %v1685 = vmul.f32 %v1576, 0.5
        %v1686 = vmul.f32 %v1150, 0.5
        %v1687 = vmul.f32 %v1152, 0.5
        %v1688 = vmul.f32 %v1580, 0.5
        %v1689 = vmul.f32 %v1582, 0.5
        %v1690 = vmul.f32 %v1156, 0.5
        %v1691 = vmul.f32 %v1158, 0.5
        %v1692 = vmul.f32 %v1586, 0.5
        %v1693 = vmul.f32 %v1588, 0.5
        %v1694 = vmul.f32 %v1162, 0.5
        %v1695 = vmul.f32 %v1164, 0.5
        %v1696 = vmul.f32 %v1592, 0.5
        %v1697 = vmul.f32 %v1594, 0.5
        %v1698 = vmul.f32 %v1168, 0.5
        %v1699 = vmul.f32 %v1170, 0.5
        %v1700 = vmul.f32 %v1598, 0.5
        %v1701 = vmul.f32 %v1600, 0.5
        %v1702 = vmul.f32 %v1024, 0.70710677
        %v1703 = vmul.f32 %v1026, 0.70710677
        %v1704 = vmul.f32 %v1454, 0.70710677
        %v1705 = vmul.f32 %v1456, 0.70710677
        %v1706 = vmul.f32 %v1030, 0.70710677
        %v1707 = vmul.f32 %v1032, 0.70710677
        %v1708 = vmul.f32 %v1460, 0.70710677
        %v1709 = vmul.f32 %v1462, 0.70710677
        %v1710 = vmul.f32 %v1036, 0.70710677
        %v1711 = vmul.f32 %v1038, 0.70710677
        %v1712 = vmul.f32 %v1466, 0.70710677
        %v1713 = vmul.f32 %v1468, 0.70710677
        %v1714 = vmul.f32 %v1042, 0.70710677
        %v1715 = vmul.f32 %v1044, 0.70710677
        %v1716 = vmul.f32 %v1472, 0.70710677
        %v1717 = vmul.f32 %v1474, 0.70710677
        %v1718 = vmul.f32 %v1048, 0.70710677
        %v1719 = vmul.f32 %v1050, 0.70710677
        %v1720 = vmul.f32 %v1478, 0.70710677
        %v1721 = vmul.f32 %v1480, 0.70710677
        %v1722 = vmul.f32 %v1054, 0.70710677
        %v1723 = vmul.f32 %v1056, 0.70710677
        %v1724 = vmul.f32 %v1484, 0.70710677
        %v1725 = vmul.f32 %v1486, 0.70710677
        %v1726 = vmul.f32 %v1060, 0.70710677
        %v1727 = vmul.f32 %v1062, 0.70710677
        %v1728 = vmul.f32 %v1490, 0.70710677
        %v1729 = vmul.f32 %v1492, 0.70710677
        %v1730 = vmul.f32 %v1066, 0.70710677
        %v1731 = vmul.f32 %v1068, 0.70710677
        %v1732 = vmul.f32 %v1496, 0.70710677
        %v1733 = vmul.f32 %v1498, 0.70710677
        %v1734 = vmul.f32 %v1072, 0.70710677
        %v1735 = vmul.f32 %v1074, 0.70710677
        %v1736 = vmul.f32 %v1502, 0.70710677
        %v1737 = vmul.f32 %v1504, 0.70710677
        %v1738 = vmul.f32 %v1078, 0.70710677
        %v1739 = vmul.f32 %v1080, 0.70710677
        %v1740 = vmul.f32 %v1508, 0.70710677
        %v1741 = vmul.f32 %v1510, 0.70710677
        %v1742 = vmul.f32 %v1084, 0.70710677
        %v1743 = vmul.f32 %v1086, 0.70710677
        %v1744 = vmul.f32 %v1514, 0.70710677
        %v1745 = vmul.f32 %v1516, 0.70710677
        %v1746 = vmul.f32 %v1090, 0.70710677
        %v1747 = vmul.f32 %v1092, 0.70710677
        %v1748 = vmul.f32 %v1520, 0.70710677
        %v1749 = vmul.f32 %v1522, 0.70710677
        %v1750 = vmul.f32 %v1096, 0.70710677
        %v1751 = vmul.f32 %v1098, 0.70710677
        %v1752 = vmul.f32 %v1526, 0.70710677
        %v1753 = vmul.f32 %v1528, 0.70710677
        %v1754 = vmul.f32 %v1102, 0.70710677
        %v1755 = vmul.f32 %v1104, 0.70710677
        %v1756 = vmul.f32 %v1532, 0.70710677
        %v1757 = vmul.f32 %v1534, 0.70710677
        %v1758 = vmul.f32 %v1108, 0.70710677
        %v1759 = vmul.f32 %v1110, 0.70710677
        %v1760 = vmul.f32 %v1538, 0.70710677
        %v1761 = vmul.f32 %v1540, 0.70710677
        %v1762 = vmul.f32 %v1114, 0.70710677
        %v1763 = vmul.f32 %v1116, 0.70710677
        %v1764 = vmul.f32 %v1544, 0.70710677
        %v1765 = vmul.f32 %v1546, 0.70710677
        %v1766 = vmul.f32 %v1120, 0.70710677
        %v1767 = vmul.f32 %v1122, 0.70710677
        %v1768 = vmul.f32 %v1550, 0.70710677
        %v1769 = vmul.f32 %v1552, 0.70710677
        %v1770 = vmul.f32 %v1126, 0.70710677
        %v1771 = vmul.f32 %v1128, 0.70710677
        %v1772 = vmul.f32 %v1556, 0.70710677
        %v1773 = vmul.f32 %v1558, 0.70710677
        %v1774 = vmul.f32 %v1132, 0.70710677
        %v1775 = vmul.f32 %v1134, 0.70710677
        %v1776 = vmul.f32 %v1562, 0.70710677
        %v1777 = vmul.f32 %v1564, 0.70710677
        %v1778 = vmul.f32 %v1138, 0.70710677
        %v1779 = vmul.f32 %v1140, 0.70710677
        %v1780 = vmul.f32 %v1568, 0.70710677
        %v1781 = vmul.f32 %v1570, 0.70710677
        %v1782 = vmul.f32 %v1144, 0.70710677
        %v1783 = vmul.f32 %v1146, 0.70710677
        %v1784 = vmul.f32 %v1574, 0.70710677
        %v1785 = vmul.f32 %v1576, 0.70710677
        %v1786 = vmul.f32 %v1150, 0.70710677
        %v1787 = vmul.f32 %v1152, 0.70710677
        %v1788 = vmul.f32 %v1580, 0.70710677
        %v1789 = vmul.f32 %v1582, 0.70710677
        %v1790 = vmul.f32 %v1156, 0.70710677
        %v1791 = vmul.f32 %v1158, 0.70710677
        %v1792 = vmul.f32 %v1586, 0.70710677
        %v1793 = vmul.f32 %v1588, 0.70710677
        %v1794 = vmul.f32 %v1162, 0.70710677
        %v1795 = vmul.f32 %v1164, 0.70710677
        %v1796 = vmul.f32 %v1592, 0.70710677
        %v1797 = vmul.f32 %v1594, 0.70710677
        %v1798 = vmul.f32 %v1168, 0.70710677
        %v1799 = vmul.f32 %v1170, 0.70710677
        %v1800 = vmul.f32 %v1598, 0.70710677
        %v1801 = vmul.f32 %v1600, 0.70710677
        %v1802 = verf.f32.pop %v1702
        %v1803 = verf.f32.pop %v1703
        %v1804 = verf.f32.pop %v1704
        %v1805 = verf.f32.pop %v1705
        %v1806 = verf.f32.pop %v1706
        %v1807 = verf.f32.pop %v1707
        %v1808 = verf.f32.pop %v1708
        %v1809 = verf.f32.pop %v1709
        %v1810 = verf.f32.pop %v1710
        %v1811 = verf.f32.pop %v1711
        %v1812 = verf.f32.pop %v1712
        %v1813 = verf.f32.pop %v1713
        %v1814 = verf.f32.pop %v1714
        %v1815 = verf.f32.pop %v1715
        %v1816 = verf.f32.pop %v1716
        %v1817 = verf.f32.pop %v1717
        %v1818 = verf.f32.pop %v1718
        %v1819 = verf.f32.pop %v1719
        %v1820 = verf.f32.pop %v1720
        %v1821 = verf.f32.pop %v1721
        %v1822 = verf.f32.pop %v1722
        %v1823 = verf.f32.pop %v1723
        %v1824 = verf.f32.pop %v1724
        %v1825 = verf.f32.pop %v1725
        %v1826 = verf.f32.pop %v1726
        %v1827 = verf.f32.pop %v1727
        %v1828 = verf.f32.pop %v1728
        %v1829 = verf.f32.pop %v1729
        %v1830 = verf.f32.pop %v1730
        %v1831 = verf.f32.pop %v1731
        %v1832 = verf.f32.pop %v1732
        %v1833 = verf.f32.pop %v1733
        %v1834 = verf.f32.pop %v1734
        %v1835 = verf.f32.pop %v1735
        %v1836 = verf.f32.pop %v1736
        %v1837 = verf.f32.pop %v1737
        %v1838 = verf.f32.pop %v1738
        %v1839 = verf.f32.pop %v1739
        %v1840 = verf.f32.pop %v1740
        %v1841 = verf.f32.pop %v1741
        %v1842 = verf.f32.pop %v1742
        %v1843 = verf.f32.pop %v1743
        %v1844 = verf.f32.pop %v1744
        %v1845 = verf.f32.pop %v1745
        %v1846 = verf.f32.pop %v1746
        %v1847 = verf.f32.pop %v1747
        %v1848 = verf.f32.pop %v1748
        %v1849 = verf.f32.pop %v1749
        %v1850 = verf.f32.pop %v1750
        %v1851 = verf.f32.pop %v1751
        %v1852 = verf.f32.pop %v1752
        %v1853 = verf.f32.pop %v1753
        %v1854 = verf.f32.pop %v1754
        %v1855 = verf.f32.pop %v1755
        %v1856 = verf.f32.pop %v1756
        %v1857 = verf.f32.pop %v1757
        %v1858 = verf.f32.pop %v1758
        %v1859 = verf.f32.pop %v1759
        %v1860 = verf.f32.pop %v1760
        %v1861 = verf.f32.pop %v1761
        %v1862 = verf.f32.pop %v1762
        %v1863 = verf.f32.pop %v1763
        %v1864 = verf.f32.pop %v1764
        %v1865 = verf.f32.pop %v1765
        %v1866 = verf.f32.pop %v1766
        %v1867 = verf.f32.pop %v1767
        %v1868 = verf.f32.pop %v1768
        %v1869 = verf.f32.pop %v1769
        %v1870 = verf.f32.pop %v1770
        %v1871 = verf.f32.pop %v1771
        %v1872 = verf.f32.pop %v1772
        %v1873 = verf.f32.pop %v1773
        %v1874 = verf.f32.pop %v1774
        %v1875 = verf.f32.pop %v1775
        %v1876 = verf.f32.pop %v1776
        %v1877 = verf.f32.pop %v1777
        %v1878 = verf.f32.pop %v1778
        %v1879 = verf.f32.pop %v1779
        %v1880 = verf.f32.pop %v1780
        %v1881 = verf.f32.pop %v1781
        %v1882 = verf.f32.pop %v1782
        %v1883 = verf.f32.pop %v1783
        %v1884 = verf.f32.pop %v1784
        %v1885 = verf.f32.pop %v1785
        %v1886 = verf.f32.pop %v1786
        %v1887 = verf.f32.pop %v1787
        %v1888 = verf.f32.pop %v1788
        %v1889 = verf.f32.pop %v1789
        %v1890 = verf.f32.pop %v1790
        %v1891 = verf.f32.pop %v1791
        %v1892 = verf.f32.pop %v1792
        %v1893 = verf.f32.pop %v1793
        %v1894 = verf.f32.pop %v1794
        %v1895 = verf.f32.pop %v1795
        %v1896 = verf.f32.pop %v1796
        %v1897 = verf.f32.pop %v1797
        %v1898 = verf.f32.pop %v1798
        %v1899 = verf.f32.pop %v1799
        %v1900 = verf.f32.pop %v1800
        %v1901 = verf.f32.pop %v1801
        %v1902 = vadd.f32 %v1802, 1.0
        %v1903 = vadd.f32 %v1803, 1.0
        %v1904 = vadd.f32 %v1804, 1.0
        %v1905 = vadd.f32 %v1805, 1.0
        %v1906 = vadd.f32 %v1806, 1.0
        %v1907 = vadd.f32 %v1807, 1.0
        %v1908 = vadd.f32 %v1808, 1.0
        %v1909 = vadd.f32 %v1809, 1.0
        %v1910 = vadd.f32 %v1810, 1.0
        %v1911 = vadd.f32 %v1811, 1.0
        %v1912 = vadd.f32 %v1812, 1.0
        %v1913 = vadd.f32 %v1813, 1.0
        %v1914 = vadd.f32 %v1814, 1.0
        %v1915 = vadd.f32 %v1815, 1.0
        %v1916 = vadd.f32 %v1816, 1.0
        %v1917 = vadd.f32 %v1817, 1.0
        %v1918 = vadd.f32 %v1818, 1.0
        %v1919 = vadd.f32 %v1819, 1.0
        %v1920 = vadd.f32 %v1820, 1.0
        %v1921 = vadd.f32 %v1821, 1.0
        %v1922 = vadd.f32 %v1822, 1.0
        %v1923 = vadd.f32 %v1823, 1.0
        %v1924 = vadd.f32 %v1824, 1.0
        %v1925 = vadd.f32 %v1825, 1.0
        %v1926 = vadd.f32 %v1826, 1.0
        %v1927 = vadd.f32 %v1827, 1.0
        %v1928 = vadd.f32 %v1828, 1.0
        %v1929 = vadd.f32 %v1829, 1.0
        %v1930 = vadd.f32 %v1830, 1.0
        %v1931 = vadd.f32 %v1831, 1.0
        %v1932 = vadd.f32 %v1832, 1.0
        %v1933 = vadd.f32 %v1833, 1.0
        %v1934 = vadd.f32 %v1834, 1.0
        %v1935 = vadd.f32 %v1835, 1.0
        %v1936 = vadd.f32 %v1836, 1.0
        %v1937 = vadd.f32 %v1837, 1.0
        %v1938 = vadd.f32 %v1838, 1.0
        %v1939 = vadd.f32 %v1839, 1.0
        %v1940 = vadd.f32 %v1840, 1.0
        %v1941 = vadd.f32 %v1841, 1.0
        %v1942 = vadd.f32 %v1842, 1.0
        %v1943 = vadd.f32 %v1843, 1.0
        %v1944 = vadd.f32 %v1844, 1.0
        %v1945 = vadd.f32 %v1845, 1.0
        %v1946 = vadd.f32 %v1846, 1.0
        %v1947 = vadd.f32 %v1847, 1.0
        %v1948 = vadd.f32 %v1848, 1.0
        %v1949 = vadd.f32 %v1849, 1.0
        %v1950 = vadd.f32 %v1850, 1.0
        %v1951 = vadd.f32 %v1851, 1.0
        %v1952 = vadd.f32 %v1852, 1.0
        %v1953 = vadd.f32 %v1853, 1.0
        %v1954 = vadd.f32 %v1854, 1.0
        %v1955 = vadd.f32 %v1855, 1.0
        %v1956 = vadd.f32 %v1856, 1.0
        %v1957 = vadd.f32 %v1857, 1.0
        %v1958 = vadd.f32 %v1858, 1.0
        %v1959 = vadd.f32 %v1859, 1.0
        %v1960 = vadd.f32 %v1860, 1.0
        %v1961 = vadd.f32 %v1861, 1.0
        %v1962 = vadd.f32 %v1862, 1.0
        %v1963 = vadd.f32 %v1863, 1.0
        %v1964 = vadd.f32 %v1864, 1.0
        %v1965 = vadd.f32 %v1865, 1.0
        %v1966 = vadd.f32 %v1866, 1.0
        %v1967 = vadd.f32 %v1867, 1.0
        %v1968 = vadd.f32 %v1868, 1.0
        %v1969 = vadd.f32 %v1869, 1.0
        %v1970 = vadd.f32 %v1870, 1.0
        %v1971 = vadd.f32 %v1871, 1.0
        %v1972 = vadd.f32 %v1872, 1.0
        %v1973 = vadd.f32 %v1873, 1.0
        %v1974 = vadd.f32 %v1874, 1.0
        %v1975 = vadd.f32 %v1875, 1.0
        %v1976 = vadd.f32 %v1876, 1.0
        %v1977 = vadd.f32 %v1877, 1.0
        %v1978 = vadd.f32 %v1878, 1.0
        %v1979 = vadd.f32 %v1879, 1.0
        %v1980 = vadd.f32 %v1880, 1.0
        %v1981 = vadd.f32 %v1881, 1.0
        %v1982 = vadd.f32 %v1882, 1.0
        %v1983 = vadd.f32 %v1883, 1.0
        %v1984 = vadd.f32 %v1884, 1.0
        %v1985 = vadd.f32 %v1885, 1.0
        %v1986 = vadd.f32 %v1886, 1.0
        %v1987 = vadd.f32 %v1887, 1.0
        %v1988 = vadd.f32 %v1888, 1.0
        %v1989 = vadd.f32 %v1889, 1.0
        %v1990 = vadd.f32 %v1890, 1.0
        %v1991 = vadd.f32 %v1891, 1.0
        %v1992 = vadd.f32 %v1892, 1.0
        %v1993 = vadd.f32 %v1893, 1.0
        %v1994 = vadd.f32 %v1894, 1.0
        %v1995 = vadd.f32 %v1895, 1.0
        %v1996 = vadd.f32 %v1896, 1.0
        %v1997 = vadd.f32 %v1897, 1.0
        %v1998 = vadd.f32 %v1898, 1.0
        %v1999 = vadd.f32 %v1899, 1.0
        %v2000 = vadd.f32 %v1900, 1.0
        %v2001 = vadd.f32 %v1901, 1.0
        %v2002 = vmul.f32 %v1602, %v1902
        %v2003 = vmul.f32 %v1603, %v1903
        %v2004 = vmul.f32 %v1604, %v1904
        %v2005 = vmul.f32 %v1605, %v1905
        %v2006 = vmul.f32 %v1606, %v1906
        %v2007 = vmul.f32 %v1607, %v1907
        %v2008 = vmul.f32 %v1608, %v1908
        %v2009 = vmul.f32 %v1609, %v1909
        %v2010 = vmul.f32 %v1610, %v1910
        %v2011 = vmul.f32 %v1611, %v1911
        %v2012 = vmul.f32 %v1612, %v1912
        %v2013 = vmul.f32 %v1613, %v1913
        %v2014 = vmul.f32 %v1614, %v1914
        %v2015 = vmul.f32 %v1615, %v1915
        %v2016 = vmul.f32 %v1616, %v1916
        %v2017 = vmul.f32 %v1617, %v1917
        %v2018 = vmul.f32 %v1618, %v1918
        %v2019 = vmul.f32 %v1619, %v1919
        %v2020 = vmul.f32 %v1620, %v1920
        %v2021 = vmul.f32 %v1621, %v1921
        %v2022 = vmul.f32 %v1622, %v1922
        %v2023 = vmul.f32 %v1623, %v1923
        %v2024 = vmul.f32 %v1624, %v1924
        %v2025 = vmul.f32 %v1625, %v1925
        %v2026 = vmul.f32 %v1626, %v1926
        %v2027 = vmul.f32 %v1627, %v1927
        %v2028 = vmul.f32 %v1628, %v1928
        %v2029 = vmul.f32 %v1629, %v1929
        %v2030 = vmul.f32 %v1630, %v1930
        %v2031 = vmul.f32 %v1631, %v1931
        %v2032 = vmul.f32 %v1632, %v1932
        %v2033 = vmul.f32 %v1633, %v1933
        %v2034 = vmul.f32 %v1634, %v1934
        %v2035 = vmul.f32 %v1635, %v1935
        %v2036 = vmul.f32 %v1636, %v1936
        %v2037 = vmul.f32 %v1637, %v1937
        %v2038 = vmul.f32 %v1638, %v1938
        %v2039 = vmul.f32 %v1639, %v1939
        %v2040 = vmul.f32 %v1640, %v1940
        %v2041 = vmul.f32 %v1641, %v1941
        %v2042 = vmul.f32 %v1642, %v1942
        %v2043 = vmul.f32 %v1643, %v1943
        %v2044 = vmul.f32 %v1644, %v1944
        %v2045 = vmul.f32 %v1645, %v1945
        %v2046 = vmul.f32 %v1646, %v1946
        %v2047 = vmul.f32 %v1647, %v1947
        %v2048 = vmul.f32 %v1648, %v1948
        %v2049 = vmul.f32 %v1649, %v1949
        %v2050 = vmul.f32 %v1650, %v1950
        %v2051 = vmul.f32 %v1651, %v1951
        %v2052 = vmul.f32 %v1652, %v1952
        %v2053 = vmul.f32 %v1653, %v1953
        %v2054 = vmul.f32 %v1654, %v1954
        %v2055 = vmul.f32 %v1655, %v1955
        %v2056 = vmul.f32 %v1656, %v1956
        %v2057 = vmul.f32 %v1657, %v1957
        %v2058 = vmul.f32 %v1658, %v1958
        %v2059 = vmul.f32 %v1659, %v1959
        %v2060 = vmul.f32 %v1660, %v1960
        %v2061 = vmul.f32 %v1661, %v1961
        %v2062 = vmul.f32 %v1662, %v1962
        %v2063 = vmul.f32 %v1663, %v1963
        %v2064 = vmul.f32 %v1664, %v1964
        %v2065 = vmul.f32 %v1665, %v1965
        %v2066 = vmul.f32 %v1666, %v1966
        %v2067 = vmul.f32 %v1667, %v1967
        %v2068 = vmul.f32 %v1668, %v1968
        %v2069 = vmul.f32 %v1669, %v1969
        %v2070 = vmul.f32 %v1670, %v1970
        %v2071 = vmul.f32 %v1671, %v1971
        %v2072 = vmul.f32 %v1672, %v1972
        %v2073 = vmul.f32 %v1673, %v1973
        %v2074 = vmul.f32 %v1674, %v1974
        %v2075 = vmul.f32 %v1675, %v1975
        %v2076 = vmul.f32 %v1676, %v1976
        %v2077 = vmul.f32 %v1677, %v1977
        %v2078 = vmul.f32 %v1678, %v1978
        %v2079 = vmul.f32 %v1679, %v1979
        %v2080 = vmul.f32 %v1680, %v1980
        %v2081 = vmul.f32 %v1681, %v1981
        %v2082 = vmul.f32 %v1682, %v1982
        %v2083 = vmul.f32 %v1683, %v1983
        %v2084 = vmul.f32 %v1684, %v1984
        %v2085 = vmul.f32 %v1685, %v1985
        %v2086 = vmul.f32 %v1686, %v1986
        %v2087 = vmul.f32 %v1687, %v1987
        %v2088 = vmul.f32 %v1688, %v1988
        %v2089 = vmul.f32 %v1689, %v1989
        %v2090 = vmul.f32 %v1690, %v1990
        %v2091 = vmul.f32 %v1691, %v1991
        %v2092 = vmul.f32 %v1692, %v1992
        %v2093 = vmul.f32 %v1693, %v1993
        %v2094 = vmul.f32 %v1694, %v1994
        %v2095 = vmul.f32 %v1695, %v1995
        %v2096 = vmul.f32 %v1696, %v1996
        %v2097 = vmul.f32 %v1697, %v1997
        %v2098 = vmul.f32 %v1698, %v1998
        %v2099 = vmul.f32 %v1699, %v1999
        %v2100 = vmul.f32 %v1700, %v2000
        %v2101 = vmul.f32 %v1701, %v2001
        %v2102 = vld [vmem:[%s324] sm:$0xff]
        %v2103 = vld [vmem:[%s324 + $0x8] sm:$0xff]
        %v2104 = vld [vmem:[%s324 + $0x10] sm:$0xff]
        %v2105 = vld [vmem:[%s324 + $0x18] sm:$0xff]
        %v2106 = vld [vmem:[%s324 + $0x20] sm:$0xff]
        %v2107 = vld [vmem:[%s324 + $0x28] sm:$0xff]
        %v2108 = vld [vmem:[%s324 + $0x30] sm:$0xff]
        %v2109 = vld [vmem:[%s324 + $0x38] sm:$0xff]
        %v2110 = vld [vmem:[%s324 + $0x40] sm:$0xff]
        %v2111 = vld [vmem:[%s324 + $0x48] sm:$0xff]
        %v2112 = vld [vmem:[%s324 + $0x50] sm:$0xff]
        %v2113 = vld [vmem:[%s324 + $0x58] sm:$0xff]
        %v2114 = vld [vmem:[%s324 + $0x60] sm:$0xff]
        %v2115 = vld [vmem:[%s324 + $0x68] sm:$0xff]
        %v2116 = vld [vmem:[%s324 + $0x70] sm:$0xff]
        %v2117 = vld [vmem:[%s324 + $0x78] sm:$0xff]
        %v2118 = vld [vmem:[%s324 + $0x80] sm:$0xff]
        %v2119 = vld [vmem:[%s324 + $0x88] sm:$0xff]
        %v2120 = vld [vmem:[%s324 + $0x90] sm:$0xff]
        %v2121 = vld [vmem:[%s324 + $0x98] sm:$0xff]
        %v2122 = vld [vmem:[%s324 + $0xa0] sm:$0xff]
        %v2123 = vld [vmem:[%s324 + $0xa8] sm:$0xff]
        %v2124 = vld [vmem:[%s324 + $0xb0] sm:$0xff]
        %v2125 = vld [vmem:[%s324 + $0xb8] sm:$0xff]
        %v2126 = vld [vmem:[%s324 + $0xc0] sm:$0xff]
        %v2127 = vld [vmem:[%s324 + $0xc8] sm:$0xff]
        %v2128 = vld [vmem:[%s324 + $0xd0] sm:$0xff]
        %v2129 = vld [vmem:[%s324 + $0xd8] sm:$0xff]
        %v2130 = vld [vmem:[%s324 + $0xe0] sm:$0xff]
        %v2131 = vld [vmem:[%s324 + $0xe8] sm:$0xff]
        %v2132 = vld [vmem:[%s324 + $0xf0] sm:$0xff]
        %v2133 = vld [vmem:[%s324 + $0xf8] sm:$0xff]
        %v2134 = vld [vmem:[%s324 + $0x100] sm:$0xff]
        %v2135 = vld [vmem:[%s324 + $0x108] sm:$0xff]
        %v2136 = vld [vmem:[%s324 + $0x110] sm:$0xff]
        %v2137 = vld [vmem:[%s324 + $0x118] sm:$0xff]
        %v2138 = vld [vmem:[%s324 + $0x120] sm:$0xff]
        %v2139 = vld [vmem:[%s324 + $0x128] sm:$0xff]
        %v2140 = vld [vmem:[%s324 + $0x130] sm:$0xff]
        %v2141 = vld [vmem:[%s324 + $0x138] sm:$0xff]
        %v2142 = vld [vmem:[%s324 + $0x140] sm:$0xff]
        %v2143 = vld [vmem:[%s324 + $0x148] sm:$0xff]
        %v2144 = vld [vmem:[%s324 + $0x150] sm:$0xff]
        %v2145 = vld [vmem:[%s324 + $0x158] sm:$0xff]
        %v2146 = vld [vmem:[%s324 + $0x160] sm:$0xff]
        %v2147 = vld [vmem:[%s324 + $0x168] sm:$0xff]
        %v2148 = vld [vmem:[%s324 + $0x170] sm:$0xff]
        %v2149 = vld [vmem:[%s324 + $0x178] sm:$0xff]
        %v2150 = vld [vmem:[%s324 + $0x180] sm:$0xff]
        %v2151 = vld [vmem:[%s324 + $0x188] sm:$0xff]
        %v2152 = vld [vmem:[%s324 + $0x190] sm:$0xff]
        %v2153 = vld [vmem:[%s324 + $0x198] sm:$0xff]
        %v2154 = vld [vmem:[%s324 + $0x1a0] sm:$0xff]
        %v2155 = vld [vmem:[%s324 + $0x1a8] sm:$0xff]
        %v2156 = vld [vmem:[%s324 + $0x1b0] sm:$0xff]
        %v2157 = vld [vmem:[%s324 + $0x1b8] sm:$0xff]
        %v2158 = vld [vmem:[%s324 + $0x1c0] sm:$0xff]
        %v2159 = vld [vmem:[%s324 + $0x1c8] sm:$0xff]
        %v2160 = vld [vmem:[%s324 + $0x1d0] sm:$0xff]
        %v2161 = vld [vmem:[%s324 + $0x1d8] sm:$0xff]
        %v2162 = vld [vmem:[%s324 + $0x1e0] sm:$0xff]
        %v2163 = vld [vmem:[%s324 + $0x1e8] sm:$0xff]
        %v2164 = vld [vmem:[%s324 + $0x1f0] sm:$0xff]
        %v2165 = vld [vmem:[%s324 + $0x1f8] sm:$0xff]
        %v2166 = vld [vmem:[%s324 + $0x200] sm:$0xff]
        %v2167 = vld [vmem:[%s324 + $0x208] sm:$0xff]
        %v2168 = vld [vmem:[%s324 + $0x210] sm:$0xff]
        %v2169 = vld [vmem:[%s324 + $0x218] sm:$0xff]
        %v2170 = vld [vmem:[%s324 + $0x220] sm:$0xff]
        %v2171 = vld [vmem:[%s324 + $0x228] sm:$0xff]
        %v2172 = vld [vmem:[%s324 + $0x230] sm:$0xff]
        %v2173 = vld [vmem:[%s324 + $0x238] sm:$0xff]
        %v2174 = vld [vmem:[%s324 + $0x240] sm:$0xff]
        %v2175 = vld [vmem:[%s324 + $0x248] sm:$0xff]
        %v2176 = vld [vmem:[%s324 + $0x250] sm:$0xff]
        %v2177 = vld [vmem:[%s324 + $0x258] sm:$0xff]
        %v2178 = vld [vmem:[%s324 + $0x260] sm:$0xff]
        %v2179 = vld [vmem:[%s324 + $0x268] sm:$0xff]
        %v2180 = vld [vmem:[%s324 + $0x270] sm:$0xff]
        %v2181 = vld [vmem:[%s324 + $0x278] sm:$0xff]
        %v2182 = vld [vmem:[%s324 + $0x280] sm:$0xff]
        %v2183 = vld [vmem:[%s324 + $0x288] sm:$0xff]
        %v2184 = vld [vmem:[%s324 + $0x290] sm:$0xff]
        %v2185 = vld [vmem:[%s324 + $0x298] sm:$0xff]
        %v2186 = vld [vmem:[%s324 + $0x2a0] sm:$0xff]
        %v2187 = vld [vmem:[%s324 + $0x2a8] sm:$0xff]
        %v2188 = vld [vmem:[%s324 + $0x2b0] sm:$0xff]
        %v2189 = vld [vmem:[%s324 + $0x2b8] sm:$0xff]
        %v2190 = vld [vmem:[%s324 + $0x2c0] sm:$0xff]
        %v2191 = vld [vmem:[%s324 + $0x2c8] sm:$0xff]
        %v2192 = vld [vmem:[%s324 + $0x2d0] sm:$0xff]
        %v2193 = vld [vmem:[%s324 + $0x2d8] sm:$0xff]
        %v2194 = vld [vmem:[%s324 + $0x2e0] sm:$0xff]
        %v2195 = vld [vmem:[%s324 + $0x2e8] sm:$0xff]
        %v2196 = vld [vmem:[%s324 + $0x2f0] sm:$0xff]
        %v2197 = vld [vmem:[%s324 + $0x2f8] sm:$0xff]
        %v2198 = vld [vmem:[%s324 + $0x300] sm:$0xff]
        %v2199 = vld [vmem:[%s324 + $0x308] sm:$0xff]
        %v2200 = vld [vmem:[%s324 + $0x310] sm:$0xff]
        %v2201 = vld [vmem:[%s324 + $0x318] sm:$0xff]
        %v2202 = vld [vmem:[%s324 + $0x320] sm:$0xff]
        %v2203 = vld [vmem:[%s324 + $0x328] sm:$0xff]
        %v2204 = vld [vmem:[%s324 + $0x330] sm:$0xff]
        %v2205 = vld [vmem:[%s324 + $0x338] sm:$0xff]
        %v2206 = vld [vmem:[%s324 + $0x340] sm:$0xff]
        %v2207 = vld [vmem:[%s324 + $0x348] sm:$0xff]
        %v2208 = vld [vmem:[%s324 + $0x350] sm:$0xff]
        %v2209 = vld [vmem:[%s324 + $0x358] sm:$0xff]
        %v2210 = vld [vmem:[%s324 + $0x360] sm:$0xff]
        %v2211 = vld [vmem:[%s324 + $0x368] sm:$0xff]
        %v2212 = vld [vmem:[%s324 + $0x370] sm:$0xff]
        %v2213 = vld [vmem:[%s324 + $0x378] sm:$0xff]
        %v2214 = vld [vmem:[%s324 + $0x380] sm:$0xff]
        %v2215 = vld [vmem:[%s324 + $0x388] sm:$0xff]
        %v2216 = vld [vmem:[%s324 + $0x390] sm:$0xff]
        %v2217 = vld [vmem:[%s324 + $0x398] sm:$0xff]
        %v2218 = vld [vmem:[%s324 + $0x3a0] sm:$0xff]
        %v2219 = vld [vmem:[%s324 + $0x3a8] sm:$0xff]
        %v2220 = vld [vmem:[%s324 + $0x3b0] sm:$0xff]
        %v2221 = vld [vmem:[%s324 + $0x3b8] sm:$0xff]
        %v2222 = vld [vmem:[%s324 + $0x3c0] sm:$0xff]
        %v2223 = vld [vmem:[%s324 + $0x3c8] sm:$0xff]
        %v2224 = vld [vmem:[%s324 + $0x3d0] sm:$0xff]
        %v2225 = vld [vmem:[%s324 + $0x3d8] sm:$0xff]
        %v2226 = vld [vmem:[%s324 + $0x3e0] sm:$0xff]
        %v2227 = vld [vmem:[%s324 + $0x3e8] sm:$0xff]
        %v2228 = vld [vmem:[%s324 + $0x3f0] sm:$0xff]
        %v2229 = vld [vmem:[%s324 + $0x3f8] sm:$0xff]
        %v2230 = vld [vmem:[%s324 + $0x400] sm:$0xff]
        %v2231 = vld [vmem:[%s324 + $0x408] sm:$0xff]
        %v2232 = vld [vmem:[%s324 + $0x410] sm:$0xff]
        %v2233 = vld [vmem:[%s324 + $0x418] sm:$0xff]
        %v2234 = vld [vmem:[%s324 + $0x420] sm:$0xff]
        %v2235 = vld [vmem:[%s324 + $0x428] sm:$0xff]
        %v2236 = vld [vmem:[%s324 + $0x430] sm:$0xff]
        %v2237 = vld [vmem:[%s324 + $0x438] sm:$0xff]
        %v2238 = vld [vmem:[%s324 + $0x440] sm:$0xff]
        %v2239 = vld [vmem:[%s324 + $0x448] sm:$0xff]
        %v2240 = vld [vmem:[%s324 + $0x450] sm:$0xff]
        %v2241 = vld [vmem:[%s324 + $0x458] sm:$0xff]
        %v2242 = vld [vmem:[%s324 + $0x460] sm:$0xff]
        %v2243 = vld [vmem:[%s324 + $0x468] sm:$0xff]
        %v2244 = vld [vmem:[%s324 + $0x470] sm:$0xff]
        %v2245 = vld [vmem:[%s324 + $0x478] sm:$0xff]
        %v2246 = vld [vmem:[%s324 + $0x480] sm:$0xff]
        %v2247 = vld [vmem:[%s324 + $0x488] sm:$0xff]
        %v2248 = vld [vmem:[%s324 + $0x490] sm:$0xff]
        %v2249 = vld [vmem:[%s324 + $0x498] sm:$0xff]
        %v2250 = vld [vmem:[%s324 + $0x4a0] sm:$0xff]
        %v2251 = vld [vmem:[%s324 + $0x4a8] sm:$0xff]
        %v2252 = vld [vmem:[%s324 + $0x4b0] sm:$0xff]
        %v2253 = vld [vmem:[%s324 + $0x4b8] sm:$0xff]
        %v2254 = vld [vmem:[%s324 + $0x4c0] sm:$0xff]
        %v2255 = vld [vmem:[%s324 + $0x4c8] sm:$0xff]
        %v2256 = vld [vmem:[%s324 + $0x4d0] sm:$0xff]
        %v2257 = vld [vmem:[%s324 + $0x4d8] sm:$0xff]
        %v2258 = vld [vmem:[%s324 + $0x4e0] sm:$0xff]
        %v2259 = vld [vmem:[%s324 + $0x4e8] sm:$0xff]
        %v2260 = vld [vmem:[%s324 + $0x4f0] sm:$0xff]
        %v2261 = vld [vmem:[%s324 + $0x4f8] sm:$0xff]
        %v2262 = vld [vmem:[%s324 + $0x500] sm:$0xff]
        %v2263 = vld [vmem:[%s324 + $0x508] sm:$0xff]
        %v2264 = vld [vmem:[%s324 + $0x510] sm:$0xff]
        %v2265 = vld [vmem:[%s324 + $0x518] sm:$0xff]
        %v2266 = vld [vmem:[%s324 + $0x520] sm:$0xff]
        %v2267 = vld [vmem:[%s324 + $0x528] sm:$0xff]
        %v2268 = vld [vmem:[%s324 + $0x530] sm:$0xff]
        %v2269 = vld [vmem:[%s324 + $0x538] sm:$0xff]
        %v2270 = vld [vmem:[%s324 + $0x540] sm:$0xff]
        %v2271 = vld [vmem:[%s324 + $0x548] sm:$0xff]
        %v2272 = vld [vmem:[%s324 + $0x550] sm:$0xff]
        %v2273 = vld [vmem:[%s324 + $0x558] sm:$0xff]
        %v2274 = vld [vmem:[%s324 + $0x560] sm:$0xff]
        %v2275 = vld [vmem:[%s324 + $0x568] sm:$0xff]
        %v2276 = vld [vmem:[%s324 + $0x570] sm:$0xff]
        %v2277 = vld [vmem:[%s324 + $0x578] sm:$0xff]
        %v2278 = vld [vmem:[%s324 + $0x580] sm:$0xff]
        %v2279 = vld [vmem:[%s324 + $0x588] sm:$0xff]
        %v2280 = vld [vmem:[%s324 + $0x590] sm:$0xff]
        %v2281 = vld [vmem:[%s324 + $0x598] sm:$0xff]
        %v2282 = vld [vmem:[%s324 + $0x5a0] sm:$0xff]
        %v2283 = vld [vmem:[%s324 + $0x5a8] sm:$0xff]
        %v2284 = vld [vmem:[%s324 + $0x5b0] sm:$0xff]
        %v2285 = vld [vmem:[%s324 + $0x5b8] sm:$0xff]
        %v2286 = vld [vmem:[%s324 + $0x5c0] sm:$0xff]
        %v2287 = vld [vmem:[%s324 + $0x5c8] sm:$0xff]
        %v2288 = vld [vmem:[%s324 + $0x5d0] sm:$0xff]
        %v2289 = vld [vmem:[%s324 + $0x5d8] sm:$0xff]
        %v2290 = vld [vmem:[%s324 + $0x5e0] sm:$0xff]
        %v2291 = vld [vmem:[%s324 + $0x5e8] sm:$0xff]
        %v2292 = vld [vmem:[%s324 + $0x5f0] sm:$0xff]
        %v2293 = vld [vmem:[%s324 + $0x5f8] sm:$0xff]
        %v2294 = vld [vmem:[%s324 + $0x600] sm:$0xff]
        %v2295 = vld [vmem:[%s324 + $0x608] sm:$0xff]
        %v2296 = vld [vmem:[%s324 + $0x610] sm:$0xff]
        %v2297 = vld [vmem:[%s324 + $0x618] sm:$0xff]
        %v2298 = vld [vmem:[%s324 + $0x620] sm:$0xff]
        %v2299 = vld [vmem:[%s324 + $0x628] sm:$0xff]
        %v2300 = vld [vmem:[%s324 + $0x630] sm:$0xff]
        %v2301 = vld [vmem:[%s324 + $0x638] sm:$0xff]
        %v2302 = vld [vmem:[%s324 + $0x640] sm:$0xff]
        %v2303 = vld [vmem:[%s324 + $0x648] sm:$0xff]
        %v2304 = vld [vmem:[%s324 + $0x650] sm:$0xff]
        %v2305 = vld [vmem:[%s324 + $0x658] sm:$0xff]
        %v2306 = vld [vmem:[%s324 + $0x660] sm:$0xff]
        %v2307 = vld [vmem:[%s324 + $0x668] sm:$0xff]
        %v2308 = vld [vmem:[%s324 + $0x670] sm:$0xff]
        %v2309 = vld [vmem:[%s324 + $0x678] sm:$0xff]
        %v2310 = vld [vmem:[%s324 + $0x680] sm:$0xff]
        %v2311 = vld [vmem:[%s324 + $0x688] sm:$0xff]
        %v2312 = vld [vmem:[%s324 + $0x690] sm:$0xff]
        %v2313 = vld [vmem:[%s324 + $0x698] sm:$0xff]
        %v2314 = vld [vmem:[%s324 + $0x6a0] sm:$0xff]
        %v2315 = vld [vmem:[%s324 + $0x6a8] sm:$0xff]
        %v2316 = vld [vmem:[%s324 + $0x6b0] sm:$0xff]
        %v2317 = vld [vmem:[%s324 + $0x6b8] sm:$0xff]
        %v2318 = vld [vmem:[%s324 + $0x6c0] sm:$0xff]
        %v2319 = vld [vmem:[%s324 + $0x6c8] sm:$0xff]
        %v2320 = vld [vmem:[%s324 + $0x6d0] sm:$0xff]
        %v2321 = vld [vmem:[%s324 + $0x6d8] sm:$0xff]
        %v2322 = vld [vmem:[%s324 + $0x6e0] sm:$0xff]
        %v2323 = vld [vmem:[%s324 + $0x6e8] sm:$0xff]
        %v2324 = vld [vmem:[%s324 + $0x6f0] sm:$0xff]
        %v2325 = vld [vmem:[%s324 + $0x6f8] sm:$0xff]
        %v2326 = vld [vmem:[%s324 + $0x700] sm:$0xff]
        %v2327 = vld [vmem:[%s324 + $0x708] sm:$0xff]
        %v2328 = vld [vmem:[%s324 + $0x710] sm:$0xff]
        %v2329 = vld [vmem:[%s324 + $0x718] sm:$0xff]
        %v2330 = vld [vmem:[%s324 + $0x720] sm:$0xff]
        %v2331 = vld [vmem:[%s324 + $0x728] sm:$0xff]
        %v2332 = vld [vmem:[%s324 + $0x730] sm:$0xff]
        %v2333 = vld [vmem:[%s324 + $0x738] sm:$0xff]
        %v2334 = vld [vmem:[%s324 + $0x740] sm:$0xff]
        %v2335 = vld [vmem:[%s324 + $0x748] sm:$0xff]
        %v2336 = vld [vmem:[%s324 + $0x750] sm:$0xff]
        %v2337 = vld [vmem:[%s324 + $0x758] sm:$0xff]
        %v2338 = vld [vmem:[%s324 + $0x760] sm:$0xff]
        %v2339 = vld [vmem:[%s324 + $0x768] sm:$0xff]
        %v2340 = vld [vmem:[%s324 + $0x770] sm:$0xff]
        %v2341 = vld [vmem:[%s324 + $0x778] sm:$0xff]
        %v2342 = vld [vmem:[%s324 + $0x780] sm:$0xff]
        %v2343 = vld [vmem:[%s324 + $0x788] sm:$0xff]
        %v2344 = vld [vmem:[%s324 + $0x790] sm:$0xff]
        %v2345 = vld [vmem:[%s324 + $0x798] sm:$0xff]
        %v2346 = vld [vmem:[%s324 + $0x7a0] sm:$0xff]
        %v2347 = vld [vmem:[%s324 + $0x7a8] sm:$0xff]
        %v2348 = vld [vmem:[%s324 + $0x7b0] sm:$0xff]
        %v2349 = vld [vmem:[%s324 + $0x7b8] sm:$0xff]
        %v2350 = vld [vmem:[%s324 + $0x7c0] sm:$0xff]
        %v2351 = vld [vmem:[%s324 + $0x7c8] sm:$0xff]
        %v2352 = vld [vmem:[%s324 + $0x7d0] sm:$0xff]
        %v2353 = vld [vmem:[%s324 + $0x7d8] sm:$0xff]
        %v2354 = vld [vmem:[%s324 + $0x7e0] sm:$0xff]
        %v2355 = vld [vmem:[%s324 + $0x7e8] sm:$0xff]
        %v2356 = vld [vmem:[%s324 + $0x7f0] sm:$0xff]
        %v2357 = vld [vmem:[%s324 + $0x7f8] sm:$0xff]
        %2358 = vmatprep.subr.mxu0 %v2103
        %2359 = vmatpush1.msra.mxu0 %v2102
        %2360 = vmatprep.subr.mxu0 %v2107
        %2361 = vmatpush1.msra.mxu0 %v2106
        %2362 = vmatprep.subr.mxu0 %v2111
        %2363 = vmatpush1.msra.mxu0 %v2110
        %2364 = vmatprep.subr.mxu0 %v2115
        %2365 = vmatpush1.msra.mxu0 %v2114
        %2366 = vmatprep.subr.mxu0 %v2119
        %2367 = vmatpush1.msra.mxu0 %v2118
        %2368 = vmatprep.subr.mxu0 %v2123
        %2369 = vmatpush1.msra.mxu0 %v2122
        %2370 = vmatprep.subr.mxu0 %v2127
        %2371 = vmatpush1.msra.mxu0 %v2126
        %2372 = vmatprep.subr.mxu0 %v2131
        %2373 = vmatpush1.msra.mxu0 %v2130
        %2374 = vmatprep.subr.mxu0 %v2135
        %2375 = vmatpush1.msra.mxu0 %v2134
        %2376 = vmatprep.subr.mxu0 %v2139
        %2377 = vmatpush1.msra.mxu0 %v2138
        %2378 = vmatprep.subr.mxu0 %v2143
        %2379 = vmatpush1.msra.mxu0 %v2142
        %2380 = vmatprep.subr.mxu0 %v2147
        %2381 = vmatpush1.msra.mxu0 %v2146
        %2382 = vmatprep.subr.mxu0 %v2151
        %2383 = vmatpush1.msra.mxu0 %v2150
        %2384 = vmatprep.subr.mxu0 %v2155
        %2385 = vmatpush1.msra.mxu0 %v2154
        %2386 = vmatprep.subr.mxu0 %v2159
        %2387 = vmatpush1.msra.mxu0 %v2158
        %2388 = vmatprep.subr.mxu0 %v2163
        %2389 = vmatpush1.msra.mxu0 %v2162
        %2390 = vmatprep.subr.mxu0 %v2167
        %2391 = vmatpush1.msra.mxu0 %v2166
        %2392 = vmatprep.subr.mxu0 %v2171
        %2393 = vmatpush1.msra.mxu0 %v2170
        %2394 = vmatprep.subr.mxu0 %v2175
        %2395 = vmatpush1.msra.mxu0 %v2174
        %2396 = vmatprep.subr.mxu0 %v2179
        %2397 = vmatpush1.msra.mxu0 %v2178
        %2398 = vmatprep.subr.mxu0 %v2183
        %2399 = vmatpush1.msra.mxu0 %v2182
        %2400 = vmatprep.subr.mxu0 %v2187
        %2401 = vmatpush1.msra.mxu0 %v2186
        %2402 = vmatprep.subr.mxu0 %v2191
        %2403 = vmatpush1.msra.mxu0 %v2190
        %2404 = vmatprep.subr.mxu0 %v2195
        %2405 = vmatpush1.msra.mxu0 %v2194
        %2406 = vmatprep.subr.mxu0 %v2199
        %2407 = vmatpush1.msra.mxu0 %v2198
        %2408 = vmatprep.subr.mxu0 %v2203
        %2409 = vmatpush1.msra.mxu0 %v2202
        %2410 = vmatprep.subr.mxu0 %v2207
        %2411 = vmatpush1.msra.mxu0 %v2206
        %2412 = vmatprep.subr.mxu0 %v2211
        %2413 = vmatpush1.msra.mxu0 %v2210
        %2414 = vmatprep.subr.mxu0 %v2215
        %2415 = vmatpush1.msra.mxu0 %v2214
        %2416 = vmatprep.subr.mxu0 %v2219
        %2417 = vmatpush1.msra.mxu0 %v2218
        %2418 = vmatprep.subr.mxu0 %v2223
        %2419 = vmatpush1.msra.mxu0 %v2222
        %2420 = vmatprep.subr.mxu0 %v2227
        %2421 = vmatpush1.msra.mxu0 %v2226
        %2422 = vmatprep.mubr.f32.mxu0 %v2003
        %2423 = vmatmul.mubr.f32.gmra.mrb[0].mxu0 %v2002
        %v2424 = vpop.f32.mrb[0].mxu0
        %v2425 = vadd.f32 0.0, %v2424
        %v2426 = vpop.f32.mrb[0].mxu0
        %v2427 = vadd.f32 0.0, %v2426
        %2428 = vmatprep.mubr.f32.mxu0 %v2007
        %2429 = vmatmul.mubr.f32.gmra.mrb[0].mxu0 %v2006
        %v2430 = vpop.f32.mrb[0].mxu0
        %v2431 = vadd.f32 0.0, %v2430
        %v2432 = vpop.f32.mrb[0].mxu0
        %v2433 = vadd.f32 0.0, %v2432
        %2434 = vmatprep.mubr.f32.mxu0 %v2011
        %2435 = vmatmul.mubr.f32.gmra.mrb[0].mxu0 %v2010
        %v2436 = vpop.f32.mrb[0].mxu0
        %v2437 = vadd.f32 0.0, %v2436
        %v2438 = vpop.f32.mrb[0].mxu0
        %v2439 = vadd.f32 0.0, %v2438
        %2440 = vmatprep.mubr.f32.mxu0 %v2015
        %2441 = vmatmul.mubr.f32.gmra.mrb[0].mxu0 %v2014
        %v2442 = vpop.f32.mrb[0].mxu0
        %v2443 = vadd.f32 0.0, %v2442
        %v2444 = vpop.f32.mrb[0].mxu0
        %v2445 = vadd.f32 0.0, %v2444
        %2446 = vmatprep.mubr.f32.mxu0 %v2019
        %2447 = vmatmul.mubr.f32.gmra.mrb[0].mxu0 %v2018
        %v2448 = vpop.f32.mrb[0].mxu0
        %v2449 = vadd.f32 0.0, %v2448
        %v2450 = vpop.f32.mrb[0].mxu0
        %v2451 = vadd.f32 0.0, %v2450
        %2452 = vmatprep.mubr.f32.mxu0 %v2023
        %2453 = vmatmul.mubr.f32.gmra.mrb[0].mxu0 %v2022
        %v2454 = vpop.f32.mrb[0].mxu0
        %v2455 = vadd.f32 0.0, %v2454
        %v2456 = vpop.f32.mrb[0].mxu0
        %v2457 = vadd.f32 0.0, %v2456
        %2458 = vmatprep.mubr.f32.mxu0 %v2027
        %2459 = vmatmul.mubr.f32.gmra.mrb[0].mxu0 %v2026
        %v2460 = vpop.f32.mrb[0].mxu0
        %v2461 = vadd.f32 0.0, %v2460
        %v2462 = vpop.f32.mrb[0].mxu0
        %v2463 = vadd.f32 0.0, %v2462
        %2464 = vmatprep.mubr.f32.mxu0 %v2031
        %2465 = vmatmul.mubr.f32.gmra.mrb[0].mxu0 %v2030
        %v2466 = vpop.f32.mrb[0].mxu0
        %v2467 = vadd.f32 0.0, %v2466
        %v2468 = vpop.f32.mrb[0].mxu0
        %v2469 = vadd.f32 0.0, %v2468
        %2470 = vmatprep.mubr.f32.mxu0 %v2035
        %2471 = vmatmul.mubr.f32.gmra.mrb[0].mxu0 %v2034
        %v2472 = vpop.f32.mrb[0].mxu0
        %v2473 = vadd.f32 0.0, %v2472
        %v2474 = vpop.f32.mrb[0].mxu0
        %v2475 = vadd.f32 0.0, %v2474
        %2476 = vmatprep.mubr.f32.mxu0 %v2039
        %2477 = vmatmul.mubr.f32.gmra.mrb[0].mxu0 %v2038
        %v2478 = vpop.f32.mrb[0].mxu0
        %v2479 = vadd.f32 0.0, %v2478
        %v2480 = vpop.f32.mrb[0].mxu0
        %v2481 = vadd.f32 0.0, %v2480
        %2482 = vmatprep.mubr.f32.mxu0 %v2043
        %2483 = vmatmul.mubr.f32.gmra.mrb[0].mxu0 %v2042
        %v2484 = vpop.f32.mrb[0].mxu0
        %v2485 = vadd.f32 0.0, %v2484
        %v2486 = vpop.f32.mrb[0].mxu0
        %v2487 = vadd.f32 0.0, %v2486
        %2488 = vmatprep.mubr.f32.mxu0 %v2047
        %2489 = vmatmul.mubr.f32.gmra.mrb[0].mxu0 %v2046
        %v2490 = vpop.f32.mrb[0].mxu0
        %v2491 = vadd.f32 0.0, %v2490
        %v2492 = vpop.f32.mrb[0].mxu0
        %v2493 = vadd.f32 0.0, %v2492
        %2494 = vmatprep.mubr.f32.mxu0 %v2051
        %2495 = vmatmul.mubr.f32.gmra.mrb[0].mxu0 %v2050
        %v2496 = vpop.f32.mrb[0].mxu0
        %v2497 = vadd.f32 0.0, %v2496
        %v2498 = vpop.f32.mrb[0].mxu0
        %v2499 = vadd.f32 0.0, %v2498
        %2500 = vmatprep.mubr.f32.mxu0 %v2055
        %2501 = vmatmul.mubr.f32.gmra.mrb[0].mxu0 %v2054
        %v2502 = vpop.f32.mrb[0].mxu0
        %v2503 = vadd.f32 0.0, %v2502
        %v2504 = vpop.f32.mrb[0].mxu0
        %v2505 = vadd.f32 0.0, %v2504
        %2506 = vmatprep.mubr.f32.mxu0 %v2059
        %2507 = vmatmul.mubr.f32.gmra.mrb[0].mxu0 %v2058
        %v2508 = vpop.f32.mrb[0].mxu0
        %v2509 = vadd.f32 0.0, %v2508
        %v2510 = vpop.f32.mrb[0].mxu0
        %v2511 = vadd.f32 0.0, %v2510
        %2512 = vmatprep.mubr.f32.mxu0 %v2063
        %2513 = vmatmul.mubr.f32.gmra.mrb[0].mxu0 %v2062
        %v2514 = vpop.f32.mrb[0].mxu0
        %v2515 = vadd.f32 0.0, %v2514
        %v2516 = vpop.f32.mrb[0].mxu0
        %v2517 = vadd.f32 0.0, %v2516
        %2518 = vmatprep.mubr.f32.mxu0 %v2067
        %2519 = vmatmul.mubr.f32.gmra.mrb[0].mxu0 %v2066
        %v2520 = vpop.f32.mrb[0].mxu0
        %v2521 = vadd.f32 0.0, %v2520
        %v2522 = vpop.f32.mrb[0].mxu0
        %v2523 = vadd.f32 0.0, %v2522
        %2524 = vmatprep.mubr.f32.mxu0 %v2071
        %2525 = vmatmul.mubr.f32.gmra.mrb[0].mxu0 %v2070
        %v2526 = vpop.f32.mrb[0].mxu0
        %v2527 = vadd.f32 0.0, %v2526
        %v2528 = vpop.f32.mrb[0].mxu0
        %v2529 = vadd.f32 0.0, %v2528
        %2530 = vmatprep.mubr.f32.mxu0 %v2075
        %2531 = vmatmul.mubr.f32.gmra.mrb[0].mxu0 %v2074
        %v2532 = vpop.f32.mrb[0].mxu0
        %v2533 = vadd.f32 0.0, %v2532
        %v2534 = vpop.f32.mrb[0].mxu0
        %v2535 = vadd.f32 0.0, %v2534
        %2536 = vmatprep.mubr.f32.mxu0 %v2079
        %2537 = vmatmul.mubr.f32.gmra.mrb[0].mxu0 %v2078
        %v2538 = vpop.f32.mrb[0].mxu0
        %v2539 = vadd.f32 0.0, %v2538
        %v2540 = vpop.f32.mrb[0].mxu0
        %v2541 = vadd.f32 0.0, %v2540
        %2542 = vmatprep.mubr.f32.mxu0 %v2083
        %2543 = vmatmul.mubr.f32.gmra.mrb[0].mxu0 %v2082
        %v2544 = vpop.f32.mrb[0].mxu0
        %v2545 = vadd.f32 0.0, %v2544
        %v2546 = vpop.f32.mrb[0].mxu0
        %v2547 = vadd.f32 0.0, %v2546
        %2548 = vmatprep.mubr.f32.mxu0 %v2087
        %2549 = vmatmul.mubr.f32.gmra.mrb[0].mxu0 %v2086
        %v2550 = vpop.f32.mrb[0].mxu0
        %v2551 = vadd.f32 0.0, %v2550
        %v2552 = vpop.f32.mrb[0].mxu0
        %v2553 = vadd.f32 0.0, %v2552
        %2554 = vmatprep.mubr.f32.mxu0 %v2091
        %2555 = vmatmul.mubr.f32.gmra.mrb[0].mxu0 %v2090
        %v2556 = vpop.f32.mrb[0].mxu0
        %v2557 = vadd.f32 0.0, %v2556
        %v2558 = vpop.f32.mrb[0].mxu0
        %v2559 = vadd.f32 0.0, %v2558
        %2560 = vmatprep.mubr.f32.mxu0 %v2095
        %2561 = vmatmul.mubr.f32.gmra.mrb[0].mxu0 %v2094
        %v2562 = vpop.f32.mrb[0].mxu0
        %v2563 = vadd.f32 0.0, %v2562
        %v2564 = vpop.f32.mrb[0].mxu0
        %v2565 = vadd.f32 0.0, %v2564
        %2566 = vmatprep.mubr.f32.mxu0 %v2099
        %2567 = vmatmul.mubr.f32.gmra.mrb[0].mxu0 %v2098
        %v2568 = vpop.f32.mrb[0].mxu0
        %v2569 = vadd.f32 0.0, %v2568
        %v2570 = vpop.f32.mrb[0].mxu0
        %v2571 = vadd.f32 0.0, %v2570
        %2572 = vdwg.mxu0
        %2573 = vmatprep.subr.mxu0 %v2231
        %2574 = vmatpush1.msra.mxu0 %v2230
        %2575 = vmatprep.subr.mxu0 %v2235
        %2576 = vmatpush1.msra.mxu0 %v2234
        %2577 = vmatprep.subr.mxu0 %v2239
        %2578 = vmatpush1.msra.mxu0 %v2238
        %2579 = vmatprep.subr.mxu0 %v2243
        %2580 = vmatpush1.msra.mxu0 %v2242
        %2581 = vmatprep.subr.mxu0 %v2247
        %2582 = vmatpush1.msra.mxu0 %v2246
        %2583 = vmatprep.subr.mxu0 %v2251
        %2584 = vmatpush1.msra.mxu0 %v2250
        %2585 = vmatprep.subr.mxu0 %v2255
        %2586 = vmatpush1.msra.mxu0 %v2254
        %2587 = vmatprep.subr.mxu0 %v2259
        %2588 = vmatpush1.msra.mxu0 %v2258
        %2589 = vmatprep.subr.mxu0 %v2263
        %2590 = vmatpush1.msra.mxu0 %v2262
        %2591 = vmatprep.subr.mxu0 %v2267
        %2592 = vmatpush1.msra.mxu0 %v2266
        %2593 = vmatprep.subr.mxu0 %v2271
        %2594 = vmatpush1.msra.mxu0 %v2270
        %2595 = vmatprep.subr.mxu0 %v2275
        %2596 = vmatpush1.msra.mxu0 %v2274
        %2597 = vmatprep.subr.mxu0 %v2279
        %2598 = vmatpush1.msra.mxu0 %v2278
        %2599 = vmatprep.subr.mxu0 %v2283
        %2600 = vmatpush1.msra.mxu0 %v2282
        %2601 = vmatprep.subr.mxu0 %v2287
        %2602 = vmatpush1.msra.mxu0 %v2286
        %2603 = vmatprep.subr.mxu0 %v2291
        %2604 = vmatpush1.msra.mxu0 %v2290
        %2605 = vmatprep.subr.mxu0 %v2295
        %2606 = vmatpush1.msra.mxu0 %v2294
        %2607 = vmatprep.subr.mxu0 %v2299
        %2608 = vmatpush1.msra.mxu0 %v2298
        %2609 = vmatprep.subr.mxu0 %v2303
        %2610 = vmatpush1.msra.mxu0 %v2302
        %2611 = vmatprep.subr.mxu0 %v2307
        %2612 = vmatpush1.msra.mxu0 %v2306
        %2613 = vmatprep.subr.mxu0 %v2311
        %2614 = vmatpush1.msra.mxu0 %v2310
        %2615 = vmatprep.subr.mxu0 %v2315
        %2616 = vmatpush1.msra.mxu0 %v2314
        %2617 = vmatprep.subr.mxu0 %v2319
        %2618 = vmatpush1.msra.mxu0 %v2318
        %2619 = vmatprep.subr.mxu0 %v2323
        %2620 = vmatpush1.msra.mxu0 %v2322
        %2621 = vmatprep.subr.mxu0 %v2327
        %2622 = vmatpush1.msra.mxu0 %v2326
        %2623 = vmatprep.subr.mxu0 %v2331
        %2624 = vmatpush1.msra.mxu0 %v2330
        %2625 = vmatprep.subr.mxu0 %v2335
        %2626 = vmatpush1.msra.mxu0 %v2334
        %2627 = vmatprep.subr.mxu0 %v2339
        %2628 = vmatpush1.msra.mxu0 %v2338
        %2629 = vmatprep.subr.mxu0 %v2343
        %2630 = vmatpush1.msra.mxu0 %v2342
        %2631 = vmatprep.subr.mxu0 %v2347
        %2632 = vmatpush1.msra.mxu0 %v2346
        %2633 = vmatprep.subr.mxu0 %v2351
        %2634 = vmatpush1.msra.mxu0 %v2350
        %2635 = vmatprep.subr.mxu0 %v2355
        %2636 = vmatpush1.msra.mxu0 %v2354
        %2637 = vmatprep.mubr.f32.mxu0 %v2005
        %2638 = vmatmul.mubr.f32.gmra.mrb[0].mxu0 %v2004
        %v2639 = vpop.f32.mrb[0].mxu0
        %v2640 = vadd.f32 %v2425, %v2639
        %v2641 = vpop.f32.mrb[0].mxu0
        %v2642 = vadd.f32 %v2427, %v2641
        %2643 = vmatprep.mubr.f32.mxu0 %v2009
        %2644 = vmatmul.mubr.f32.gmra.mrb[0].mxu0 %v2008
        %v2645 = vpop.f32.mrb[0].mxu0
        %v2646 = vadd.f32 %v2431, %v2645
        %v2647 = vpop.f32.mrb[0].mxu0
        %v2648 = vadd.f32 %v2433, %v2647
        %2649 = vmatprep.mubr.f32.mxu0 %v2013
        %2650 = vmatmul.mubr.f32.gmra.mrb[0].mxu0 %v2012
        %v2651 = vpop.f32.mrb[0].mxu0
        %v2652 = vadd.f32 %v2437, %v2651
        %v2653 = vpop.f32.mrb[0].mxu0
        %v2654 = vadd.f32 %v2439, %v2653
        %2655 = vmatprep.mubr.f32.mxu0 %v2017
        %2656 = vmatmul.mubr.f32.gmra.mrb[0].mxu0 %v2016
        %v2657 = vpop.f32.mrb[0].mxu0
        %v2658 = vadd.f32 %v2443, %v2657
        %v2659 = vpop.f32.mrb[0].mxu0
        %v2660 = vadd.f32 %v2445, %v2659
        %2661 = vmatprep.mubr.f32.mxu0 %v2021
        %2662 = vmatmul.mubr.f32.gmra.mrb[0].mxu0 %v2020
        %v2663 = vpop.f32.mrb[0].mxu0
        %v2664 = vadd.f32 %v2449, %v2663
        %v2665 = vpop.f32.mrb[0].mxu0
        %v2666 = vadd.f32 %v2451, %v2665
        %2667 = vmatprep.mubr.f32.mxu0 %v2025
        %2668 = vmatmul.mubr.f32.gmra.mrb[0].mxu0 %v2024
        %v2669 = vpop.f32.mrb[0].mxu0
        %v2670 = vadd.f32 %v2455, %v2669
        %v2671 = vpop.f32.mrb[0].mxu0
        %v2672 = vadd.f32 %v2457, %v2671
        %2673 = vmatprep.mubr.f32.mxu0 %v2029
        %2674 = vmatmul.mubr.f32.gmra.mrb[0].mxu0 %v2028
        %v2675 = vpop.f32.mrb[0].mxu0
        %v2676 = vadd.f32 %v2461, %v2675
        %v2677 = vpop.f32.mrb[0].mxu0
        %v2678 = vadd.f32 %v2463, %v2677
        %2679 = vmatprep.mubr.f32.mxu0 %v2033
        %2680 = vmatmul.mubr.f32.gmra.mrb[0].mxu0 %v2032
        %v2681 = vpop.f32.mrb[0].mxu0
        %v2682 = vadd.f32 %v2467, %v2681
        %v2683 = vpop.f32.mrb[0].mxu0
        %v2684 = vadd.f32 %v2469, %v2683
        %2685 = vmatprep.mubr.f32.mxu0 %v2037
        %2686 = vmatmul.mubr.f32.gmra.mrb[0].mxu0 %v2036
        %v2687 = vpop.f32.mrb[0].mxu0
        %v2688 = vadd.f32 %v2473, %v2687
        %v2689 = vpop.f32.mrb[0].mxu0
        %v2690 = vadd.f32 %v2475, %v2689
        %2691 = vmatprep.mubr.f32.mxu0 %v2041
        %2692 = vmatmul.mubr.f32.gmra.mrb[0].mxu0 %v2040
        %v2693 = vpop.f32.mrb[0].mxu0
        %v2694 = vadd.f32 %v2479, %v2693
        %v2695 = vpop.f32.mrb[0].mxu0
        %v2696 = vadd.f32 %v2481, %v2695
        %2697 = vmatprep.mubr.f32.mxu0 %v2045
        %2698 = vmatmul.mubr.f32.gmra.mrb[0].mxu0 %v2044
        %v2699 = vpop.f32.mrb[0].mxu0
        %v2700 = vadd.f32 %v2485, %v2699
        %v2701 = vpop.f32.mrb[0].mxu0
        %v2702 = vadd.f32 %v2487, %v2701
        %2703 = vmatprep.mubr.f32.mxu0 %v2049
        %2704 = vmatmul.mubr.f32.gmra.mrb[0].mxu0 %v2048
        %v2705 = vpop.f32.mrb[0].mxu0
        %v2706 = vadd.f32 %v2491, %v2705
        %v2707 = vpop.f32.mrb[0].mxu0
        %v2708 = vadd.f32 %v2493, %v2707
        %2709 = vmatprep.mubr.f32.mxu0 %v2053
        %2710 = vmatmul.mubr.f32.gmra.mrb[0].mxu0 %v2052
        %v2711 = vpop.f32.mrb[0].mxu0
        %v2712 = vadd.f32 %v2497, %v2711
        %v2713 = vpop.f32.mrb[0].mxu0
        %v2714 = vadd.f32 %v2499, %v2713
        %2715 = vmatprep.mubr.f32.mxu0 %v2057
        %2716 = vmatmul.mubr.f32.gmra.mrb[0].mxu0 %v2056
        %v2717 = vpop.f32.mrb[0].mxu0
        %v2718 = vadd.f32 %v2503, %v2717
        %v2719 = vpop.f32.mrb[0].mxu0
        %v2720 = vadd.f32 %v2505, %v2719
        %2721 = vmatprep.mubr.f32.mxu0 %v2061
        %2722 = vmatmul.mubr.f32.gmra.mrb[0].mxu0 %v2060
        %v2723 = vpop.f32.mrb[0].mxu0
        %v2724 = vadd.f32 %v2509, %v2723
        %v2725 = vpop.f32.mrb[0].mxu0
        %v2726 = vadd.f32 %v2511, %v2725
        %2727 = vmatprep.mubr.f32.mxu0 %v2065
        %2728 = vmatmul.mubr.f32.gmra.mrb[0].mxu0 %v2064
        %v2729 = vpop.f32.mrb[0].mxu0
        %v2730 = vadd.f32 %v2515, %v2729
        %v2731 = vpop.f32.mrb[0].mxu0
        %v2732 = vadd.f32 %v2517, %v2731
        %2733 = vmatprep.mubr.f32.mxu0 %v2069
        %2734 = vmatmul.mubr.f32.gmra.mrb[0].mxu0 %v2068
        %v2735 = vpop.f32.mrb[0].mxu0
        %v2736 = vadd.f32 %v2521, %v2735
        %v2737 = vpop.f32.mrb[0].mxu0
        %v2738 = vadd.f32 %v2523, %v2737
        %2739 = vmatprep.mubr.f32.mxu0 %v2073
        %2740 = vmatmul.mubr.f32.gmra.mrb[0].mxu0 %v2072
        %v2741 = vpop.f32.mrb[0].mxu0
        %v2742 = vadd.f32 %v2527, %v2741
        %v2743 = vpop.f32.mrb[0].mxu0
        %v2744 = vadd.f32 %v2529, %v2743
        %2745 = vmatprep.mubr.f32.mxu0 %v2077
        %2746 = vmatmul.mubr.f32.gmra.mrb[0].mxu0 %v2076
        %v2747 = vpop.f32.mrb[0].mxu0
        %v2748 = vadd.f32 %v2533, %v2747
        %v2749 = vpop.f32.mrb[0].mxu0
        %v2750 = vadd.f32 %v2535, %v2749
        %2751 = vmatprep.mubr.f32.mxu0 %v2081
        %2752 = vmatmul.mubr.f32.gmra.mrb[0].mxu0 %v2080
        %v2753 = vpop.f32.mrb[0].mxu0
        %v2754 = vadd.f32 %v2539, %v2753
        %v2755 = vpop.f32.mrb[0].mxu0
        %v2756 = vadd.f32 %v2541, %v2755
        %2757 = vmatprep.mubr.f32.mxu0 %v2085
        %2758 = vmatmul.mubr.f32.gmra.mrb[0].mxu0 %v2084
        %v2759 = vpop.f32.mrb[0].mxu0
        %v2760 = vadd.f32 %v2545, %v2759
        %v2761 = vpop.f32.mrb[0].mxu0
        %v2762 = vadd.f32 %v2547, %v2761
        %2763 = vmatprep.mubr.f32.mxu0 %v2089
        %2764 = vmatmul.mubr.f32.gmra.mrb[0].mxu0 %v2088
        %v2765 = vpop.f32.mrb[0].mxu0
        %v2766 = vadd.f32 %v2551, %v2765
        %v2767 = vpop.f32.mrb[0].mxu0
        %v2768 = vadd.f32 %v2553, %v2767
        %2769 = vmatprep.mubr.f32.mxu0 %v2093
        %2770 = vmatmul.mubr.f32.gmra.mrb[0].mxu0 %v2092
        %v2771 = vpop.f32.mrb[0].mxu0
        %v2772 = vadd.f32 %v2557, %v2771
        %v2773 = vpop.f32.mrb[0].mxu0
        %v2774 = vadd.f32 %v2559, %v2773
        %2775 = vmatprep.mubr.f32.mxu0 %v2097
        %2776 = vmatmul.mubr.f32.gmra.mrb[0].mxu0 %v2096
        %v2777 = vpop.f32.mrb[0].mxu0
        %v2778 = vadd.f32 %v2563, %v2777
        %v2779 = vpop.f32.mrb[0].mxu0
        %v2780 = vadd.f32 %v2565, %v2779
        %2781 = vmatprep.mubr.f32.mxu0 %v2101
        %2782 = vmatmul.mubr.f32.gmra.mrb[0].mxu0 %v2100
        %v2783 = vpop.f32.mrb[0].mxu0
        %v2784 = vadd.f32 %v2569, %v2783
        %v2785 = vpop.f32.mrb[0].mxu0
        %v2786 = vadd.f32 %v2571, %v2785
        %2787 = vdwg.mxu0
        %2788 = vmatprep.subr.mxu0 %v2105
        %2789 = vmatpush1.msra.mxu0 %v2104
        %2790 = vmatprep.subr.mxu0 %v2109
        %2791 = vmatpush1.msra.mxu0 %v2108
        %2792 = vmatprep.subr.mxu0 %v2113
        %2793 = vmatpush1.msra.mxu0 %v2112
        %2794 = vmatprep.subr.mxu0 %v2117
        %2795 = vmatpush1.msra.mxu0 %v2116
        %2796 = vmatprep.subr.mxu0 %v2121
        %2797 = vmatpush1.msra.mxu0 %v2120
        %2798 = vmatprep.subr.mxu0 %v2125
        %2799 = vmatpush1.msra.mxu0 %v2124
        %2800 = vmatprep.subr.mxu0 %v2129
        %2801 = vmatpush1.msra.mxu0 %v2128
        %2802 = vmatprep.subr.mxu0 %v2133
        %2803 = vmatpush1.msra.mxu0 %v2132
        %2804 = vmatprep.subr.mxu0 %v2137
        %2805 = vmatpush1.msra.mxu0 %v2136
        %2806 = vmatprep.subr.mxu0 %v2141
        %2807 = vmatpush1.msra.mxu0 %v2140
        %2808 = vmatprep.subr.mxu0 %v2145
        %2809 = vmatpush1.msra.mxu0 %v2144
        %2810 = vmatprep.subr.mxu0 %v2149
        %2811 = vmatpush1.msra.mxu0 %v2148
        %2812 = vmatprep.subr.mxu0 %v2153
        %2813 = vmatpush1.msra.mxu0 %v2152
        %2814 = vmatprep.subr.mxu0 %v2157
        %2815 = vmatpush1.msra.mxu0 %v2156
        %2816 = vmatprep.subr.mxu0 %v2161
        %2817 = vmatpush1.msra.mxu0 %v2160
        %2818 = vmatprep.subr.mxu0 %v2165
        %2819 = vmatpush1.msra.mxu0 %v2164
        %2820 = vmatprep.subr.mxu0 %v2169
        %2821 = vmatpush1.msra.mxu0 %v2168
        %2822 = vmatprep.subr.mxu0 %v2173
        %2823 = vmatpush1.msra.mxu0 %v2172
        %2824 = vmatprep.subr.mxu0 %v2177
        %2825 = vmatpush1.msra.mxu0 %v2176
        %2826 = vmatprep.subr.mxu0 %v2181
        %2827 = vmatpush1.msra.mxu0 %v2180
        %2828 = vmatprep.subr.mxu0 %v2185
        %2829 = vmatpush1.msra.mxu0 %v2184
        %2830 = vmatprep.subr.mxu0 %v2189
        %2831 = vmatpush1.msra.mxu0 %v2188
        %2832 = vmatprep.subr.mxu0 %v2193
        %2833 = vmatpush1.msra.mxu0 %v2192
        %2834 = vmatprep.subr.mxu0 %v2197
        %2835 = vmatpush1.msra.mxu0 %v2196
        %2836 = vmatprep.subr.mxu0 %v2201
        %2837 = vmatpush1.msra.mxu0 %v2200
        %2838 = vmatprep.subr.mxu0 %v2205
        %2839 = vmatpush1.msra.mxu0 %v2204
        %2840 = vmatprep.subr.mxu0 %v2209
        %2841 = vmatpush1.msra.mxu0 %v2208
        %2842 = vmatprep.subr.mxu0 %v2213
        %2843 = vmatpush1.msra.mxu0 %v2212
        %2844 = vmatprep.subr.mxu0 %v2217
        %2845 = vmatpush1.msra.mxu0 %v2216
        %2846 = vmatprep.subr.mxu0 %v2221
        %2847 = vmatpush1.msra.mxu0 %v2220
        %2848 = vmatprep.subr.mxu0 %v2225
        %2849 = vmatpush1.msra.mxu0 %v2224
        %2850 = vmatprep.subr.mxu0 %v2229
        %2851 = vmatpush1.msra.mxu0 %v2228
        %2852 = vmatprep.mubr.f32.mxu0 %v2003
        %2853 = vmatmul.mubr.f32.gmra.mrb[0].mxu0 %v2002
        %v2854 = vpop.f32.mrb[0].mxu0
        %v2855 = vadd.f32 0.0, %v2854
        %v2856 = vpop.f32.mrb[0].mxu0
        %v2857 = vadd.f32 0.0, %v2856
        %2858 = vmatprep.mubr.f32.mxu0 %v2007
        %2859 = vmatmul.mubr.f32.gmra.mrb[0].mxu0 %v2006
        %v2860 = vpop.f32.mrb[0].mxu0
        %v2861 = vadd.f32 0.0, %v2860
        %v2862 = vpop.f32.mrb[0].mxu0
        %v2863 = vadd.f32 0.0, %v2862
        %2864 = vmatprep.mubr.f32.mxu0 %v2011
        %2865 = vmatmul.mubr.f32.gmra.mrb[0].mxu0 %v2010
        %v2866 = vpop.f32.mrb[0].mxu0
        %v2867 = vadd.f32 0.0, %v2866
        %v2868 = vpop.f32.mrb[0].mxu0
        %v2869 = vadd.f32 0.0, %v2868
        %2870 = vmatprep.mubr.f32.mxu0 %v2015
        %2871 = vmatmul.mubr.f32.gmra.mrb[0].mxu0 %v2014
        %v2872 = vpop.f32.mrb[0].mxu0
        %v2873 = vadd.f32 0.0, %v2872
        %v2874 = vpop.f32.mrb[0].mxu0
        %v2875 = vadd.f32 0.0, %v2874
        %2876 = vmatprep.mubr.f32.mxu0 %v2019
        %2877 = vmatmul.mubr.f32.gmra.mrb[0].mxu0 %v2018
        %v2878 = vpop.f32.mrb[0].mxu0
        %v2879 = vadd.f32 0.0, %v2878
        %v2880 = vpop.f32.mrb[0].mxu0
        %v2881 = vadd.f32 0.0, %v2880
        %2882 = vmatprep.mubr.f32.mxu0 %v2023
        %2883 = vmatmul.mubr.f32.gmra.mrb[0].mxu0 %v2022
        %v2884 = vpop.f32.mrb[0].mxu0
        %v2885 = vadd.f32 0.0, %v2884
        %v2886 = vpop.f32.mrb[0].mxu0
        %v2887 = vadd.f32 0.0, %v2886
        %2888 = vmatprep.mubr.f32.mxu0 %v2027
        %2889 = vmatmul.mubr.f32.gmra.mrb[0].mxu0 %v2026
        %v2890 = vpop.f32.mrb[0].mxu0
        %v2891 = vadd.f32 0.0, %v2890
        %v2892 = vpop.f32.mrb[0].mxu0
        %v2893 = vadd.f32 0.0, %v2892
        %2894 = vmatprep.mubr.f32.mxu0 %v2031
        %2895 = vmatmul.mubr.f32.gmra.mrb[0].mxu0 %v2030
        %v2896 = vpop.f32.mrb[0].mxu0
        %v2897 = vadd.f32 0.0, %v2896
        %v2898 = vpop.f32.mrb[0].mxu0
        %v2899 = vadd.f32 0.0, %v2898
        %2900 = vmatprep.mubr.f32.mxu0 %v2035
        %2901 = vmatmul.mubr.f32.gmra.mrb[0].mxu0 %v2034
        %v2902 = vpop.f32.mrb[0].mxu0
        %v2903 = vadd.f32 0.0, %v2902
        %v2904 = vpop.f32.mrb[0].mxu0
        %v2905 = vadd.f32 0.0, %v2904
        %2906 = vmatprep.mubr.f32.mxu0 %v2039
        %2907 = vmatmul.mubr.f32.gmra.mrb[0].mxu0 %v2038
        %v2908 = vpop.f32.mrb[0].mxu0
        %v2909 = vadd.f32 0.0, %v2908
        %v2910 = vpop.f32.mrb[0].mxu0
        %v2911 = vadd.f32 0.0, %v2910
        %2912 = vmatprep.mubr.f32.mxu0 %v2043
        %2913 = vmatmul.mubr.f32.gmra.mrb[0].mxu0 %v2042
        %v2914 = vpop.f32.mrb[0].mxu0
        %v2915 = vadd.f32 0.0, %v2914
        %v2916 = vpop.f32.mrb[0].mxu0
        %v2917 = vadd.f32 0.0, %v2916
        %2918 = vmatprep.mubr.f32.mxu0 %v2047
        %2919 = vmatmul.mubr.f32.gmra.mrb[0].mxu0 %v2046
        %v2920 = vpop.f32.mrb[0].mxu0
        %v2921 = vadd.f32 0.0, %v2920
        %v2922 = vpop.f32.mrb[0].mxu0
        %v2923 = vadd.f32 0.0, %v2922
        %2924 = vmatprep.mubr.f32.mxu0 %v2051
        %2925 = vmatmul.mubr.f32.gmra.mrb[0].mxu0 %v2050
        %v2926 = vpop.f32.mrb[0].mxu0
        %v2927 = vadd.f32 0.0, %v2926
        %v2928 = vpop.f32.mrb[0].mxu0
        %v2929 = vadd.f32 0.0, %v2928
        %2930 = vmatprep.mubr.f32.mxu0 %v2055
        %2931 = vmatmul.mubr.f32.gmra.mrb[0].mxu0 %v2054
        %v2932 = vpop.f32.mrb[0].mxu0
        %v2933 = vadd.f32 0.0, %v2932
        %v2934 = vpop.f32.mrb[0].mxu0
        %v2935 = vadd.f32 0.0, %v2934
        %2936 = vmatprep.mubr.f32.mxu0 %v2059
        %2937 = vmatmul.mubr.f32.gmra.mrb[0].mxu0 %v2058
        %v2938 = vpop.f32.mrb[0].mxu0
        %v2939 = vadd.f32 0.0, %v2938
        %v2940 = vpop.f32.mrb[0].mxu0
        %v2941 = vadd.f32 0.0, %v2940
        %2942 = vmatprep.mubr.f32.mxu0 %v2063
        %2943 = vmatmul.mubr.f32.gmra.mrb[0].mxu0 %v2062
        %v2944 = vpop.f32.mrb[0].mxu0
        %v2945 = vadd.f32 0.0, %v2944
        %v2946 = vpop.f32.mrb[0].mxu0
        %v2947 = vadd.f32 0.0, %v2946
        %2948 = vmatprep.mubr.f32.mxu0 %v2067
        %2949 = vmatmul.mubr.f32.gmra.mrb[0].mxu0 %v2066
        %v2950 = vpop.f32.mrb[0].mxu0
        %v2951 = vadd.f32 0.0, %v2950
        %v2952 = vpop.f32.mrb[0].mxu0
        %v2953 = vadd.f32 0.0, %v2952
        %2954 = vmatprep.mubr.f32.mxu0 %v2071
        %2955 = vmatmul.mubr.f32.gmra.mrb[0].mxu0 %v2070
        %v2956 = vpop.f32.mrb[0].mxu0
        %v2957 = vadd.f32 0.0, %v2956
        %v2958 = vpop.f32.mrb[0].mxu0
        %v2959 = vadd.f32 0.0, %v2958
        %2960 = vmatprep.mubr.f32.mxu0 %v2075
        %2961 = vmatmul.mubr.f32.gmra.mrb[0].mxu0 %v2074
        %v2962 = vpop.f32.mrb[0].mxu0
        %v2963 = vadd.f32 0.0, %v2962
        %v2964 = vpop.f32.mrb[0].mxu0
        %v2965 = vadd.f32 0.0, %v2964
        %2966 = vmatprep.mubr.f32.mxu0 %v2079
        %2967 = vmatmul.mubr.f32.gmra.mrb[0].mxu0 %v2078
        %v2968 = vpop.f32.mrb[0].mxu0
        %v2969 = vadd.f32 0.0, %v2968
        %v2970 = vpop.f32.mrb[0].mxu0
        %v2971 = vadd.f32 0.0, %v2970
        %2972 = vmatprep.mubr.f32.mxu0 %v2083
        %2973 = vmatmul.mubr.f32.gmra.mrb[0].mxu0 %v2082
        %v2974 = vpop.f32.mrb[0].mxu0
        %v2975 = vadd.f32 0.0, %v2974
        %v2976 = vpop.f32.mrb[0].mxu0
        %v2977 = vadd.f32 0.0, %v2976
        %2978 = vmatprep.mubr.f32.mxu0 %v2087
        %2979 = vmatmul.mubr.f32.gmra.mrb[0].mxu0 %v2086
        %v2980 = vpop.f32.mrb[0].mxu0
        %v2981 = vadd.f32 0.0, %v2980
        %v2982 = vpop.f32.mrb[0].mxu0
        %v2983 = vadd.f32 0.0, %v2982
        %2984 = vmatprep.mubr.f32.mxu0 %v2091
        %2985 = vmatmul.mubr.f32.gmra.mrb[0].mxu0 %v2090
        %v2986 = vpop.f32.mrb[0].mxu0
        %v2987 = vadd.f32 0.0, %v2986
        %v2988 = vpop.f32.mrb[0].mxu0
        %v2989 = vadd.f32 0.0, %v2988
        %2990 = vmatprep.mubr.f32.mxu0 %v2095
        %2991 = vmatmul.mubr.f32.gmra.mrb[0].mxu0 %v2094
        %v2992 = vpop.f32.mrb[0].mxu0
        %v2993 = vadd.f32 0.0, %v2992
        %v2994 = vpop.f32.mrb[0].mxu0
        %v2995 = vadd.f32 0.0, %v2994
        %2996 = vmatprep.mubr.f32.mxu0 %v2099
        %2997 = vmatmul.mubr.f32.gmra.mrb[0].mxu0 %v2098
        %v2998 = vpop.f32.mrb[0].mxu0
        %v2999 = vadd.f32 0.0, %v2998
        %v3000 = vpop.f32.mrb[0].mxu0
        %v3001 = vadd.f32 0.0, %v3000
        %3002 = vdwg.mxu0
        %3003 = vmatprep.subr.mxu0 %v2233
        %3004 = vmatpush1.msra.mxu0 %v2232
        %3005 = vmatprep.subr.mxu0 %v2237
        %3006 = vmatpush1.msra.mxu0 %v2236
        %3007 = vmatprep.subr.mxu0 %v2241
        %3008 = vmatpush1.msra.mxu0 %v2240
        %3009 = vmatprep.subr.mxu0 %v2245
        %3010 = vmatpush1.msra.mxu0 %v2244
        %3011 = vmatprep.subr.mxu0 %v2249
        %3012 = vmatpush1.msra.mxu0 %v2248
        %3013 = vmatprep.subr.mxu0 %v2253
        %3014 = vmatpush1.msra.mxu0 %v2252
        %3015 = vmatprep.subr.mxu0 %v2257
        %3016 = vmatpush1.msra.mxu0 %v2256
        %3017 = vmatprep.subr.mxu0 %v2261
        %3018 = vmatpush1.msra.mxu0 %v2260
        %3019 = vmatprep.subr.mxu0 %v2265
        %3020 = vmatpush1.msra.mxu0 %v2264
        %3021 = vmatprep.subr.mxu0 %v2269
        %3022 = vmatpush1.msra.mxu0 %v2268
        %3023 = vmatprep.subr.mxu0 %v2273
        %3024 = vmatpush1.msra.mxu0 %v2272
        %3025 = vmatprep.subr.mxu0 %v2277
        %3026 = vmatpush1.msra.mxu0 %v2276
        %3027 = vmatprep.subr.mxu0 %v2281
        %3028 = vmatpush1.msra.mxu0 %v2280
        %3029 = vmatprep.subr.mxu0 %v2285
        %3030 = vmatpush1.msra.mxu0 %v2284
        %3031 = vmatprep.subr.mxu0 %v2289
        %3032 = vmatpush1.msra.mxu0 %v2288
        %3033 = vmatprep.subr.mxu0 %v2293
        %3034 = vmatpush1.msra.mxu0 %v2292
        %3035 = vmatprep.subr.mxu0 %v2297
        %3036 = vmatpush1.msra.mxu0 %v2296
        %3037 = vmatprep.subr.mxu0 %v2301
        %3038 = vmatpush1.msra.mxu0 %v2300
        %3039 = vmatprep.subr.mxu0 %v2305
        %3040 = vmatpush1.msra.mxu0 %v2304
        %3041 = vmatprep.subr.mxu0 %v2309
        %3042 = vmatpush1.msra.mxu0 %v2308
        %3043 = vmatprep.subr.mxu0 %v2313
        %3044 = vmatpush1.msra.mxu0 %v2312
        %3045 = vmatprep.subr.mxu0 %v2317
        %3046 = vmatpush1.msra.mxu0 %v2316
        %3047 = vmatprep.subr.mxu0 %v2321
        %3048 = vmatpush1.msra.mxu0 %v2320
        %3049 = vmatprep.subr.mxu0 %v2325
        %3050 = vmatpush1.msra.mxu0 %v2324
        %3051 = vmatprep.subr.mxu0 %v2329
        %3052 = vmatpush1.msra.mxu0 %v2328
        %3053 = vmatprep.subr.mxu0 %v2333
        %3054 = vmatpush1.msra.mxu0 %v2332
        %3055 = vmatprep.subr.mxu0 %v2337
        %3056 = vmatpush1.msra.mxu0 %v2336
        %3057 = vmatprep.subr.mxu0 %v2341
        %3058 = vmatpush1.msra.mxu0 %v2340
        %3059 = vmatprep.subr.mxu0 %v2345
        %3060 = vmatpush1.msra.mxu0 %v2344
        %3061 = vmatprep.subr.mxu0 %v2349
        %3062 = vmatpush1.msra.mxu0 %v2348
        %3063 = vmatprep.subr.mxu0 %v2353
        %3064 = vmatpush1.msra.mxu0 %v2352
        %3065 = vmatprep.subr.mxu0 %v2357
        %3066 = vmatpush1.msra.mxu0 %v2356
        %3067 = vmatprep.mubr.f32.mxu0 %v2005
        %3068 = vmatmul.mubr.f32.gmra.mrb[0].mxu0 %v2004
        %v3069 = vpop.f32.mrb[0].mxu0
        %v3070 = vadd.f32 %v2855, %v3069
        %v3071 = vpop.f32.mrb[0].mxu0
        %v3072 = vadd.f32 %v2857, %v3071
        %3073 = vmatprep.mubr.f32.mxu0 %v2009
        %3074 = vmatmul.mubr.f32.gmra.mrb[0].mxu0 %v2008
        %v3075 = vpop.f32.mrb[0].mxu0
        %v3076 = vadd.f32 %v2861, %v3075
        %v3077 = vpop.f32.mrb[0].mxu0
        %v3078 = vadd.f32 %v2863, %v3077
        %3079 = vmatprep.mubr.f32.mxu0 %v2013
        %3080 = vmatmul.mubr.f32.gmra.mrb[0].mxu0 %v2012
        %v3081 = vpop.f32.mrb[0].mxu0
        %v3082 = vadd.f32 %v2867, %v3081
        %v3083 = vpop.f32.mrb[0].mxu0
        %v3084 = vadd.f32 %v2869, %v3083
        %3085 = vmatprep.mubr.f32.mxu0 %v2017
        %3086 = vmatmul.mubr.f32.gmra.mrb[0].mxu0 %v2016
        %v3087 = vpop.f32.mrb[0].mxu0
        %v3088 = vadd.f32 %v2873, %v3087
        %v3089 = vpop.f32.mrb[0].mxu0
        %v3090 = vadd.f32 %v2875, %v3089
        %3091 = vmatprep.mubr.f32.mxu0 %v2021
        %3092 = vmatmul.mubr.f32.gmra.mrb[0].mxu0 %v2020
        %v3093 = vpop.f32.mrb[0].mxu0
        %v3094 = vadd.f32 %v2879, %v3093
        %v3095 = vpop.f32.mrb[0].mxu0
        %v3096 = vadd.f32 %v2881, %v3095
        %3097 = vmatprep.mubr.f32.mxu0 %v2025
        %3098 = vmatmul.mubr.f32.gmra.mrb[0].mxu0 %v2024
        %v3099 = vpop.f32.mrb[0].mxu0
        %v3100 = vadd.f32 %v2885, %v3099
        %v3101 = vpop.f32.mrb[0].mxu0
        %v3102 = vadd.f32 %v2887, %v3101
        %3103 = vmatprep.mubr.f32.mxu0 %v2029
        %3104 = vmatmul.mubr.f32.gmra.mrb[0].mxu0 %v2028
        %v3105 = vpop.f32.mrb[0].mxu0
        %v3106 = vadd.f32 %v2891, %v3105
        %v3107 = vpop.f32.mrb[0].mxu0
        %v3108 = vadd.f32 %v2893, %v3107
        %3109 = vmatprep.mubr.f32.mxu0 %v2033
        %3110 = vmatmul.mubr.f32.gmra.mrb[0].mxu0 %v2032
        %v3111 = vpop.f32.mrb[0].mxu0
        %v3112 = vadd.f32 %v2897, %v3111
        %v3113 = vpop.f32.mrb[0].mxu0
        %v3114 = vadd.f32 %v2899, %v3113
        %3115 = vmatprep.mubr.f32.mxu0 %v2037
        %3116 = vmatmul.mubr.f32.gmra.mrb[0].mxu0 %v2036
        %v3117 = vpop.f32.mrb[0].mxu0
        %v3118 = vadd.f32 %v2903, %v3117
        %v3119 = vpop.f32.mrb[0].mxu0
        %v3120 = vadd.f32 %v2905, %v3119
        %3121 = vmatprep.mubr.f32.mxu0 %v2041
        %3122 = vmatmul.mubr.f32.gmra.mrb[0].mxu0 %v2040
        %v3123 = vpop.f32.mrb[0].mxu0
        %v3124 = vadd.f32 %v2909, %v3123
        %v3125 = vpop.f32.mrb[0].mxu0
        %v3126 = vadd.f32 %v2911, %v3125
        %3127 = vmatprep.mubr.f32.mxu0 %v2045
        %3128 = vmatmul.mubr.f32.gmra.mrb[0].mxu0 %v2044
        %v3129 = vpop.f32.mrb[0].mxu0
        %v3130 = vadd.f32 %v2915, %v3129
        %v3131 = vpop.f32.mrb[0].mxu0
        %v3132 = vadd.f32 %v2917, %v3131
        %3133 = vmatprep.mubr.f32.mxu0 %v2049
        %3134 = vmatmul.mubr.f32.gmra.mrb[0].mxu0 %v2048
        %v3135 = vpop.f32.mrb[0].mxu0
        %v3136 = vadd.f32 %v2921, %v3135
        %v3137 = vpop.f32.mrb[0].mxu0
        %v3138 = vadd.f32 %v2923, %v3137
        %3139 = vmatprep.mubr.f32.mxu0 %v2053
        %3140 = vmatmul.mubr.f32.gmra.mrb[0].mxu0 %v2052
        %v3141 = vpop.f32.mrb[0].mxu0
        %v3142 = vadd.f32 %v2927, %v3141
        %v3143 = vpop.f32.mrb[0].mxu0
        %v3144 = vadd.f32 %v2929, %v3143
        %3145 = vmatprep.mubr.f32.mxu0 %v2057
        %3146 = vmatmul.mubr.f32.gmra.mrb[0].mxu0 %v2056
        %v3147 = vpop.f32.mrb[0].mxu0
        %v3148 = vadd.f32 %v2933, %v3147
        %v3149 = vpop.f32.mrb[0].mxu0
        %v3150 = vadd.f32 %v2935, %v3149
        %3151 = vmatprep.mubr.f32.mxu0 %v2061
        %3152 = vmatmul.mubr.f32.gmra.mrb[0].mxu0 %v2060
        %v3153 = vpop.f32.mrb[0].mxu0
        %v3154 = vadd.f32 %v2939, %v3153
        %v3155 = vpop.f32.mrb[0].mxu0
        %v3156 = vadd.f32 %v2941, %v3155
        %3157 = vmatprep.mubr.f32.mxu0 %v2065
        %3158 = vmatmul.mubr.f32.gmra.mrb[0].mxu0 %v2064
        %v3159 = vpop.f32.mrb[0].mxu0
        %v3160 = vadd.f32 %v2945, %v3159
        %v3161 = vpop.f32.mrb[0].mxu0
        %v3162 = vadd.f32 %v2947, %v3161
        %3163 = vmatprep.mubr.f32.mxu0 %v2069
        %3164 = vmatmul.mubr.f32.gmra.mrb[0].mxu0 %v2068
        %v3165 = vpop.f32.mrb[0].mxu0
        %v3166 = vadd.f32 %v2951, %v3165
        %v3167 = vpop.f32.mrb[0].mxu0
        %v3168 = vadd.f32 %v2953, %v3167
        %3169 = vmatprep.mubr.f32.mxu0 %v2073
        %3170 = vmatmul.mubr.f32.gmra.mrb[0].mxu0 %v2072
        %v3171 = vpop.f32.mrb[0].mxu0
        %v3172 = vadd.f32 %v2957, %v3171
        %v3173 = vpop.f32.mrb[0].mxu0
        %v3174 = vadd.f32 %v2959, %v3173
        %3175 = vmatprep.mubr.f32.mxu0 %v2077
        %3176 = vmatmul.mubr.f32.gmra.mrb[0].mxu0 %v2076
        %v3177 = vpop.f32.mrb[0].mxu0
        %v3178 = vadd.f32 %v2963, %v3177
        %v3179 = vpop.f32.mrb[0].mxu0
        %v3180 = vadd.f32 %v2965, %v3179
        %3181 = vmatprep.mubr.f32.mxu0 %v2081
        %3182 = vmatmul.mubr.f32.gmra.mrb[0].mxu0 %v2080
        %v3183 = vpop.f32.mrb[0].mxu0
        %v3184 = vadd.f32 %v2969, %v3183
        %v3185 = vpop.f32.mrb[0].mxu0
        %v3186 = vadd.f32 %v2971, %v3185
        %3187 = vmatprep.mubr.f32.mxu0 %v2085
        %3188 = vmatmul.mubr.f32.gmra.mrb[0].mxu0 %v2084
        %v3189 = vpop.f32.mrb[0].mxu0
        %v3190 = vadd.f32 %v2975, %v3189
        %v3191 = vpop.f32.mrb[0].mxu0
        %v3192 = vadd.f32 %v2977, %v3191
        %3193 = vmatprep.mubr.f32.mxu0 %v2089
        %3194 = vmatmul.mubr.f32.gmra.mrb[0].mxu0 %v2088
        %v3195 = vpop.f32.mrb[0].mxu0
        %v3196 = vadd.f32 %v2981, %v3195
        %v3197 = vpop.f32.mrb[0].mxu0
        %v3198 = vadd.f32 %v2983, %v3197
        %3199 = vmatprep.mubr.f32.mxu0 %v2093
        %3200 = vmatmul.mubr.f32.gmra.mrb[0].mxu0 %v2092
        %v3201 = vpop.f32.mrb[0].mxu0
        %v3202 = vadd.f32 %v2987, %v3201
        %v3203 = vpop.f32.mrb[0].mxu0
        %v3204 = vadd.f32 %v2989, %v3203
        %3205 = vmatprep.mubr.f32.mxu0 %v2097
        %3206 = vmatmul.mubr.f32.gmra.mrb[0].mxu0 %v2096
        %v3207 = vpop.f32.mrb[0].mxu0
        %v3208 = vadd.f32 %v2993, %v3207
        %v3209 = vpop.f32.mrb[0].mxu0
        %v3210 = vadd.f32 %v2995, %v3209
        %3211 = vmatprep.mubr.f32.mxu0 %v2101
        %3212 = vmatmul.mubr.f32.gmra.mrb[0].mxu0 %v2100
        %v3213 = vpop.f32.mrb[0].mxu0
        %v3214 = vadd.f32 %v2999, %v3213
        %v3215 = vpop.f32.mrb[0].mxu0
        %v3216 = vadd.f32 %v3001, %v3215
        %3217 = vdwg.mxu0
        %p3218 = scmp.eq.s32.totalorder %s29, 0
        // Predicated region
        $region61: #{tpu_custom_call.1} parent=39 // pred_check
          %p3219 = pneg %p3218
        $region62: #{tpu_custom_call.1} parent=39 // pred_check_branch
          %3221 = sbr.rel (%p3219) target = $region64
        $region63: #{tpu_custom_call.1} parent=39 // pred_region
          %v3222 = vld [vmem:[#allocation10] sm:$0xf]
          %v3224 = vlaneseq
          %v3225 = vshrl.u32 %v3224, 7
          %v3226 = vsub.s32 0, %v3225
          %v3227 = vrot.slane %v3222, %v3226
          %v3228 = vlaneseq
          %v3229 = vshrl.u32 %v3228, 7
          %v3230 = vsub.s32 1, %v3229
          %v3231 = vrot.slane %v3222, %v3230
          %v3232 = vlaneseq
          %v3233 = vshrl.u32 %v3232, 7
          %v3234 = vsub.s32 2, %v3233
          %v3235 = vrot.slane %v3222, %v3234
          %v3236 = vlaneseq
          %v3237 = vshrl.u32 %v3236, 7
          %v3238 = vsub.s32 3, %v3237
          %v3239 = vrot.slane %v3222, %v3238
          %v3244 = vadd.f32 %v2640, %v3227
          %v3245 = vadd.f32 %v2642, %v3231
          %v3246 = vadd.f32 %v3070, %v3235
          %v3247 = vadd.f32 %v3072, %v3239
          %v3248 = vadd.f32 %v2646, %v3227
          %v3249 = vadd.f32 %v2648, %v3231
          %v3250 = vadd.f32 %v3076, %v3235
          %v3251 = vadd.f32 %v3078, %v3239
          %v3252 = vadd.f32 %v2652, %v3227
          %v3253 = vadd.f32 %v2654, %v3231
          %v3254 = vadd.f32 %v3082, %v3235
          %v3255 = vadd.f32 %v3084, %v3239
          %v3256 = vadd.f32 %v2658, %v3227
          %v3257 = vadd.f32 %v2660, %v3231
          %v3258 = vadd.f32 %v3088, %v3235
          %v3259 = vadd.f32 %v3090, %v3239
          %v3260 = vadd.f32 %v2664, %v3227
          %v3261 = vadd.f32 %v2666, %v3231
          %v3262 = vadd.f32 %v3094, %v3235
          %v3263 = vadd.f32 %v3096, %v3239
          %v3264 = vadd.f32 %v2670, %v3227
          %v3265 = vadd.f32 %v2672, %v3231
          %v3266 = vadd.f32 %v3100, %v3235
          %v3267 = vadd.f32 %v3102, %v3239
          %v3268 = vadd.f32 %v2676, %v3227
          %v3269 = vadd.f32 %v2678, %v3231
          %v3270 = vadd.f32 %v3106, %v3235
          %v3271 = vadd.f32 %v3108, %v3239
          %v3272 = vadd.f32 %v2682, %v3227
          %v3273 = vadd.f32 %v2684, %v3231
          %v3274 = vadd.f32 %v3112, %v3235
          %v3275 = vadd.f32 %v3114, %v3239
          %v3276 = vadd.f32 %v2688, %v3227
          %v3277 = vadd.f32 %v2690, %v3231
          %v3278 = vadd.f32 %v3118, %v3235
          %v3279 = vadd.f32 %v3120, %v3239
          %v3280 = vadd.f32 %v2694, %v3227
          %v3281 = vadd.f32 %v2696, %v3231
          %v3282 = vadd.f32 %v3124, %v3235
          %v3283 = vadd.f32 %v3126, %v3239
          %v3284 = vadd.f32 %v2700, %v3227
          %v3285 = vadd.f32 %v2702, %v3231
          %v3286 = vadd.f32 %v3130, %v3235
          %v3287 = vadd.f32 %v3132, %v3239
          %v3288 = vadd.f32 %v2706, %v3227
          %v3289 = vadd.f32 %v2708, %v3231
          %v3290 = vadd.f32 %v3136, %v3235
          %v3291 = vadd.f32 %v3138, %v3239
          %v3292 = vadd.f32 %v2712, %v3227
          %v3293 = vadd.f32 %v2714, %v3231
          %v3294 = vadd.f32 %v3142, %v3235
          %v3295 = vadd.f32 %v3144, %v3239
          %v3296 = vadd.f32 %v2718, %v3227
          %v3297 = vadd.f32 %v2720, %v3231
          %v3298 = vadd.f32 %v3148, %v3235
          %v3299 = vadd.f32 %v3150, %v3239
          %v3300 = vadd.f32 %v2724, %v3227
          %v3301 = vadd.f32 %v2726, %v3231
          %v3302 = vadd.f32 %v3154, %v3235
          %v3303 = vadd.f32 %v3156, %v3239
          %v3304 = vadd.f32 %v2730, %v3227
          %v3305 = vadd.f32 %v2732, %v3231
          %v3306 = vadd.f32 %v3160, %v3235
          %v3307 = vadd.f32 %v3162, %v3239
          %v3308 = vadd.f32 %v2736, %v3227
          %v3309 = vadd.f32 %v2738, %v3231
          %v3310 = vadd.f32 %v3166, %v3235
          %v3311 = vadd.f32 %v3168, %v3239
          %v3312 = vadd.f32 %v2742, %v3227
          %v3313 = vadd.f32 %v2744, %v3231
          %v3314 = vadd.f32 %v3172, %v3235
          %v3315 = vadd.f32 %v3174, %v3239
          %v3316 = vadd.f32 %v2748, %v3227
          %v3317 = vadd.f32 %v2750, %v3231
          %v3318 = vadd.f32 %v3178, %v3235
          %v3319 = vadd.f32 %v3180, %v3239
          %v3320 = vadd.f32 %v2754, %v3227
          %v3321 = vadd.f32 %v2756, %v3231
          %v3322 = vadd.f32 %v3184, %v3235
          %v3323 = vadd.f32 %v3186, %v3239
          %v3324 = vadd.f32 %v2760, %v3227
          %v3325 = vadd.f32 %v2762, %v3231
          %v3326 = vadd.f32 %v3190, %v3235
          %v3327 = vadd.f32 %v3192, %v3239
          %v3328 = vadd.f32 %v2766, %v3227
          %v3329 = vadd.f32 %v2768, %v3231
          %v3330 = vadd.f32 %v3196, %v3235
          %v3331 = vadd.f32 %v3198, %v3239
          %v3332 = vadd.f32 %v2772, %v3227
          %v3333 = vadd.f32 %v2774, %v3231
          %v3334 = vadd.f32 %v3202, %v3235
          %v3335 = vadd.f32 %v3204, %v3239
          %v3336 = vadd.f32 %v2778, %v3227
          %v3337 = vadd.f32 %v2780, %v3231
          %v3338 = vadd.f32 %v3208, %v3235
          %v3339 = vadd.f32 %v3210, %v3239
          %v3340 = vadd.f32 %v2784, %v3227
          %v3341 = vadd.f32 %v2786, %v3231
          %v3342 = vadd.f32 %v3214, %v3235
          %v3343 = vadd.f32 %v3216, %v3239
          %3344 = vst [vmem:[#allocation11] sm:$0xff] %v3244
          %3345 = vst [vmem:[#allocation11 + $0x8] sm:$0xff] %v3245
          %3346 = vst [vmem:[#allocation11 + $0x10] sm:$0xff] %v3246
          %3347 = vst [vmem:[#allocation11 + $0x18] sm:$0xff] %v3247
          %3348 = vst [vmem:[#allocation11 + $0x20] sm:$0xff] %v3248
          %3349 = vst [vmem:[#allocation11 + $0x28] sm:$0xff] %v3249
          %3350 = vst [vmem:[#allocation11 + $0x30] sm:$0xff] %v3250
          %3351 = vst [vmem:[#allocation11 + $0x38] sm:$0xff] %v3251
          %3352 = vst [vmem:[#allocation11 + $0x40] sm:$0xff] %v3252
          %3353 = vst [vmem:[#allocation11 + $0x48] sm:$0xff] %v3253
          %3354 = vst [vmem:[#allocation11 + $0x50] sm:$0xff] %v3254
          %3355 = vst [vmem:[#allocation11 + $0x58] sm:$0xff] %v3255
          %3356 = vst [vmem:[#allocation11 + $0x60] sm:$0xff] %v3256
          %3357 = vst [vmem:[#allocation11 + $0x68] sm:$0xff] %v3257
          %3358 = vst [vmem:[#allocation11 + $0x70] sm:$0xff] %v3258
          %3359 = vst [vmem:[#allocation11 + $0x78] sm:$0xff] %v3259
          %3360 = vst [vmem:[#allocation11 + $0x80] sm:$0xff] %v3260
          %3361 = vst [vmem:[#allocation11 + $0x88] sm:$0xff] %v3261
          %3362 = vst [vmem:[#allocation11 + $0x90] sm:$0xff] %v3262
          %3363 = vst [vmem:[#allocation11 + $0x98] sm:$0xff] %v3263
          %3364 = vst [vmem:[#allocation11 + $0xa0] sm:$0xff] %v3264
          %3365 = vst [vmem:[#allocation11 + $0xa8] sm:$0xff] %v3265
          %3366 = vst [vmem:[#allocation11 + $0xb0] sm:$0xff] %v3266
          %3367 = vst [vmem:[#allocation11 + $0xb8] sm:$0xff] %v3267
          %3368 = vst [vmem:[#allocation11 + $0xc0] sm:$0xff] %v3268
          %3369 = vst [vmem:[#allocation11 + $0xc8] sm:$0xff] %v3269
          %3370 = vst [vmem:[#allocation11 + $0xd0] sm:$0xff] %v3270
          %3371 = vst [vmem:[#allocation11 + $0xd8] sm:$0xff] %v3271
          %3372 = vst [vmem:[#allocation11 + $0xe0] sm:$0xff] %v3272
          %3373 = vst [vmem:[#allocation11 + $0xe8] sm:$0xff] %v3273
          %3374 = vst [vmem:[#allocation11 + $0xf0] sm:$0xff] %v3274
          %3375 = vst [vmem:[#allocation11 + $0xf8] sm:$0xff] %v3275
          %3376 = vst [vmem:[#allocation11 + $0x100] sm:$0xff] %v3276
          %3377 = vst [vmem:[#allocation11 + $0x108] sm:$0xff] %v3277
          %3378 = vst [vmem:[#allocation11 + $0x110] sm:$0xff] %v3278
          %3379 = vst [vmem:[#allocation11 + $0x118] sm:$0xff] %v3279
          %3380 = vst [vmem:[#allocation11 + $0x120] sm:$0xff] %v3280
          %3381 = vst [vmem:[#allocation11 + $0x128] sm:$0xff] %v3281
          %3382 = vst [vmem:[#allocation11 + $0x130] sm:$0xff] %v3282
          %3383 = vst [vmem:[#allocation11 + $0x138] sm:$0xff] %v3283
          %3384 = vst [vmem:[#allocation11 + $0x140] sm:$0xff] %v3284
          %3385 = vst [vmem:[#allocation11 + $0x148] sm:$0xff] %v3285
          %3386 = vst [vmem:[#allocation11 + $0x150] sm:$0xff] %v3286
          %3387 = vst [vmem:[#allocation11 + $0x158] sm:$0xff] %v3287
          %3388 = vst [vmem:[#allocation11 + $0x160] sm:$0xff] %v3288
          %3389 = vst [vmem:[#allocation11 + $0x168] sm:$0xff] %v3289
          %3390 = vst [vmem:[#allocation11 + $0x170] sm:$0xff] %v3290
          %3391 = vst [vmem:[#allocation11 + $0x178] sm:$0xff] %v3291
          %3392 = vst [vmem:[#allocation11 + $0x180] sm:$0xff] %v3292
          %3393 = vst [vmem:[#allocation11 + $0x188] sm:$0xff] %v3293
          %3394 = vst [vmem:[#allocation11 + $0x190] sm:$0xff] %v3294
          %3395 = vst [vmem:[#allocation11 + $0x198] sm:$0xff] %v3295
          %3396 = vst [vmem:[#allocation11 + $0x1a0] sm:$0xff] %v3296
          %3397 = vst [vmem:[#allocation11 + $0x1a8] sm:$0xff] %v3297
          %3398 = vst [vmem:[#allocation11 + $0x1b0] sm:$0xff] %v3298
          %3399 = vst [vmem:[#allocation11 + $0x1b8] sm:$0xff] %v3299
          %3400 = vst [vmem:[#allocation11 + $0x1c0] sm:$0xff] %v3300
          %3401 = vst [vmem:[#allocation11 + $0x1c8] sm:$0xff] %v3301
          %3402 = vst [vmem:[#allocation11 + $0x1d0] sm:$0xff] %v3302
          %3403 = vst [vmem:[#allocation11 + $0x1d8] sm:$0xff] %v3303
          %3404 = vst [vmem:[#allocation11 + $0x1e0] sm:$0xff] %v3304
          %3405 = vst [vmem:[#allocation11 + $0x1e8] sm:$0xff] %v3305
          %3406 = vst [vmem:[#allocation11 + $0x1f0] sm:$0xff] %v3306
          %3407 = vst [vmem:[#allocation11 + $0x1f8] sm:$0xff] %v3307
          %3408 = vst [vmem:[#allocation11 + $0x200] sm:$0xff] %v3308
          %3409 = vst [vmem:[#allocation11 + $0x208] sm:$0xff] %v3309
          %3410 = vst [vmem:[#allocation11 + $0x210] sm:$0xff] %v3310
          %3411 = vst [vmem:[#allocation11 + $0x218] sm:$0xff] %v3311
          %3412 = vst [vmem:[#allocation11 + $0x220] sm:$0xff] %v3312
          %3413 = vst [vmem:[#allocation11 + $0x228] sm:$0xff] %v3313
          %3414 = vst [vmem:[#allocation11 + $0x230] sm:$0xff] %v3314
          %3415 = vst [vmem:[#allocation11 + $0x238] sm:$0xff] %v3315
          %3416 = vst [vmem:[#allocation11 + $0x240] sm:$0xff] %v3316
          %3417 = vst [vmem:[#allocation11 + $0x248] sm:$0xff] %v3317
          %3418 = vst [vmem:[#allocation11 + $0x250] sm:$0xff] %v3318
          %3419 = vst [vmem:[#allocation11 + $0x258] sm:$0xff] %v3319
          %3420 = vst [vmem:[#allocation11 + $0x260] sm:$0xff] %v3320
          %3421 = vst [vmem:[#allocation11 + $0x268] sm:$0xff] %v3321
          %3422 = vst [vmem:[#allocation11 + $0x270] sm:$0xff] %v3322
          %3423 = vst [vmem:[#allocation11 + $0x278] sm:$0xff] %v3323
          %3424 = vst [vmem:[#allocation11 + $0x280] sm:$0xff] %v3324
          %3425 = vst [vmem:[#allocation11 + $0x288] sm:$0xff] %v3325
          %3426 = vst [vmem:[#allocation11 + $0x290] sm:$0xff] %v3326
          %3427 = vst [vmem:[#allocation11 + $0x298] sm:$0xff] %v3327
          %3428 = vst [vmem:[#allocation11 + $0x2a0] sm:$0xff] %v3328
          %3429 = vst [vmem:[#allocation11 + $0x2a8] sm:$0xff] %v3329
          %3430 = vst [vmem:[#allocation11 + $0x2b0] sm:$0xff] %v3330
          %3431 = vst [vmem:[#allocation11 + $0x2b8] sm:$0xff] %v3331
          %3432 = vst [vmem:[#allocation11 + $0x2c0] sm:$0xff] %v3332
          %3433 = vst [vmem:[#allocation11 + $0x2c8] sm:$0xff] %v3333
          %3434 = vst [vmem:[#allocation11 + $0x2d0] sm:$0xff] %v3334
          %3435 = vst [vmem:[#allocation11 + $0x2d8] sm:$0xff] %v3335
          %3436 = vst [vmem:[#allocation11 + $0x2e0] sm:$0xff] %v3336
          %3437 = vst [vmem:[#allocation11 + $0x2e8] sm:$0xff] %v3337
          %3438 = vst [vmem:[#allocation11 + $0x2f0] sm:$0xff] %v3338
          %3439 = vst [vmem:[#allocation11 + $0x2f8] sm:$0xff] %v3339
          %3440 = vst [vmem:[#allocation11 + $0x300] sm:$0xff] %v3340
          %3441 = vst [vmem:[#allocation11 + $0x308] sm:$0xff] %v3341
          %3442 = vst [vmem:[#allocation11 + $0x310] sm:$0xff] %v3342
          %3443 = vst [vmem:[#allocation11 + $0x318] sm:$0xff] %v3343
        $region64: #{tpu_custom_call.1} parent=39 // pred_fallthru
          _
        %p3444 = scmp.gt.s32.totalorder %s29, 0
        // Predicated region
        $region65: #{tpu_custom_call.1} parent=39 // pred_check
          %p3445 = pneg %p3444
        $region66: #{tpu_custom_call.1} parent=39 // pred_check_branch
          %3447 = sbr.rel (%p3445) target = $region68
        $region67: #{tpu_custom_call.1} parent=39 // pred_region
          %v3448 = vld [vmem:[#allocation11] sm:$0xff]
          %v3449 = vld [vmem:[#allocation11 + $0x8] sm:$0xff]
          %v3450 = vld [vmem:[#allocation11 + $0x10] sm:$0xff]
          %v3451 = vld [vmem:[#allocation11 + $0x18] sm:$0xff]
          %v3452 = vld [vmem:[#allocation11 + $0x20] sm:$0xff]
          %v3453 = vld [vmem:[#allocation11 + $0x28] sm:$0xff]
          %v3454 = vld [vmem:[#allocation11 + $0x30] sm:$0xff]
          %v3455 = vld [vmem:[#allocation11 + $0x38] sm:$0xff]
          %v3456 = vld [vmem:[#allocation11 + $0x40] sm:$0xff]
          %v3457 = vld [vmem:[#allocation11 + $0x48] sm:$0xff]
          %v3458 = vld [vmem:[#allocation11 + $0x50] sm:$0xff]
          %v3459 = vld [vmem:[#allocation11 + $0x58] sm:$0xff]
          %v3460 = vld [vmem:[#allocation11 + $0x60] sm:$0xff]
          %v3461 = vld [vmem:[#allocation11 + $0x68] sm:$0xff]
          %v3462 = vld [vmem:[#allocation11 + $0x70] sm:$0xff]
          %v3463 = vld [vmem:[#allocation11 + $0x78] sm:$0xff]
          %v3464 = vld [vmem:[#allocation11 + $0x80] sm:$0xff]
          %v3465 = vld [vmem:[#allocation11 + $0x88] sm:$0xff]
          %v3466 = vld [vmem:[#allocation11 + $0x90] sm:$0xff]
          %v3467 = vld [vmem:[#allocation11 + $0x98] sm:$0xff]
          %v3468 = vld [vmem:[#allocation11 + $0xa0] sm:$0xff]
          %v3469 = vld [vmem:[#allocation11 + $0xa8] sm:$0xff]
          %v3470 = vld [vmem:[#allocation11 + $0xb0] sm:$0xff]
          %v3471 = vld [vmem:[#allocation11 + $0xb8] sm:$0xff]
          %v3472 = vld [vmem:[#allocation11 + $0xc0] sm:$0xff]
          %v3473 = vld [vmem:[#allocation11 + $0xc8] sm:$0xff]
          %v3474 = vld [vmem:[#allocation11 + $0xd0] sm:$0xff]
          %v3475 = vld [vmem:[#allocation11 + $0xd8] sm:$0xff]
          %v3476 = vld [vmem:[#allocation11 + $0xe0] sm:$0xff]
          %v3477 = vld [vmem:[#allocation11 + $0xe8] sm:$0xff]
          %v3478 = vld [vmem:[#allocation11 + $0xf0] sm:$0xff]
          %v3479 = vld [vmem:[#allocation11 + $0xf8] sm:$0xff]
          %v3480 = vld [vmem:[#allocation11 + $0x100] sm:$0xff]
          %v3481 = vld [vmem:[#allocation11 + $0x108] sm:$0xff]
          %v3482 = vld [vmem:[#allocation11 + $0x110] sm:$0xff]
          %v3483 = vld [vmem:[#allocation11 + $0x118] sm:$0xff]
          %v3484 = vld [vmem:[#allocation11 + $0x120] sm:$0xff]
          %v3485 = vld [vmem:[#allocation11 + $0x128] sm:$0xff]
          %v3486 = vld [vmem:[#allocation11 + $0x130] sm:$0xff]
          %v3487 = vld [vmem:[#allocation11 + $0x138] sm:$0xff]
          %v3488 = vld [vmem:[#allocation11 + $0x140] sm:$0xff]
          %v3489 = vld [vmem:[#allocation11 + $0x148] sm:$0xff]
          %v3490 = vld [vmem:[#allocation11 + $0x150] sm:$0xff]
          %v3491 = vld [vmem:[#allocation11 + $0x158] sm:$0xff]
          %v3492 = vld [vmem:[#allocation11 + $0x160] sm:$0xff]
          %v3493 = vld [vmem:[#allocation11 + $0x168] sm:$0xff]
          %v3494 = vld [vmem:[#allocation11 + $0x170] sm:$0xff]
          %v3495 = vld [vmem:[#allocation11 + $0x178] sm:$0xff]
          %v3496 = vld [vmem:[#allocation11 + $0x180] sm:$0xff]
          %v3497 = vld [vmem:[#allocation11 + $0x188] sm:$0xff]
          %v3498 = vld [vmem:[#allocation11 + $0x190] sm:$0xff]
          %v3499 = vld [vmem:[#allocation11 + $0x198] sm:$0xff]
          %v3500 = vld [vmem:[#allocation11 + $0x1a0] sm:$0xff]
          %v3501 = vld [vmem:[#allocation11 + $0x1a8] sm:$0xff]
          %v3502 = vld [vmem:[#allocation11 + $0x1b0] sm:$0xff]
          %v3503 = vld [vmem:[#allocation11 + $0x1b8] sm:$0xff]
          %v3504 = vld [vmem:[#allocation11 + $0x1c0] sm:$0xff]
          %v3505 = vld [vmem:[#allocation11 + $0x1c8] sm:$0xff]
          %v3506 = vld [vmem:[#allocation11 + $0x1d0] sm:$0xff]
          %v3507 = vld [vmem:[#allocation11 + $0x1d8] sm:$0xff]
          %v3508 = vld [vmem:[#allocation11 + $0x1e0] sm:$0xff]
          %v3509 = vld [vmem:[#allocation11 + $0x1e8] sm:$0xff]
          %v3510 = vld [vmem:[#allocation11 + $0x1f0] sm:$0xff]
          %v3511 = vld [vmem:[#allocation11 + $0x1f8] sm:$0xff]
          %v3512 = vld [vmem:[#allocation11 + $0x200] sm:$0xff]
          %v3513 = vld [vmem:[#allocation11 + $0x208] sm:$0xff]
          %v3514 = vld [vmem:[#allocation11 + $0x210] sm:$0xff]
          %v3515 = vld [vmem:[#allocation11 + $0x218] sm:$0xff]
          %v3516 = vld [vmem:[#allocation11 + $0x220] sm:$0xff]
          %v3517 = vld [vmem:[#allocation11 + $0x228] sm:$0xff]
          %v3518 = vld [vmem:[#allocation11 + $0x230] sm:$0xff]
          %v3519 = vld [vmem:[#allocation11 + $0x238] sm:$0xff]
          %v3520 = vld [vmem:[#allocation11 + $0x240] sm:$0xff]
          %v3521 = vld [vmem:[#allocation11 + $0x248] sm:$0xff]
          %v3522 = vld [vmem:[#allocation11 + $0x250] sm:$0xff]
          %v3523 = vld [vmem:[#allocation11 + $0x258] sm:$0xff]
          %v3524 = vld [vmem:[#allocation11 + $0x260] sm:$0xff]
          %v3525 = vld [vmem:[#allocation11 + $0x268] sm:$0xff]
          %v3526 = vld [vmem:[#allocation11 + $0x270] sm:$0xff]
          %v3527 = vld [vmem:[#allocation11 + $0x278] sm:$0xff]
          %v3528 = vld [vmem:[#allocation11 + $0x280] sm:$0xff]
          %v3529 = vld [vmem:[#allocation11 + $0x288] sm:$0xff]
          %v3530 = vld [vmem:[#allocation11 + $0x290] sm:$0xff]
          %v3531 = vld [vmem:[#allocation11 + $0x298] sm:$0xff]
          %v3532 = vld [vmem:[#allocation11 + $0x2a0] sm:$0xff]
          %v3533 = vld [vmem:[#allocation11 + $0x2a8] sm:$0xff]
          %v3534 = vld [vmem:[#allocation11 + $0x2b0] sm:$0xff]
          %v3535 = vld [vmem:[#allocation11 + $0x2b8] sm:$0xff]
          %v3536 = vld [vmem:[#allocation11 + $0x2c0] sm:$0xff]
          %v3537 = vld [vmem:[#allocation11 + $0x2c8] sm:$0xff]
          %v3538 = vld [vmem:[#allocation11 + $0x2d0] sm:$0xff]
          %v3539 = vld [vmem:[#allocation11 + $0x2d8] sm:$0xff]
          %v3540 = vld [vmem:[#allocation11 + $0x2e0] sm:$0xff]
          %v3541 = vld [vmem:[#allocation11 + $0x2e8] sm:$0xff]
          %v3542 = vld [vmem:[#allocation11 + $0x2f0] sm:$0xff]
          %v3543 = vld [vmem:[#allocation11 + $0x2f8] sm:$0xff]
          %v3544 = vld [vmem:[#allocation11 + $0x300] sm:$0xff]
          %v3545 = vld [vmem:[#allocation11 + $0x308] sm:$0xff]
          %v3546 = vld [vmem:[#allocation11 + $0x310] sm:$0xff]
          %v3547 = vld [vmem:[#allocation11 + $0x318] sm:$0xff]
          %v3548 = vadd.f32 %v3448, %v2640
          %v3549 = vadd.f32 %v3449, %v2642
          %v3550 = vadd.f32 %v3450, %v3070
          %v3551 = vadd.f32 %v3451, %v3072
          %v3552 = vadd.f32 %v3452, %v2646
          %v3553 = vadd.f32 %v3453, %v2648
          %v3554 = vadd.f32 %v3454, %v3076
          %v3555 = vadd.f32 %v3455, %v3078
          %v3556 = vadd.f32 %v3456, %v2652
          %v3557 = vadd.f32 %v3457, %v2654
          %v3558 = vadd.f32 %v3458, %v3082
          %v3559 = vadd.f32 %v3459, %v3084
          %v3560 = vadd.f32 %v3460, %v2658
          %v3561 = vadd.f32 %v3461, %v2660
          %v3562 = vadd.f32 %v3462, %v3088
          %v3563 = vadd.f32 %v3463, %v3090
          %v3564 = vadd.f32 %v3464, %v2664
          %v3565 = vadd.f32 %v3465, %v2666
          %v3566 = vadd.f32 %v3466, %v3094
          %v3567 = vadd.f32 %v3467, %v3096
          %v3568 = vadd.f32 %v3468, %v2670
          %v3569 = vadd.f32 %v3469, %v2672
          %v3570 = vadd.f32 %v3470, %v3100
          %v3571 = vadd.f32 %v3471, %v3102
          %v3572 = vadd.f32 %v3472, %v2676
          %v3573 = vadd.f32 %v3473, %v2678
          %v3574 = vadd.f32 %v3474, %v3106
          %v3575 = vadd.f32 %v3475, %v3108
          %v3576 = vadd.f32 %v3476, %v2682
          %v3577 = vadd.f32 %v3477, %v2684
          %v3578 = vadd.f32 %v3478, %v3112
          %v3579 = vadd.f32 %v3479, %v3114
          %v3580 = vadd.f32 %v3480, %v2688
          %v3581 = vadd.f32 %v3481, %v2690
          %v3582 = vadd.f32 %v3482, %v3118
          %v3583 = vadd.f32 %v3483, %v3120
          %v3584 = vadd.f32 %v3484, %v2694
          %v3585 = vadd.f32 %v3485, %v2696
          %v3586 = vadd.f32 %v3486, %v3124
          %v3587 = vadd.f32 %v3487, %v3126
          %v3588 = vadd.f32 %v3488, %v2700
          %v3589 = vadd.f32 %v3489, %v2702
          %v3590 = vadd.f32 %v3490, %v3130
          %v3591 = vadd.f32 %v3491, %v3132
          %v3592 = vadd.f32 %v3492, %v2706
          %v3593 = vadd.f32 %v3493, %v2708
          %v3594 = vadd.f32 %v3494, %v3136
          %v3595 = vadd.f32 %v3495, %v3138
          %v3596 = vadd.f32 %v3496, %v2712
          %v3597 = vadd.f32 %v3497, %v2714
          %v3598 = vadd.f32 %v3498, %v3142
          %v3599 = vadd.f32 %v3499, %v3144
          %v3600 = vadd.f32 %v3500, %v2718
          %v3601 = vadd.f32 %v3501, %v2720
          %v3602 = vadd.f32 %v3502, %v3148
          %v3603 = vadd.f32 %v3503, %v3150
          %v3604 = vadd.f32 %v3504, %v2724
          %v3605 = vadd.f32 %v3505, %v2726
          %v3606 = vadd.f32 %v3506, %v3154
          %v3607 = vadd.f32 %v3507, %v3156
          %v3608 = vadd.f32 %v3508, %v2730
          %v3609 = vadd.f32 %v3509, %v2732
          %v3610 = vadd.f32 %v3510, %v3160
          %v3611 = vadd.f32 %v3511, %v3162
          %v3612 = vadd.f32 %v3512, %v2736
          %v3613 = vadd.f32 %v3513, %v2738
          %v3614 = vadd.f32 %v3514, %v3166
          %v3615 = vadd.f32 %v3515, %v3168
          %v3616 = vadd.f32 %v3516, %v2742
          %v3617 = vadd.f32 %v3517, %v2744
          %v3618 = vadd.f32 %v3518, %v3172
          %v3619 = vadd.f32 %v3519, %v3174
          %v3620 = vadd.f32 %v3520, %v2748
          %v3621 = vadd.f32 %v3521, %v2750
          %v3622 = vadd.f32 %v3522, %v3178
          %v3623 = vadd.f32 %v3523, %v3180
          %v3624 = vadd.f32 %v3524, %v2754
          %v3625 = vadd.f32 %v3525, %v2756
          %v3626 = vadd.f32 %v3526, %v3184
          %v3627 = vadd.f32 %v3527, %v3186
          %v3628 = vadd.f32 %v3528, %v2760
          %v3629 = vadd.f32 %v3529, %v2762
          %v3630 = vadd.f32 %v3530, %v3190
          %v3631 = vadd.f32 %v3531, %v3192
          %v3632 = vadd.f32 %v3532, %v2766
          %v3633 = vadd.f32 %v3533, %v2768
          %v3634 = vadd.f32 %v3534, %v3196
          %v3635 = vadd.f32 %v3535, %v3198
          %v3636 = vadd.f32 %v3536, %v2772
          %v3637 = vadd.f32 %v3537, %v2774
          %v3638 = vadd.f32 %v3538, %v3202
          %v3639 = vadd.f32 %v3539, %v3204
          %v3640 = vadd.f32 %v3540, %v2778
          %v3641 = vadd.f32 %v3541, %v2780
          %v3642 = vadd.f32 %v3542, %v3208
          %v3643 = vadd.f32 %v3543, %v3210
          %v3644 = vadd.f32 %v3544, %v2784
          %v3645 = vadd.f32 %v3545, %v2786
          %v3646 = vadd.f32 %v3546, %v3214
          %v3647 = vadd.f32 %v3547, %v3216
          %3648 = vst [vmem:[#allocation11] sm:$0xff] %v3548
          %3649 = vst [vmem:[#allocation11 + $0x8] sm:$0xff] %v3549
          %3650 = vst [vmem:[#allocation11 + $0x10] sm:$0xff] %v3550
          %3651 = vst [vmem:[#allocation11 + $0x18] sm:$0xff] %v3551
          %3652 = vst [vmem:[#allocation11 + $0x20] sm:$0xff] %v3552
          %3653 = vst [vmem:[#allocation11 + $0x28] sm:$0xff] %v3553
          %3654 = vst [vmem:[#allocation11 + $0x30] sm:$0xff] %v3554
          %3655 = vst [vmem:[#allocation11 + $0x38] sm:$0xff] %v3555
          %3656 = vst [vmem:[#allocation11 + $0x40] sm:$0xff] %v3556
          %3657 = vst [vmem:[#allocation11 + $0x48] sm:$0xff] %v3557
          %3658 = vst [vmem:[#allocation11 + $0x50] sm:$0xff] %v3558
          %3659 = vst [vmem:[#allocation11 + $0x58] sm:$0xff] %v3559
          %3660 = vst [vmem:[#allocation11 + $0x60] sm:$0xff] %v3560
          %3661 = vst [vmem:[#allocation11 + $0x68] sm:$0xff] %v3561
          %3662 = vst [vmem:[#allocation11 + $0x70] sm:$0xff] %v3562
          %3663 = vst [vmem:[#allocation11 + $0x78] sm:$0xff] %v3563
          %3664 = vst [vmem:[#allocation11 + $0x80] sm:$0xff] %v3564
          %3665 = vst [vmem:[#allocation11 + $0x88] sm:$0xff] %v3565
          %3666 = vst [vmem:[#allocation11 + $0x90] sm:$0xff] %v3566
          %3667 = vst [vmem:[#allocation11 + $0x98] sm:$0xff] %v3567
          %3668 = vst [vmem:[#allocation11 + $0xa0] sm:$0xff] %v3568
          %3669 = vst [vmem:[#allocation11 + $0xa8] sm:$0xff] %v3569
          %3670 = vst [vmem:[#allocation11 + $0xb0] sm:$0xff] %v3570
          %3671 = vst [vmem:[#allocation11 + $0xb8] sm:$0xff] %v3571
          %3672 = vst [vmem:[#allocation11 + $0xc0] sm:$0xff] %v3572
          %3673 = vst [vmem:[#allocation11 + $0xc8] sm:$0xff] %v3573
          %3674 = vst [vmem:[#allocation11 + $0xd0] sm:$0xff] %v3574
          %3675 = vst [vmem:[#allocation11 + $0xd8] sm:$0xff] %v3575
          %3676 = vst [vmem:[#allocation11 + $0xe0] sm:$0xff] %v3576
          %3677 = vst [vmem:[#allocation11 + $0xe8] sm:$0xff] %v3577
          %3678 = vst [vmem:[#allocation11 + $0xf0] sm:$0xff] %v3578
          %3679 = vst [vmem:[#allocation11 + $0xf8] sm:$0xff] %v3579
          %3680 = vst [vmem:[#allocation11 + $0x100] sm:$0xff] %v3580
          %3681 = vst [vmem:[#allocation11 + $0x108] sm:$0xff] %v3581
          %3682 = vst [vmem:[#allocation11 + $0x110] sm:$0xff] %v3582
          %3683 = vst [vmem:[#allocation11 + $0x118] sm:$0xff] %v3583
          %3684 = vst [vmem:[#allocation11 + $0x120] sm:$0xff] %v3584
          %3685 = vst [vmem:[#allocation11 + $0x128] sm:$0xff] %v3585
          %3686 = vst [vmem:[#allocation11 + $0x130] sm:$0xff] %v3586
          %3687 = vst [vmem:[#allocation11 + $0x138] sm:$0xff] %v3587
          %3688 = vst [vmem:[#allocation11 + $0x140] sm:$0xff] %v3588
          %3689 = vst [vmem:[#allocation11 + $0x148] sm:$0xff] %v3589
          %3690 = vst [vmem:[#allocation11 + $0x150] sm:$0xff] %v3590
          %3691 = vst [vmem:[#allocation11 + $0x158] sm:$0xff] %v3591
          %3692 = vst [vmem:[#allocation11 + $0x160] sm:$0xff] %v3592
          %3693 = vst [vmem:[#allocation11 + $0x168] sm:$0xff] %v3593
          %3694 = vst [vmem:[#allocation11 + $0x170] sm:$0xff] %v3594
          %3695 = vst [vmem:[#allocation11 + $0x178] sm:$0xff] %v3595
          %3696 = vst [vmem:[#allocation11 + $0x180] sm:$0xff] %v3596
          %3697 = vst [vmem:[#allocation11 + $0x188] sm:$0xff] %v3597
          %3698 = vst [vmem:[#allocation11 + $0x190] sm:$0xff] %v3598
          %3699 = vst [vmem:[#allocation11 + $0x198] sm:$0xff] %v3599
          %3700 = vst [vmem:[#allocation11 + $0x1a0] sm:$0xff] %v3600
          %3701 = vst [vmem:[#allocation11 + $0x1a8] sm:$0xff] %v3601
          %3702 = vst [vmem:[#allocation11 + $0x1b0] sm:$0xff] %v3602
          %3703 = vst [vmem:[#allocation11 + $0x1b8] sm:$0xff] %v3603
          %3704 = vst [vmem:[#allocation11 + $0x1c0] sm:$0xff] %v3604
          %3705 = vst [vmem:[#allocation11 + $0x1c8] sm:$0xff] %v3605
          %3706 = vst [vmem:[#allocation11 + $0x1d0] sm:$0xff] %v3606
          %3707 = vst [vmem:[#allocation11 + $0x1d8] sm:$0xff] %v3607
          %3708 = vst [vmem:[#allocation11 + $0x1e0] sm:$0xff] %v3608
          %3709 = vst [vmem:[#allocation11 + $0x1e8] sm:$0xff] %v3609
          %3710 = vst [vmem:[#allocation11 + $0x1f0] sm:$0xff] %v3610
          %3711 = vst [vmem:[#allocation11 + $0x1f8] sm:$0xff] %v3611
          %3712 = vst [vmem:[#allocation11 + $0x200] sm:$0xff] %v3612
          %3713 = vst [vmem:[#allocation11 + $0x208] sm:$0xff] %v3613
          %3714 = vst [vmem:[#allocation11 + $0x210] sm:$0xff] %v3614
          %3715 = vst [vmem:[#allocation11 + $0x218] sm:$0xff] %v3615
          %3716 = vst [vmem:[#allocation11 + $0x220] sm:$0xff] %v3616
          %3717 = vst [vmem:[#allocation11 + $0x228] sm:$0xff] %v3617
          %3718 = vst [vmem:[#allocation11 + $0x230] sm:$0xff] %v3618
          %3719 = vst [vmem:[#allocation11 + $0x238] sm:$0xff] %v3619
          %3720 = vst [vmem:[#allocation11 + $0x240] sm:$0xff] %v3620
          %3721 = vst [vmem:[#allocation11 + $0x248] sm:$0xff] %v3621
          %3722 = vst [vmem:[#allocation11 + $0x250] sm:$0xff] %v3622
          %3723 = vst [vmem:[#allocation11 + $0x258] sm:$0xff] %v3623
          %3724 = vst [vmem:[#allocation11 + $0x260] sm:$0xff] %v3624
          %3725 = vst [vmem:[#allocation11 + $0x268] sm:$0xff] %v3625
          %3726 = vst [vmem:[#allocation11 + $0x270] sm:$0xff] %v3626
          %3727 = vst [vmem:[#allocation11 + $0x278] sm:$0xff] %v3627
          %3728 = vst [vmem:[#allocation11 + $0x280] sm:$0xff] %v3628
          %3729 = vst [vmem:[#allocation11 + $0x288] sm:$0xff] %v3629
          %3730 = vst [vmem:[#allocation11 + $0x290] sm:$0xff] %v3630
          %3731 = vst [vmem:[#allocation11 + $0x298] sm:$0xff] %v3631
          %3732 = vst [vmem:[#allocation11 + $0x2a0] sm:$0xff] %v3632
          %3733 = vst [vmem:[#allocation11 + $0x2a8] sm:$0xff] %v3633
          %3734 = vst [vmem:[#allocation11 + $0x2b0] sm:$0xff] %v3634
          %3735 = vst [vmem:[#allocation11 + $0x2b8] sm:$0xff] %v3635
          %3736 = vst [vmem:[#allocation11 + $0x2c0] sm:$0xff] %v3636
          %3737 = vst [vmem:[#allocation11 + $0x2c8] sm:$0xff] %v3637
          %3738 = vst [vmem:[#allocation11 + $0x2d0] sm:$0xff] %v3638
          %3739 = vst [vmem:[#allocation11 + $0x2d8] sm:$0xff] %v3639
          %3740 = vst [vmem:[#allocation11 + $0x2e0] sm:$0xff] %v3640
          %3741 = vst [vmem:[#allocation11 + $0x2e8] sm:$0xff] %v3641
          %3742 = vst [vmem:[#allocation11 + $0x2f0] sm:$0xff] %v3642
          %3743 = vst [vmem:[#allocation11 + $0x2f8] sm:$0xff] %v3643
          %3744 = vst [vmem:[#allocation11 + $0x300] sm:$0xff] %v3644
          %3745 = vst [vmem:[#allocation11 + $0x308] sm:$0xff] %v3645
          %3746 = vst [vmem:[#allocation11 + $0x310] sm:$0xff] %v3646
          %3747 = vst [vmem:[#allocation11 + $0x318] sm:$0xff] %v3647
        $region68: #{tpu_custom_call.1} parent=39 // pred_fallthru
          _
        // Predicated region
        $region69: #{tpu_custom_call.1} parent=39 // pred_check
          %p3748 = pneg %p179
        $region70: #{tpu_custom_call.1} parent=39 // pred_check_branch
          %3750 = sbr.rel (%p3748) target = $region72
        $region71: #{tpu_custom_call.1} parent=39 // pred_region
          %s3751 = smul.u32 25, %s28
          %s3753 = ssub.s32 12800, 12800
          %3754 = vsyncadd [#allocation4], %s3753
          %s3755 = smul.addr %s3751, 4
          %s3756 = smul.addr %s3755, 128
          %s3757 = scalar_lea.hbm %s5, %s3756
          %s3758 = sshll.u32 [#allocation11], 4
          %s3759 = int_to_ptr.vmem [resolvable:$true] %s3758
          %3764 = dma.vmem_to_hbm [thread:$0]  %s3759, 12800, %s3757, [#allocation4], 512, 512, 32
        $region72: #{tpu_custom_call.1} parent=39 // pred_fallthru
          _
        // Predicated region
        $region73: #{tpu_custom_call.1} parent=39 // pred_check
          %p3765 = pneg %p179
        $region74: #{tpu_custom_call.1} parent=39 // pred_check_branch
          %3767 = sbr.rel (%p3765) target = $region76
        $region75: #{tpu_custom_call.1} parent=39 // pred_region
          %3768 = dma.done [#allocation4], 12800
        $region76: #{tpu_custom_call.1} parent=39 // pred_fallthru
          _
      $region40: #{tpu_custom_call.1} parent=5 // pred_fallthru
        _
      %p3769 = scmp.le.s32.totalorder 2, %s19
      // Predicated region
      $region77: #{tpu_custom_call.1} parent=5 // pred_check
        %p3770 = pneg %p3769
      $region78: #{tpu_custom_call.1} parent=5 // pred_check_branch
        %3772 = sbr.rel (%p3770) target = $region80
      $region79: #{tpu_custom_call.1} parent=5 // pred_region
        %s3773 = ssub.s32 %s19, 2
      $region80: #{tpu_custom_call.1} parent=5 // pred_fallthru
        _
    $region6: #{tpu_custom_call.1} parent=1 // loop_footer
      %s23 = sadd.s32 1, %s19
    $region7: #{tpu_custom_call.1} parent=1 // loop_footer_branch
      %18 = sbr.rel target = $region3
    $region8: #{tpu_custom_call.1} parent=1 // loop_exit
      _
    %3774 = vsyncpa [#allocation3], 1
    %s3775 = scalar_lea.sflag [#allocation3], 1
    %3776 = vsyncpa %s3775, 1
    %3777 = vsyncpa [#allocation6], 1
    %s3778 = scalar_lea.sflag [#allocation6], 1
    %3779 = vsyncpa %s3778, 1
    %3780 = vsyncpa [#allocation9], 1
    %s3781 = scalar_lea.sflag [#allocation9], 1
    %3782 = vsyncpa %s3781, 1
    %3783 = vsyncpa [#allocation4], 1
    %s3784 = scalar_lea.sflag [#allocation4], 1
    %3785 = vsyncpa %s3784, 1

</llo_original>
